<compile_context>
chip_gen: v7x
topology: tpu7x:2x2x1
jax: 0.10.0
libtpu: 0.0.40
codegen_flags: <defaults>
</compile_context>

<pallas_src>
import functools

import numpy as np

import jax
import jax.numpy as jnp
from jax.experimental import pallas as pl
from jax.experimental.pallas import tpu as pltpu


# ----------------------------------------------------------------------------
# Fused multi-layer LSTM kernel (no grid, fully VMEM resident)
# ----------------------------------------------------------------------------
def fused_lstm_kernel(num_layers, x_ref, *refs):
    """All LSTM layers over the full sequence in one kernel invocation.

    x_ref : (T*B, I) f32   time-major-flattened input (wrapper transposes).
    refs  : w_ih_l0, w_hh_l0, b_l0, ..., out_ref, hn_ref, cn_ref, xp_ref
      w_ih_l : (in_feat, 4*HP) bf16, gate k in columns [k*HP, k*HP + H)
      w_hh_l : (HP, 4*HP)      bf16, rows >= H are zero (padded hidden lanes)
      b_l    : (1, 4*HP)       f32 (b_ih + b_hh), zero in padded columns
      out_ref: (T, B, HP) f32  time-major last-layer hidden (lane padded)
      hn_ref : (L, B, HP) f32  final hidden per layer (lane padded)
      cn_ref : (L, B, HP) f32  final cell per layer (lane padded)
      xp_ref : (T, B, 4*HP) f32 VMEM scratch for layer-0 projections
    PyTorch gate order along the gate axis: i, f, g, o.
    """
    w_refs = refs[:3 * num_layers]
    out_ref, hn_ref, cn_ref, xp_ref = refs[3 * num_layers:]

    T, B, HP = out_ref.shape
    G = 4 * HP

    def sigmoid(v):
        # One EUP push (tanh) instead of exp + reciprocal.
        return 0.5 * (jnp.tanh(0.5 * v) + 1.0)

    def bdot(a, w):
        # Single-pass bf16 MXU matmul with f32 accumulation.
        return jnp.dot(a.astype(jnp.bfloat16), w,
                       preferred_element_type=jnp.float32)

    def cell(gates, c_prev):
        # Each gate lives in its own 128-lane-aligned column group, so these
        # slices are whole-vreg selects (no cross-lane XLU work on the chain).
        i_g = sigmoid(gates[:, 0 * HP:1 * HP])
        f_g = sigmoid(gates[:, 1 * HP:2 * HP])
        g_g = jnp.tanh(gates[:, 2 * HP:3 * HP])
        o_g = sigmoid(gates[:, 3 * HP:4 * HP])
        c_new = f_g * c_prev + i_g * g_g
        h_new = o_g * jnp.tanh(c_new)
        return h_new, c_new

    # ---- layer 0: one batched input projection, staged in VMEM scratch ----
    # Entirely off the recurrent chain; the RHS weight is fed to the MXU once
    # for the whole sequence instead of once per step.
    xproj = bdot(x_ref[...], w_refs[0][...]) + w_refs[2][...]     # (T*B, G)
    xp_ref[...] = xproj.reshape(T, B, G)

    h = jnp.zeros((B, HP), jnp.float32)
    c = jnp.zeros((B, HP), jnp.float32)
    seq = []
    for t in range(T):                   # fully unrolled; only h@w_hh serial
        gates = xp_ref[t] + bdot(h, w_refs[1][...])
        h, c = cell(gates, c)
        seq.append(h)
    hn_ref[0] = h
    cn_ref[0] = c

    # ---- layers >= 1: per-step projection on exact SSA deps (wavefront) ----
    for layer in range(1, num_layers):
        w_ih = w_refs[3 * layer]
        w_hh = w_refs[3 * layer + 1]
        b = jnp.broadcast_to(w_refs[3 * layer + 2][...], (B, G))  # hoisted
        h = jnp.zeros((B, HP), jnp.float32)
        c = jnp.zeros((B, HP), jnp.float32)
        new_seq = []
        for t in range(T):
            xp_t = bdot(seq[t], w_ih[...]) + b    # off the h->h chain
            gates = xp_t + bdot(h, w_hh[...])
            h, c = cell(gates, c)
            new_seq.append(h)
        hn_ref[layer] = h
        cn_ref[layer] = c
        seq = new_seq
        # TODO(synk): inter-layer dropout omitted (cfg dropout == 0.0).

    # Final layer hidden states -> lane-dense time-major padded output.
    for t in range(T):
        out_ref[t] = seq[t]


# ----------------------------------------------------------------------------
# Parameter construction (torch.nn.LSTM layout) and lane-aligned packing
# ----------------------------------------------------------------------------
def init_lstm_params(key, input_size, hidden_size, num_layers):
    """U(-1/sqrt(H), 1/sqrt(H)) init, matching nn.LSTM parameter shapes."""
    k = 1.0 / float(hidden_size) ** 0.5
    params = []
    for layer in range(num_layers):
        in_sz = input_size if layer == 0 else hidden_size
        key, k1, k2, k3, k4 = jax.random.split(key, 5)
        params.append({
            "w_ih": jax.random.uniform(k1, (4 * hidden_size, in_sz), jnp.float32, -k, k),
            "w_hh": jax.random.uniform(k2, (4 * hidden_size, hidden_size), jnp.float32, -k, k),
            "b_ih": jax.random.uniform(k3, (4 * hidden_size,), jnp.float32, -k, k),
            "b_hh": jax.random.uniform(k4, (4 * hidden_size,), jnp.float32, -k, k),
        })
    return params


def pack_lstm_params(raw_params, hidden_size, lane=128):
    """Pack nn.LSTM weights into lane-aligned gate groups (bf16 weights).

    Gate k of layer l lands in columns [k*HP, k*HP + H) of a (in_feat, 4*HP)
    pre-transposed weight, with all padded rows/columns exactly zero.
    """
    H = hidden_size
    HP = ((H + lane - 1) // lane) * lane
    packed = []
    for layer_idx, p in enumerate(raw_params):
        w_ih, w_hh = p["w_ih"], p["w_hh"]
        b = p["b_ih"] + p["b_hh"]
        in_real = w_ih.shape[1]
        in_pad = in_real if layer_idx == 0 else HP   # layer>0 input is padded h
        w_ih_p = jnp.zeros((in_pad, 4 * HP), jnp.float32)
        w_hh_p = jnp.zeros((HP, 4 * HP), jnp.float32)
        b_p = jnp.zeros((1, 4 * HP), jnp.float32)
        for g in range(4):
            cols = slice(g * HP, g * HP + H)
            rows = slice(g * H, (g + 1) * H)
            w_ih_p = w_ih_p.at[:in_real, cols].set(jnp.transpose(w_ih[rows, :]))
            w_hh_p = w_hh_p.at[:H, cols].set(jnp.transpose(w_hh[rows, :]))
            b_p = b_p.at[0, cols].set(b[rows])
        packed.extend([w_ih_p.astype(jnp.bfloat16),
                       w_hh_p.astype(jnp.bfloat16),
                       b_p])
    return packed


# ----------------------------------------------------------------------------
# Forward wrapper (single fused pallas_call, no grid)
# ----------------------------------------------------------------------------
def _lstm_pallas_call(x_tm, packed_params, T, B_pad, HP, num_layers):
    vmem = pl.BlockSpec(memory_space=pltpu.MemorySpace.VMEM)
    kernel = functools.partial(fused_lstm_kernel, num_layers)
    return pl.pallas_call(
        kernel,
        out_shape=(
            jax.ShapeDtypeStruct((T, B_pad, HP), jnp.float32),            # time-major out
            jax.ShapeDtypeStruct((num_layers, B_pad, HP), jnp.float32),   # h_n
            jax.ShapeDtypeStruct((num_layers, B_pad, HP), jnp.float32),   # c_n
        ),
        in_specs=[vmem] * (1 + len(packed_params)),
        out_specs=(vmem, vmem, vmem),
        scratch_shapes=[pltpu.VMEM((T, B_pad, 4 * HP), jnp.float32)],
    )(x_tm, *packed_params)


@functools.partial(jax.jit, static_argnames=("hidden_size",))
def rnn_model_forward(x, packed_params, *, hidden_size):
    """Equivalent of RNNmodel.forward: returns (output, (h_n, c_n)).

    x: (B, T, input_size) float32 (batch_first). dropout=0.0, unidirectional.
    """
    B, T, I = x.shape
    num_layers = len(packed_params) // 3
    HP = packed_params[1].shape[0]           # lane-padded hidden (w_hh rows)
    H = hidden_size

    # Pad batch to a sublane multiple: the recurrence is latency-bound, so the
    # extra rows are free and every kernel vreg / store is full-width.
    B_pad = ((B + 7) // 8) * 8
    x_p = jnp.pad(x, ((0, B_pad - B), (0, 0), (0, 0)))
    # Time-major flatten so layer-0's projection is one (T*B, I) matmul.
    x_tm = jnp.transpose(x_p, (1, 0, 2)).reshape(T * B_pad, I)

    out_p, hn_p, cn_p = _lstm_pallas_call(x_tm, packed_params, T, B_pad, HP,
                                          num_layers)

    output = jnp.transpose(out_p[:, :B, :H], (1, 0, 2))   # (B, T, H)
    h_n = hn_p[:, :B, :H]
    c_n = cn_p[:, :B, :H]
    return output, (h_n, c_n)


# ----------------------------------------------------------------------------
# Pure-JAX reference (mirrors torch.nn.LSTM math, fp32 HIGHEST) for self-check
# ----------------------------------------------------------------------------
def lstm_reference(x, raw_params):
    B, T, _ = x.shape
    H = raw_params[0]["w_hh"].shape[1]
    prec = jax.lax.Precision.HIGHEST
    layer_in = x
    h_last, c_last = [], []
    for p in raw_params:
        w_ih_t = jnp.transpose(p["w_ih"])
        w_hh_t = jnp.transpose(p["w_hh"])
        b = (p["b_ih"] + p["b_hh"])[None, :]
        h = jnp.zeros((B, H), jnp.float32)
        c = jnp.zeros((B, H), jnp.float32)
        outs = []
        for t in range(T):
            g = (jnp.dot(layer_in[:, t, :], w_ih_t, precision=prec)
                 + jnp.dot(h, w_hh_t, precision=prec) + b)
            i_g = jax.nn.sigmoid(g[:, 0 * H:1 * H])
            f_g = jax.nn.sigmoid(g[:, 1 * H:2 * H])
            g_g = jnp.tanh(g[:, 2 * H:3 * H])
            o_g = jax.nn.sigmoid(g[:, 3 * H:4 * H])
            c = f_g * c + i_g * g_g
            h = o_g * jnp.tanh(c)
            outs.append(h)
        layer_in = jnp.stack(outs, axis=1)
        h_last.append(h)
        c_last.append(c)
    return layer_in, (jnp.stack(h_last, 0), jnp.stack(c_last, 0))


if __name__ == "__main__":
    # cfg['model'] equivalents
    INPUT_SIZE = 16      # cfg['model']['input_size']
    HIDDEN_SIZE = 32     # cfg['model']['output_size']
    NUM_LAYERS = 2       # cfg['model']['num_layers']
    # cfg['model']['dropout'] = 0.0, cfg['model']['bidirectional'] = False

    B, T = 2, 8

    key = jax.random.PRNGKey(0)
    key, kx, kp = jax.random.split(key, 3)
    x = jax.random.normal(kx, (B, T, INPUT_SIZE), jnp.float32)

    raw_params = init_lstm_params(kp, INPUT_SIZE, HIDDEN_SIZE, NUM_LAYERS)
    packed_params = pack_lstm_params(raw_params, HIDDEN_SIZE)

    output, (h_n, c_n) = rnn_model_forward(x, packed_params, hidden_size=HIDDEN_SIZE)
    jax.block_until_ready((output, h_n, c_n))

    assert output.shape == (B, T, HIDDEN_SIZE)
    assert h_n.shape == (NUM_LAYERS, B, HIDDEN_SIZE)
    assert c_n.shape == (NUM_LAYERS, B, HIDDEN_SIZE)

    # Self-check against the fp32 HIGHEST pure-JAX reference.  The kernel uses
    # single-pass bf16 MXU matmuls (weights + activations truncated to bf16),
    # which contributes ~1e-2 worst-case absolute error over 8 recurrent steps
    # x 2 layers; packing / gate-order bugs would produce O(0.1+) errors and
    # still fail this check.
    ref_out, (ref_h, ref_c) = lstm_reference(x, raw_params)
    np.testing.assert_allclose(np.asarray(output), np.asarray(ref_out), rtol=3e-2, atol=3e-2)
    np.testing.assert_allclose(np.asarray(h_n), np.asarray(ref_h), rtol=3e-2, atol=3e-2)
    np.testing.assert_allclose(np.asarray(c_n), np.asarray(ref_c), rtol=3e-2, atol=3e-2)

    print("KERNEL_OK")
</pallas_src>

<mosaic_0001>
module attributes {stable_mosaic.version = 11 : i64} {
  func.func @fused_lstm_kernel(%arg0: memref<64x16xf32, #tpu.memory_space<vmem>>, %arg1: memref<16x512xbf16, #tpu.memory_space<vmem>>, %arg2: memref<128x512xbf16, #tpu.memory_space<vmem>>, %arg3: memref<1x512xf32, #tpu.memory_space<vmem>>, %arg4: memref<128x512xbf16, #tpu.memory_space<vmem>>, %arg5: memref<128x512xbf16, #tpu.memory_space<vmem>>, %arg6: memref<1x512xf32, #tpu.memory_space<vmem>>, %arg7: memref<8x8x128xf32, #tpu.memory_space<vmem>>, %arg8: memref<2x8x128xf32, #tpu.memory_space<vmem>>, %arg9: memref<2x8x128xf32, #tpu.memory_space<vmem>>, %arg10: memref<8x8x512xf32, #tpu.memory_space<vmem>>) attributes {dimension_semantics = [], scalar_prefetch = 0 : i64, scratch_operands = 1 : i64, tpu.core_type = #tpu.core_type<tc>} {
    %c0 = arith.constant 0 : index
    %c0_0 = arith.constant 0 : index
    %0 = vector.load %arg0[%c0, %c0_0] : memref<64x16xf32, #tpu.memory_space<vmem>>, vector<64x16xf32>
    %c0_1 = arith.constant 0 : index
    %c0_2 = arith.constant 0 : index
    %1 = vector.load %arg1[%c0_1, %c0_2] : memref<16x512xbf16, #tpu.memory_space<vmem>>, vector<16x512xbf16>
    %2 = arith.truncf %0 : vector<64x16xf32> to vector<64x16xbf16>
    %cst = arith.constant dense<0.000000e+00> : vector<64x512xf32>
    %3 = tpu.matmul %2, %1, %cst {dimension_numbers = #tpu.dot_dimension_numbers<[1], [0], [0], [1], [0, 0, 1, 1], [], []>} : vector<64x16xbf16>, vector<16x512xbf16>, vector<64x512xf32> -> vector<64x512xf32>
    %c0_3 = arith.constant 0 : index
    %c0_4 = arith.constant 0 : index
    %4 = vector.load %arg3[%c0_3, %c0_4] : memref<1x512xf32, #tpu.memory_space<vmem>>, vector<1x512xf32>
    %5 = vector.broadcast %4 : vector<1x512xf32> to vector<64x512xf32>
    %6 = arith.addf %3, %5 : vector<64x512xf32>
    %7 = vector.shape_cast %6 : vector<64x512xf32> to vector<8x8x512xf32>
    %c0_5 = arith.constant 0 : index
    %c0_6 = arith.constant 0 : index
    %c0_7 = arith.constant 0 : index
    %8 = vector.load %arg10[%c0_5, %c0_6, %c0_7] : memref<8x8x512xf32, #tpu.memory_space<vmem>>, vector<8x8x512xf32>
    tpu.vector_store %arg10[%c0_5, %c0_6, %c0_7], %7 {strides = array<i32>} : memref<8x8x512xf32, #tpu.memory_space<vmem>>, vector<8x8x512xf32>,
    %cst_8 = arith.constant 0.000000e+00 : f32
    %9 = vector.broadcast %cst_8 : f32 to vector<8x128xf32>
    %cst_9 = arith.constant 0.000000e+00 : f32
    %10 = vector.broadcast %cst_9 : f32 to vector<8x128xf32>
    %c0_10 = arith.constant 0 : index
    %c0_11 = arith.constant 0 : index
    %c0_12 = arith.constant 0 : index
    %11 = vector.load %arg10[%c0_10, %c0_11, %c0_12] : memref<8x8x512xf32, #tpu.memory_space<vmem>>, vector<1x8x512xf32>
    %12 = vector.shape_cast %11 : vector<1x8x512xf32> to vector<8x512xf32>
    %c0_13 = arith.constant 0 : index
    %c0_14 = arith.constant 0 : index
    %13 = vector.load %arg2[%c0_13, %c0_14] : memref<128x512xbf16, #tpu.memory_space<vmem>>, vector<128x512xbf16>
    %14 = arith.truncf %9 : vector<8x128xf32> to vector<8x128xbf16>
    %cst_15 = arith.constant dense<0.000000e+00> : vector<8x512xf32>
    %15 = tpu.matmul %14, %13, %cst_15 {dimension_numbers = #tpu.dot_dimension_numbers<[1], [0], [0], [1], [0, 0, 1, 1], [], []>} : vector<8x128xbf16>, vector<128x512xbf16>, vector<8x512xf32> -> vector<8x512xf32>
    %16 = arith.addf %12, %15 : vector<8x512xf32>
    %17 = vector.extract_strided_slice %16 {offsets = [0, 0], sizes = [8, 128], strides = [1, 1]} : vector<8x512xf32> to vector<8x128xf32>
    %cst_16 = arith.constant 5.000000e-01 : f32
    %18 = vector.broadcast %cst_16 : f32 to vector<8x128xf32>
    %19 = arith.mulf %18, %17 : vector<8x128xf32>
    %20 = math.tanh %19 : vector<8x128xf32>
    %cst_17 = arith.constant 1.000000e+00 : f32
    %21 = vector.broadcast %cst_17 : f32 to vector<8x128xf32>
    %22 = arith.addf %20, %21 : vector<8x128xf32>
    %cst_18 = arith.constant 5.000000e-01 : f32
    %23 = vector.broadcast %cst_18 : f32 to vector<8x128xf32>
    %24 = arith.mulf %23, %22 : vector<8x128xf32>
    %25 = vector.extract_strided_slice %16 {offsets = [0, 128], sizes = [8, 128], strides = [1, 1]} : vector<8x512xf32> to vector<8x128xf32>
    %cst_19 = arith.constant 5.000000e-01 : f32
    %26 = vector.broadcast %cst_19 : f32 to vector<8x128xf32>
    %27 = arith.mulf %26, %25 : vector<8x128xf32>
    %28 = math.tanh %27 : vector<8x128xf32>
    %cst_20 = arith.constant 1.000000e+00 : f32
    %29 = vector.broadcast %cst_20 : f32 to vector<8x128xf32>
    %30 = arith.addf %28, %29 : vector<8x128xf32>
    %cst_21 = arith.constant 5.000000e-01 : f32
    %31 = vector.broadcast %cst_21 : f32 to vector<8x128xf32>
    %32 = arith.mulf %31, %30 : vector<8x128xf32>
    %33 = vector.extract_strided_slice %16 {offsets = [0, 256], sizes = [8, 128], strides = [1, 1]} : vector<8x512xf32> to vector<8x128xf32>
    %34 = math.tanh %33 : vector<8x128xf32>
    %35 = vector.extract_strided_slice %16 {offsets = [0, 384], sizes = [8, 128], strides = [1, 1]} : vector<8x512xf32> to vector<8x128xf32>
    %cst_22 = arith.constant 5.000000e-01 : f32
    %36 = vector.broadcast %cst_22 : f32 to vector<8x128xf32>
    %37 = arith.mulf %36, %35 : vector<8x128xf32>
    %38 = math.tanh %37 : vector<8x128xf32>
    %cst_23 = arith.constant 1.000000e+00 : f32
    %39 = vector.broadcast %cst_23 : f32 to vector<8x128xf32>
    %40 = arith.addf %38, %39 : vector<8x128xf32>
    %cst_24 = arith.constant 5.000000e-01 : f32
    %41 = vector.broadcast %cst_24 : f32 to vector<8x128xf32>
    %42 = arith.mulf %41, %40 : vector<8x128xf32>
    %43 = arith.mulf %32, %10 : vector<8x128xf32>
    %44 = arith.mulf %24, %34 : vector<8x128xf32>
    %45 = arith.addf %43, %44 : vector<8x128xf32>
    %46 = math.tanh %45 : vector<8x128xf32>
    %47 = arith.mulf %42, %46 : vector<8x128xf32>
    %c1 = arith.constant 1 : index
    %c0_25 = arith.constant 0 : index
    %c0_26 = arith.constant 0 : index
    %48 = vector.load %arg10[%c1, %c0_25, %c0_26] : memref<8x8x512xf32, #tpu.memory_space<vmem>>, vector<1x8x512xf32>
    %49 = vector.shape_cast %48 : vector<1x8x512xf32> to vector<8x512xf32>
    %c0_27 = arith.constant 0 : index
    %c0_28 = arith.constant 0 : index
    %50 = vector.load %arg2[%c0_27, %c0_28] : memref<128x512xbf16, #tpu.memory_space<vmem>>, vector<128x512xbf16>
    %51 = arith.truncf %47 : vector<8x128xf32> to vector<8x128xbf16>
    %cst_29 = arith.constant dense<0.000000e+00> : vector<8x512xf32>
    %52 = tpu.matmul %51, %50, %cst_29 {dimension_numbers = #tpu.dot_dimension_numbers<[1], [0], [0], [1], [0, 0, 1, 1], [], []>} : vector<8x128xbf16>, vector<128x512xbf16>, vector<8x512xf32> -> vector<8x512xf32>
    %53 = arith.addf %49, %52 : vector<8x512xf32>
    %54 = vector.extract_strided_slice %53 {offsets = [0, 0], sizes = [8, 128], strides = [1, 1]} : vector<8x512xf32> to vector<8x128xf32>
    %cst_30 = arith.constant 5.000000e-01 : f32
    %55 = vector.broadcast %cst_30 : f32 to vector<8x128xf32>
    %56 = arith.mulf %55, %54 : vector<8x128xf32>
    %57 = math.tanh %56 : vector<8x128xf32>
    %cst_31 = arith.constant 1.000000e+00 : f32
    %58 = vector.broadcast %cst_31 : f32 to vector<8x128xf32>
    %59 = arith.addf %57, %58 : vector<8x128xf32>
    %cst_32 = arith.constant 5.000000e-01 : f32
    %60 = vector.broadcast %cst_32 : f32 to vector<8x128xf32>
    %61 = arith.mulf %60, %59 : vector<8x128xf32>
    %62 = vector.extract_strided_slice %53 {offsets = [0, 128], sizes = [8, 128], strides = [1, 1]} : vector<8x512xf32> to vector<8x128xf32>
    %cst_33 = arith.constant 5.000000e-01 : f32
    %63 = vector.broadcast %cst_33 : f32 to vector<8x128xf32>
    %64 = arith.mulf %63, %62 : vector<8x128xf32>
    %65 = math.tanh %64 : vector<8x128xf32>
    %cst_34 = arith.constant 1.000000e+00 : f32
    %66 = vector.broadcast %cst_34 : f32 to vector<8x128xf32>
    %67 = arith.addf %65, %66 : vector<8x128xf32>
    %cst_35 = arith.constant 5.000000e-01 : f32
    %68 = vector.broadcast %cst_35 : f32 to vector<8x128xf32>
    %69 = arith.mulf %68, %67 : vector<8x128xf32>
    %70 = vector.extract_strided_slice %53 {offsets = [0, 256], sizes = [8, 128], strides = [1, 1]} : vector<8x512xf32> to vector<8x128xf32>
    %71 = math.tanh %70 : vector<8x128xf32>
    %72 = vector.extract_strided_slice %53 {offsets = [0, 384], sizes = [8, 128], strides = [1, 1]} : vector<8x512xf32> to vector<8x128xf32>
    %cst_36 = arith.constant 5.000000e-01 : f32
    %73 = vector.broadcast %cst_36 : f32 to vector<8x128xf32>
    %74 = arith.mulf %73, %72 : vector<8x128xf32>
    %75 = math.tanh %74 : vector<8x128xf32>
    %cst_37 = arith.constant 1.000000e+00 : f32
    %76 = vector.broadcast %cst_37 : f32 to vector<8x128xf32>
    %77 = arith.addf %75, %76 : vector<8x128xf32>
    %cst_38 = arith.constant 5.000000e-01 : f32
    %78 = vector.broadcast %cst_38 : f32 to vector<8x128xf32>
    %79 = arith.mulf %78, %77 : vector<8x128xf32>
    %80 = arith.mulf %69, %45 : vector<8x128xf32>
    %81 = arith.mulf %61, %71 : vector<8x128xf32>
    %82 = arith.addf %80, %81 : vector<8x128xf32>
    %83 = math.tanh %82 : vector<8x128xf32>
    %84 = arith.mulf %79, %83 : vector<8x128xf32>
    %c2 = arith.constant 2 : index
    %c0_39 = arith.constant 0 : index
    %c0_40 = arith.constant 0 : index
    %85 = vector.load %arg10[%c2, %c0_39, %c0_40] : memref<8x8x512xf32, #tpu.memory_space<vmem>>, vector<1x8x512xf32>
    %86 = vector.shape_cast %85 : vector<1x8x512xf32> to vector<8x512xf32>
    %c0_41 = arith.constant 0 : index
    %c0_42 = arith.constant 0 : index
    %87 = vector.load %arg2[%c0_41, %c0_42] : memref<128x512xbf16, #tpu.memory_space<vmem>>, vector<128x512xbf16>
    %88 = arith.truncf %84 : vector<8x128xf32> to vector<8x128xbf16>
    %cst_43 = arith.constant dense<0.000000e+00> : vector<8x512xf32>
    %89 = tpu.matmul %88, %87, %cst_43 {dimension_numbers = #tpu.dot_dimension_numbers<[1], [0], [0], [1], [0, 0, 1, 1], [], []>} : vector<8x128xbf16>, vector<128x512xbf16>, vector<8x512xf32> -> vector<8x512xf32>
    %90 = arith.addf %86, %89 : vector<8x512xf32>
    %91 = vector.extract_strided_slice %90 {offsets = [0, 0], sizes = [8, 128], strides = [1, 1]} : vector<8x512xf32> to vector<8x128xf32>
    %cst_44 = arith.constant 5.000000e-01 : f32
    %92 = vector.broadcast %cst_44 : f32 to vector<8x128xf32>
    %93 = arith.mulf %92, %91 : vector<8x128xf32>
    %94 = math.tanh %93 : vector<8x128xf32>
    %cst_45 = arith.constant 1.000000e+00 : f32
    %95 = vector.broadcast %cst_45 : f32 to vector<8x128xf32>
    %96 = arith.addf %94, %95 : vector<8x128xf32>
    %cst_46 = arith.constant 5.000000e-01 : f32
    %97 = vector.broadcast %cst_46 : f32 to vector<8x128xf32>
    %98 = arith.mulf %97, %96 : vector<8x128xf32>
    %99 = vector.extract_strided_slice %90 {offsets = [0, 128], sizes = [8, 128], strides = [1, 1]} : vector<8x512xf32> to vector<8x128xf32>
    %cst_47 = arith.constant 5.000000e-01 : f32
    %100 = vector.broadcast %cst_47 : f32 to vector<8x128xf32>
    %101 = arith.mulf %100, %99 : vector<8x128xf32>
    %102 = math.tanh %101 : vector<8x128xf32>
    %cst_48 = arith.constant 1.000000e+00 : f32
    %103 = vector.broadcast %cst_48 : f32 to vector<8x128xf32>
    %104 = arith.addf %102, %103 : vector<8x128xf32>
    %cst_49 = arith.constant 5.000000e-01 : f32
    %105 = vector.broadcast %cst_49 : f32 to vector<8x128xf32>
    %106 = arith.mulf %105, %104 : vector<8x128xf32>
    %107 = vector.extract_strided_slice %90 {offsets = [0, 256], sizes = [8, 128], strides = [1, 1]} : vector<8x512xf32> to vector<8x128xf32>
    %108 = math.tanh %107 : vector<8x128xf32>
    %109 = vector.extract_strided_slice %90 {offsets = [0, 384], sizes = [8, 128], strides = [1, 1]} : vector<8x512xf32> to vector<8x128xf32>
    %cst_50 = arith.constant 5.000000e-01 : f32
    %110 = vector.broadcast %cst_50 : f32 to vector<8x128xf32>
    %111 = arith.mulf %110, %109 : vector<8x128xf32>
    %112 = math.tanh %111 : vector<8x128xf32>
    %cst_51 = arith.constant 1.000000e+00 : f32
    %113 = vector.broadcast %cst_51 : f32 to vector<8x128xf32>
    %114 = arith.addf %112, %113 : vector<8x128xf32>
    %cst_52 = arith.constant 5.000000e-01 : f32
    %115 = vector.broadcast %cst_52 : f32 to vector<8x128xf32>
    %116 = arith.mulf %115, %114 : vector<8x128xf32>
    %117 = arith.mulf %106, %82 : vector<8x128xf32>
    %118 = arith.mulf %98, %108 : vector<8x128xf32>
    %119 = arith.addf %117, %118 : vector<8x128xf32>
    %120 = math.tanh %119 : vector<8x128xf32>
    %121 = arith.mulf %116, %120 : vector<8x128xf32>
    %c3 = arith.constant 3 : index
    %c0_53 = arith.constant 0 : index
    %c0_54 = arith.constant 0 : index
    %122 = vector.load %arg10[%c3, %c0_53, %c0_54] : memref<8x8x512xf32, #tpu.memory_space<vmem>>, vector<1x8x512xf32>
    %123 = vector.shape_cast %122 : vector<1x8x512xf32> to vector<8x512xf32>
    %c0_55 = arith.constant 0 : index
    %c0_56 = arith.constant 0 : index
    %124 = vector.load %arg2[%c0_55, %c0_56] : memref<128x512xbf16, #tpu.memory_space<vmem>>, vector<128x512xbf16>
    %125 = arith.truncf %121 : vector<8x128xf32> to vector<8x128xbf16>
    %cst_57 = arith.constant dense<0.000000e+00> : vector<8x512xf32>
    %126 = tpu.matmul %125, %124, %cst_57 {dimension_numbers = #tpu.dot_dimension_numbers<[1], [0], [0], [1], [0, 0, 1, 1], [], []>} : vector<8x128xbf16>, vector<128x512xbf16>, vector<8x512xf32> -> vector<8x512xf32>
    %127 = arith.addf %123, %126 : vector<8x512xf32>
    %128 = vector.extract_strided_slice %127 {offsets = [0, 0], sizes = [8, 128], strides = [1, 1]} : vector<8x512xf32> to vector<8x128xf32>
    %cst_58 = arith.constant 5.000000e-01 : f32
    %129 = vector.broadcast %cst_58 : f32 to vector<8x128xf32>
    %130 = arith.mulf %129, %128 : vector<8x128xf32>
    %131 = math.tanh %130 : vector<8x128xf32>
    %cst_59 = arith.constant 1.000000e+00 : f32
    %132 = vector.broadcast %cst_59 : f32 to vector<8x128xf32>
    %133 = arith.addf %131, %132 : vector<8x128xf32>
    %cst_60 = arith.constant 5.000000e-01 : f32
    %134 = vector.broadcast %cst_60 : f32 to vector<8x128xf32>
    %135 = arith.mulf %134, %133 : vector<8x128xf32>
    %136 = vector.extract_strided_slice %127 {offsets = [0, 128], sizes = [8, 128], strides = [1, 1]} : vector<8x512xf32> to vector<8x128xf32>
    %cst_61 = arith.constant 5.000000e-01 : f32
    %137 = vector.broadcast %cst_61 : f32 to vector<8x128xf32>
    %138 = arith.mulf %137, %136 : vector<8x128xf32>
    %139 = math.tanh %138 : vector<8x128xf32>
    %cst_62 = arith.constant 1.000000e+00 : f32
    %140 = vector.broadcast %cst_62 : f32 to vector<8x128xf32>
    %141 = arith.addf %139, %140 : vector<8x128xf32>
    %cst_63 = arith.constant 5.000000e-01 : f32
    %142 = vector.broadcast %cst_63 : f32 to vector<8x128xf32>
    %143 = arith.mulf %142, %141 : vector<8x128xf32>
    %144 = vector.extract_strided_slice %127 {offsets = [0, 256], sizes = [8, 128], strides = [1, 1]} : vector<8x512xf32> to vector<8x128xf32>
    %145 = math.tanh %144 : vector<8x128xf32>
    %146 = vector.extract_strided_slice %127 {offsets = [0, 384], sizes = [8, 128], strides = [1, 1]} : vector<8x512xf32> to vector<8x128xf32>
    %cst_64 = arith.constant 5.000000e-01 : f32
    %147 = vector.broadcast %cst_64 : f32 to vector<8x128xf32>
    %148 = arith.mulf %147, %146 : vector<8x128xf32>
    %149 = math.tanh %148 : vector<8x128xf32>
    %cst_65 = arith.constant 1.000000e+00 : f32
    %150 = vector.broadcast %cst_65 : f32 to vector<8x128xf32>
    %151 = arith.addf %149, %150 : vector<8x128xf32>
    %cst_66 = arith.constant 5.000000e-01 : f32
    %152 = vector.broadcast %cst_66 : f32 to vector<8x128xf32>
    %153 = arith.mulf %152, %151 : vector<8x128xf32>
    %154 = arith.mulf %143, %119 : vector<8x128xf32>
    %155 = arith.mulf %135, %145 : vector<8x128xf32>
    %156 = arith.addf %154, %155 : vector<8x128xf32>
    %157 = math.tanh %156 : vector<8x128xf32>
    %158 = arith.mulf %153, %157 : vector<8x128xf32>
    %c4 = arith.constant 4 : index
    %c0_67 = arith.constant 0 : index
    %c0_68 = arith.constant 0 : index
    %159 = vector.load %arg10[%c4, %c0_67, %c0_68] : memref<8x8x512xf32, #tpu.memory_space<vmem>>, vector<1x8x512xf32>
    %160 = vector.shape_cast %159 : vector<1x8x512xf32> to vector<8x512xf32>
    %c0_69 = arith.constant 0 : index
    %c0_70 = arith.constant 0 : index
    %161 = vector.load %arg2[%c0_69, %c0_70] : memref<128x512xbf16, #tpu.memory_space<vmem>>, vector<128x512xbf16>
    %162 = arith.truncf %158 : vector<8x128xf32> to vector<8x128xbf16>
    %cst_71 = arith.constant dense<0.000000e+00> : vector<8x512xf32>
    %163 = tpu.matmul %162, %161, %cst_71 {dimension_numbers = #tpu.dot_dimension_numbers<[1], [0], [0], [1], [0, 0, 1, 1], [], []>} : vector<8x128xbf16>, vector<128x512xbf16>, vector<8x512xf32> -> vector<8x512xf32>
    %164 = arith.addf %160, %163 : vector<8x512xf32>
    %165 = vector.extract_strided_slice %164 {offsets = [0, 0], sizes = [8, 128], strides = [1, 1]} : vector<8x512xf32> to vector<8x128xf32>
    %cst_72 = arith.constant 5.000000e-01 : f32
    %166 = vector.broadcast %cst_72 : f32 to vector<8x128xf32>
    %167 = arith.mulf %166, %165 : vector<8x128xf32>
    %168 = math.tanh %167 : vector<8x128xf32>
    %cst_73 = arith.constant 1.000000e+00 : f32
    %169 = vector.broadcast %cst_73 : f32 to vector<8x128xf32>
    %170 = arith.addf %168, %169 : vector<8x128xf32>
    %cst_74 = arith.constant 5.000000e-01 : f32
    %171 = vector.broadcast %cst_74 : f32 to vector<8x128xf32>
    %172 = arith.mulf %171, %170 : vector<8x128xf32>
    %173 = vector.extract_strided_slice %164 {offsets = [0, 128], sizes = [8, 128], strides = [1, 1]} : vector<8x512xf32> to vector<8x128xf32>
    %cst_75 = arith.constant 5.000000e-01 : f32
    %174 = vector.broadcast %cst_75 : f32 to vector<8x128xf32>
    %175 = arith.mulf %174, %173 : vector<8x128xf32>
    %176 = math.tanh %175 : vector<8x128xf32>
    %cst_76 = arith.constant 1.000000e+00 : f32
    %177 = vector.broadcast %cst_76 : f32 to vector<8x128xf32>
    %178 = arith.addf %176, %177 : vector<8x128xf32>
    %cst_77 = arith.constant 5.000000e-01 : f32
    %179 = vector.broadcast %cst_77 : f32 to vector<8x128xf32>
    %180 = arith.mulf %179, %178 : vector<8x128xf32>
    %181 = vector.extract_strided_slice %164 {offsets = [0, 256], sizes = [8, 128], strides = [1, 1]} : vector<8x512xf32> to vector<8x128xf32>
    %182 = math.tanh %181 : vector<8x128xf32>
    %183 = vector.extract_strided_slice %164 {offsets = [0, 384], sizes = [8, 128], strides = [1, 1]} : vector<8x512xf32> to vector<8x128xf32>
    %cst_78 = arith.constant 5.000000e-01 : f32
    %184 = vector.broadcast %cst_78 : f32 to vector<8x128xf32>
    %185 = arith.mulf %184, %183 : vector<8x128xf32>
    %186 = math.tanh %185 : vector<8x128xf32>
    %cst_79 = arith.constant 1.000000e+00 : f32
    %187 = vector.broadcast %cst_79 : f32 to vector<8x128xf32>
    %188 = arith.addf %186, %187 : vector<8x128xf32>
    %cst_80 = arith.constant 5.000000e-01 : f32
    %189 = vector.broadcast %cst_80 : f32 to vector<8x128xf32>
    %190 = arith.mulf %189, %188 : vector<8x128xf32>
    %191 = arith.mulf %180, %156 : vector<8x128xf32>
    %192 = arith.mulf %172, %182 : vector<8x128xf32>
    %193 = arith.addf %191, %192 : vector<8x128xf32>
    %194 = math.tanh %193 : vector<8x128xf32>
    %195 = arith.mulf %190, %194 : vector<8x128xf32>
    %c5 = arith.constant 5 : index
    %c0_81 = arith.constant 0 : index
    %c0_82 = arith.constant 0 : index
    %196 = vector.load %arg10[%c5, %c0_81, %c0_82] : memref<8x8x512xf32, #tpu.memory_space<vmem>>, vector<1x8x512xf32>
    %197 = vector.shape_cast %196 : vector<1x8x512xf32> to vector<8x512xf32>
    %c0_83 = arith.constant 0 : index
    %c0_84 = arith.constant 0 : index
    %198 = vector.load %arg2[%c0_83, %c0_84] : memref<128x512xbf16, #tpu.memory_space<vmem>>, vector<128x512xbf16>
    %199 = arith.truncf %195 : vector<8x128xf32> to vector<8x128xbf16>
    %cst_85 = arith.constant dense<0.000000e+00> : vector<8x512xf32>
    %200 = tpu.matmul %199, %198, %cst_85 {dimension_numbers = #tpu.dot_dimension_numbers<[1], [0], [0], [1], [0, 0, 1, 1], [], []>} : vector<8x128xbf16>, vector<128x512xbf16>, vector<8x512xf32> -> vector<8x512xf32>
    %201 = arith.addf %197, %200 : vector<8x512xf32>
    %202 = vector.extract_strided_slice %201 {offsets = [0, 0], sizes = [8, 128], strides = [1, 1]} : vector<8x512xf32> to vector<8x128xf32>
    %cst_86 = arith.constant 5.000000e-01 : f32
    %203 = vector.broadcast %cst_86 : f32 to vector<8x128xf32>
    %204 = arith.mulf %203, %202 : vector<8x128xf32>
    %205 = math.tanh %204 : vector<8x128xf32>
    %cst_87 = arith.constant 1.000000e+00 : f32
    %206 = vector.broadcast %cst_87 : f32 to vector<8x128xf32>
    %207 = arith.addf %205, %206 : vector<8x128xf32>
    %cst_88 = arith.constant 5.000000e-01 : f32
    %208 = vector.broadcast %cst_88 : f32 to vector<8x128xf32>
    %209 = arith.mulf %208, %207 : vector<8x128xf32>
    %210 = vector.extract_strided_slice %201 {offsets = [0, 128], sizes = [8, 128], strides = [1, 1]} : vector<8x512xf32> to vector<8x128xf32>
    %cst_89 = arith.constant 5.000000e-01 : f32
    %211 = vector.broadcast %cst_89 : f32 to vector<8x128xf32>
    %212 = arith.mulf %211, %210 : vector<8x128xf32>
    %213 = math.tanh %212 : vector<8x128xf32>
    %cst_90 = arith.constant 1.000000e+00 : f32
    %214 = vector.broadcast %cst_90 : f32 to vector<8x128xf32>
    %215 = arith.addf %213, %214 : vector<8x128xf32>
    %cst_91 = arith.constant 5.000000e-01 : f32
    %216 = vector.broadcast %cst_91 : f32 to vector<8x128xf32>
    %217 = arith.mulf %216, %215 : vector<8x128xf32>
    %218 = vector.extract_strided_slice %201 {offsets = [0, 256], sizes = [8, 128], strides = [1, 1]} : vector<8x512xf32> to vector<8x128xf32>
    %219 = math.tanh %218 : vector<8x128xf32>
    %220 = vector.extract_strided_slice %201 {offsets = [0, 384], sizes = [8, 128], strides = [1, 1]} : vector<8x512xf32> to vector<8x128xf32>
    %cst_92 = arith.constant 5.000000e-01 : f32
    %221 = vector.broadcast %cst_92 : f32 to vector<8x128xf32>
    %222 = arith.mulf %221, %220 : vector<8x128xf32>
    %223 = math.tanh %222 : vector<8x128xf32>
    %cst_93 = arith.constant 1.000000e+00 : f32
    %224 = vector.broadcast %cst_93 : f32 to vector<8x128xf32>
    %225 = arith.addf %223, %224 : vector<8x128xf32>
    %cst_94 = arith.constant 5.000000e-01 : f32
    %226 = vector.broadcast %cst_94 : f32 to vector<8x128xf32>
    %227 = arith.mulf %226, %225 : vector<8x128xf32>
    %228 = arith.mulf %217, %193 : vector<8x128xf32>
    %229 = arith.mulf %209, %219 : vector<8x128xf32>
    %230 = arith.addf %228, %229 : vector<8x128xf32>
    %231 = math.tanh %230 : vector<8x128xf32>
    %232 = arith.mulf %227, %231 : vector<8x128xf32>
    %c6 = arith.constant 6 : index
    %c0_95 = arith.constant 0 : index
    %c0_96 = arith.constant 0 : index
    %233 = vector.load %arg10[%c6, %c0_95, %c0_96] : memref<8x8x512xf32, #tpu.memory_space<vmem>>, vector<1x8x512xf32>
    %234 = vector.shape_cast %233 : vector<1x8x512xf32> to vector<8x512xf32>
    %c0_97 = arith.constant 0 : index
    %c0_98 = arith.constant 0 : index
    %235 = vector.load %arg2[%c0_97, %c0_98] : memref<128x512xbf16, #tpu.memory_space<vmem>>, vector<128x512xbf16>
    %236 = arith.truncf %232 : vector<8x128xf32> to vector<8x128xbf16>
    %cst_99 = arith.constant dense<0.000000e+00> : vector<8x512xf32>
    %237 = tpu.matmul %236, %235, %cst_99 {dimension_numbers = #tpu.dot_dimension_numbers<[1], [0], [0], [1], [0, 0, 1, 1], [], []>} : vector<8x128xbf16>, vector<128x512xbf16>, vector<8x512xf32> -> vector<8x512xf32>
    %238 = arith.addf %234, %237 : vector<8x512xf32>
    %239 = vector.extract_strided_slice %238 {offsets = [0, 0], sizes = [8, 128], strides = [1, 1]} : vector<8x512xf32> to vector<8x128xf32>
    %cst_100 = arith.constant 5.000000e-01 : f32
    %240 = vector.broadcast %cst_100 : f32 to vector<8x128xf32>
    %241 = arith.mulf %240, %239 : vector<8x128xf32>
    %242 = math.tanh %241 : vector<8x128xf32>
    %cst_101 = arith.constant 1.000000e+00 : f32
    %243 = vector.broadcast %cst_101 : f32 to vector<8x128xf32>
    %244 = arith.addf %242, %243 : vector<8x128xf32>
    %cst_102 = arith.constant 5.000000e-01 : f32
    %245 = vector.broadcast %cst_102 : f32 to vector<8x128xf32>
    %246 = arith.mulf %245, %244 : vector<8x128xf32>
    %247 = vector.extract_strided_slice %238 {offsets = [0, 128], sizes = [8, 128], strides = [1, 1]} : vector<8x512xf32> to vector<8x128xf32>
    %cst_103 = arith.constant 5.000000e-01 : f32
    %248 = vector.broadcast %cst_103 : f32 to vector<8x128xf32>
    %249 = arith.mulf %248, %247 : vector<8x128xf32>
    %250 = math.tanh %249 : vector<8x128xf32>
    %cst_104 = arith.constant 1.000000e+00 : f32
    %251 = vector.broadcast %cst_104 : f32 to vector<8x128xf32>
    %252 = arith.addf %250, %251 : vector<8x128xf32>
    %cst_105 = arith.constant 5.000000e-01 : f32
    %253 = vector.broadcast %cst_105 : f32 to vector<8x128xf32>
    %254 = arith.mulf %253, %252 : vector<8x128xf32>
    %255 = vector.extract_strided_slice %238 {offsets = [0, 256], sizes = [8, 128], strides = [1, 1]} : vector<8x512xf32> to vector<8x128xf32>
    %256 = math.tanh %255 : vector<8x128xf32>
    %257 = vector.extract_strided_slice %238 {offsets = [0, 384], sizes = [8, 128], strides = [1, 1]} : vector<8x512xf32> to vector<8x128xf32>
    %cst_106 = arith.constant 5.000000e-01 : f32
    %258 = vector.broadcast %cst_106 : f32 to vector<8x128xf32>
    %259 = arith.mulf %258, %257 : vector<8x128xf32>
    %260 = math.tanh %259 : vector<8x128xf32>
    %cst_107 = arith.constant 1.000000e+00 : f32
    %261 = vector.broadcast %cst_107 : f32 to vector<8x128xf32>
    %262 = arith.addf %260, %261 : vector<8x128xf32>
    %cst_108 = arith.constant 5.000000e-01 : f32
    %263 = vector.broadcast %cst_108 : f32 to vector<8x128xf32>
    %264 = arith.mulf %263, %262 : vector<8x128xf32>
    %265 = arith.mulf %254, %230 : vector<8x128xf32>
    %266 = arith.mulf %246, %256 : vector<8x128xf32>
    %267 = arith.addf %265, %266 : vector<8x128xf32>
    %268 = math.tanh %267 : vector<8x128xf32>
    %269 = arith.mulf %264, %268 : vector<8x128xf32>
    %c7 = arith.constant 7 : index
    %c0_109 = arith.constant 0 : index
    %c0_110 = arith.constant 0 : index
    %270 = vector.load %arg10[%c7, %c0_109, %c0_110] : memref<8x8x512xf32, #tpu.memory_space<vmem>>, vector<1x8x512xf32>
    %271 = vector.shape_cast %270 : vector<1x8x512xf32> to vector<8x512xf32>
    %c0_111 = arith.constant 0 : index
    %c0_112 = arith.constant 0 : index
    %272 = vector.load %arg2[%c0_111, %c0_112] : memref<128x512xbf16, #tpu.memory_space<vmem>>, vector<128x512xbf16>
    %273 = arith.truncf %269 : vector<8x128xf32> to vector<8x128xbf16>
    %cst_113 = arith.constant dense<0.000000e+00> : vector<8x512xf32>
    %274 = tpu.matmul %273, %272, %cst_113 {dimension_numbers = #tpu.dot_dimension_numbers<[1], [0], [0], [1], [0, 0, 1, 1], [], []>} : vector<8x128xbf16>, vector<128x512xbf16>, vector<8x512xf32> -> vector<8x512xf32>
    %275 = arith.addf %271, %274 : vector<8x512xf32>
    %276 = vector.extract_strided_slice %275 {offsets = [0, 0], sizes = [8, 128], strides = [1, 1]} : vector<8x512xf32> to vector<8x128xf32>
    %cst_114 = arith.constant 5.000000e-01 : f32
    %277 = vector.broadcast %cst_114 : f32 to vector<8x128xf32>
    %278 = arith.mulf %277, %276 : vector<8x128xf32>
    %279 = math.tanh %278 : vector<8x128xf32>
    %cst_115 = arith.constant 1.000000e+00 : f32
    %280 = vector.broadcast %cst_115 : f32 to vector<8x128xf32>
    %281 = arith.addf %279, %280 : vector<8x128xf32>
    %cst_116 = arith.constant 5.000000e-01 : f32
    %282 = vector.broadcast %cst_116 : f32 to vector<8x128xf32>
    %283 = arith.mulf %282, %281 : vector<8x128xf32>
    %284 = vector.extract_strided_slice %275 {offsets = [0, 128], sizes = [8, 128], strides = [1, 1]} : vector<8x512xf32> to vector<8x128xf32>
    %cst_117 = arith.constant 5.000000e-01 : f32
    %285 = vector.broadcast %cst_117 : f32 to vector<8x128xf32>
    %286 = arith.mulf %285, %284 : vector<8x128xf32>
    %287 = math.tanh %286 : vector<8x128xf32>
    %cst_118 = arith.constant 1.000000e+00 : f32
    %288 = vector.broadcast %cst_118 : f32 to vector<8x128xf32>
    %289 = arith.addf %287, %288 : vector<8x128xf32>
    %cst_119 = arith.constant 5.000000e-01 : f32
    %290 = vector.broadcast %cst_119 : f32 to vector<8x128xf32>
    %291 = arith.mulf %290, %289 : vector<8x128xf32>
    %292 = vector.extract_strided_slice %275 {offsets = [0, 256], sizes = [8, 128], strides = [1, 1]} : vector<8x512xf32> to vector<8x128xf32>
    %293 = math.tanh %292 : vector<8x128xf32>
    %294 = vector.extract_strided_slice %275 {offsets = [0, 384], sizes = [8, 128], strides = [1, 1]} : vector<8x512xf32> to vector<8x128xf32>
    %cst_120 = arith.constant 5.000000e-01 : f32
    %295 = vector.broadcast %cst_120 : f32 to vector<8x128xf32>
    %296 = arith.mulf %295, %294 : vector<8x128xf32>
    %297 = math.tanh %296 : vector<8x128xf32>
    %cst_121 = arith.constant 1.000000e+00 : f32
    %298 = vector.broadcast %cst_121 : f32 to vector<8x128xf32>
    %299 = arith.addf %297, %298 : vector<8x128xf32>
    %cst_122 = arith.constant 5.000000e-01 : f32
    %300 = vector.broadcast %cst_122 : f32 to vector<8x128xf32>
    %301 = arith.mulf %300, %299 : vector<8x128xf32>
    %302 = arith.mulf %291, %267 : vector<8x128xf32>
    %303 = arith.mulf %283, %293 : vector<8x128xf32>
    %304 = arith.addf %302, %303 : vector<8x128xf32>
    %305 = math.tanh %304 : vector<8x128xf32>
    %306 = arith.mulf %301, %305 : vector<8x128xf32>
    %c0_123 = arith.constant 0 : index
    %c0_124 = arith.constant 0 : index
    %c0_125 = arith.constant 0 : index
    %307 = vector.load %arg8[%c0_123, %c0_124, %c0_125] : memref<2x8x128xf32, #tpu.memory_space<vmem>>, vector<1x8x128xf32>
    %308 = vector.shape_cast %307 : vector<1x8x128xf32> to vector<8x128xf32>
    %309 = vector.shape_cast %306 : vector<8x128xf32> to vector<1x8x128xf32>
    tpu.vector_store %arg8[%c0_123, %c0_124, %c0_125], %309 {strides = array<i32>} : memref<2x8x128xf32, #tpu.memory_space<vmem>>, vector<1x8x128xf32>,
    %c0_126 = arith.constant 0 : index
    %c0_127 = arith.constant 0 : index
    %c0_128 = arith.constant 0 : index
    %310 = vector.load %arg9[%c0_126, %c0_127, %c0_128] : memref<2x8x128xf32, #tpu.memory_space<vmem>>, vector<1x8x128xf32>
    %311 = vector.shape_cast %310 : vector<1x8x128xf32> to vector<8x128xf32>
    %312 = vector.shape_cast %304 : vector<8x128xf32> to vector<1x8x128xf32>
    tpu.vector_store %arg9[%c0_126, %c0_127, %c0_128], %312 {strides = array<i32>} : memref<2x8x128xf32, #tpu.memory_space<vmem>>, vector<1x8x128xf32>,
    %c0_129 = arith.constant 0 : index
    %c0_130 = arith.constant 0 : index
    %313 = vector.load %arg6[%c0_129, %c0_130] : memref<1x512xf32, #tpu.memory_space<vmem>>, vector<1x512xf32>
    %314 = vector.shape_cast %313 : vector<1x512xf32> to vector<1x512xf32>
    %315 = vector.broadcast %314 : vector<1x512xf32> to vector<8x512xf32>
    %cst_131 = arith.constant 0.000000e+00 : f32
    %316 = vector.broadcast %cst_131 : f32 to vector<8x128xf32>
    %cst_132 = arith.constant 0.000000e+00 : f32
    %317 = vector.broadcast %cst_132 : f32 to vector<8x128xf32>
    %c0_133 = arith.constant 0 : index
    %c0_134 = arith.constant 0 : index
    %318 = vector.load %arg4[%c0_133, %c0_134] : memref<128x512xbf16, #tpu.memory_space<vmem>>, vector<128x512xbf16>
    %319 = arith.truncf %47 : vector<8x128xf32> to vector<8x128xbf16>
    %cst_135 = arith.constant dense<0.000000e+00> : vector<8x512xf32>
    %320 = tpu.matmul %319, %318, %cst_135 {dimension_numbers = #tpu.dot_dimension_numbers<[1], [0], [0], [1], [0, 0, 1, 1], [], []>} : vector<8x128xbf16>, vector<128x512xbf16>, vector<8x512xf32> -> vector<8x512xf32>
    %321 = arith.addf %320, %315 : vector<8x512xf32>
    %c0_136 = arith.constant 0 : index
    %c0_137 = arith.constant 0 : index
    %322 = vector.load %arg5[%c0_136, %c0_137] : memref<128x512xbf16, #tpu.memory_space<vmem>>, vector<128x512xbf16>
    %323 = arith.truncf %316 : vector<8x128xf32> to vector<8x128xbf16>
    %cst_138 = arith.constant dense<0.000000e+00> : vector<8x512xf32>
    %324 = tpu.matmul %323, %322, %cst_138 {dimension_numbers = #tpu.dot_dimension_numbers<[1], [0], [0], [1], [0, 0, 1, 1], [], []>} : vector<8x128xbf16>, vector<128x512xbf16>, vector<8x512xf32> -> vector<8x512xf32>
    %325 = arith.addf %321, %324 : vector<8x512xf32>
    %326 = vector.extract_strided_slice %325 {offsets = [0, 0], sizes = [8, 128], strides = [1, 1]} : vector<8x512xf32> to vector<8x128xf32>
    %cst_139 = arith.constant 5.000000e-01 : f32
    %327 = vector.broadcast %cst_139 : f32 to vector<8x128xf32>
    %328 = arith.mulf %327, %326 : vector<8x128xf32>
    %329 = math.tanh %328 : vector<8x128xf32>
    %cst_140 = arith.constant 1.000000e+00 : f32
    %330 = vector.broadcast %cst_140 : f32 to vector<8x128xf32>
    %331 = arith.addf %329, %330 : vector<8x128xf32>
    %cst_141 = arith.constant 5.000000e-01 : f32
    %332 = vector.broadcast %cst_141 : f32 to vector<8x128xf32>
    %333 = arith.mulf %332, %331 : vector<8x128xf32>
    %334 = vector.extract_strided_slice %325 {offsets = [0, 128], sizes = [8, 128], strides = [1, 1]} : vector<8x512xf32> to vector<8x128xf32>
    %cst_142 = arith.constant 5.000000e-01 : f32
    %335 = vector.broadcast %cst_142 : f32 to vector<8x128xf32>
    %336 = arith.mulf %335, %334 : vector<8x128xf32>
    %337 = math.tanh %336 : vector<8x128xf32>
    %cst_143 = arith.constant 1.000000e+00 : f32
    %338 = vector.broadcast %cst_143 : f32 to vector<8x128xf32>
    %339 = arith.addf %337, %338 : vector<8x128xf32>
    %cst_144 = arith.constant 5.000000e-01 : f32
    %340 = vector.broadcast %cst_144 : f32 to vector<8x128xf32>
    %341 = arith.mulf %340, %339 : vector<8x128xf32>
    %342 = vector.extract_strided_slice %325 {offsets = [0, 256], sizes = [8, 128], strides = [1, 1]} : vector<8x512xf32> to vector<8x128xf32>
    %343 = math.tanh %342 : vector<8x128xf32>
    %344 = vector.extract_strided_slice %325 {offsets = [0, 384], sizes = [8, 128], strides = [1, 1]} : vector<8x512xf32> to vector<8x128xf32>
    %cst_145 = arith.constant 5.000000e-01 : f32
    %345 = vector.broadcast %cst_145 : f32 to vector<8x128xf32>
    %346 = arith.mulf %345, %344 : vector<8x128xf32>
    %347 = math.tanh %346 : vector<8x128xf32>
    %cst_146 = arith.constant 1.000000e+00 : f32
    %348 = vector.broadcast %cst_146 : f32 to vector<8x128xf32>
    %349 = arith.addf %347, %348 : vector<8x128xf32>
    %cst_147 = arith.constant 5.000000e-01 : f32
    %350 = vector.broadcast %cst_147 : f32 to vector<8x128xf32>
    %351 = arith.mulf %350, %349 : vector<8x128xf32>
    %352 = arith.mulf %341, %317 : vector<8x128xf32>
    %353 = arith.mulf %333, %343 : vector<8x128xf32>
    %354 = arith.addf %352, %353 : vector<8x128xf32>
    %355 = math.tanh %354 : vector<8x128xf32>
    %356 = arith.mulf %351, %355 : vector<8x128xf32>
    %c0_148 = arith.constant 0 : index
    %c0_149 = arith.constant 0 : index
    %357 = vector.load %arg4[%c0_148, %c0_149] : memref<128x512xbf16, #tpu.memory_space<vmem>>, vector<128x512xbf16>
    %358 = arith.truncf %84 : vector<8x128xf32> to vector<8x128xbf16>
    %cst_150 = arith.constant dense<0.000000e+00> : vector<8x512xf32>
    %359 = tpu.matmul %358, %357, %cst_150 {dimension_numbers = #tpu.dot_dimension_numbers<[1], [0], [0], [1], [0, 0, 1, 1], [], []>} : vector<8x128xbf16>, vector<128x512xbf16>, vector<8x512xf32> -> vector<8x512xf32>
    %360 = arith.addf %359, %315 : vector<8x512xf32>
    %c0_151 = arith.constant 0 : index
    %c0_152 = arith.constant 0 : index
    %361 = vector.load %arg5[%c0_151, %c0_152] : memref<128x512xbf16, #tpu.memory_space<vmem>>, vector<128x512xbf16>
    %362 = arith.truncf %356 : vector<8x128xf32> to vector<8x128xbf16>
    %cst_153 = arith.constant dense<0.000000e+00> : vector<8x512xf32>
    %363 = tpu.matmul %362, %361, %cst_153 {dimension_numbers = #tpu.dot_dimension_numbers<[1], [0], [0], [1], [0, 0, 1, 1], [], []>} : vector<8x128xbf16>, vector<128x512xbf16>, vector<8x512xf32> -> vector<8x512xf32>
    %364 = arith.addf %360, %363 : vector<8x512xf32>
    %365 = vector.extract_strided_slice %364 {offsets = [0, 0], sizes = [8, 128], strides = [1, 1]} : vector<8x512xf32> to vector<8x128xf32>
    %cst_154 = arith.constant 5.000000e-01 : f32
    %366 = vector.broadcast %cst_154 : f32 to vector<8x128xf32>
    %367 = arith.mulf %366, %365 : vector<8x128xf32>
    %368 = math.tanh %367 : vector<8x128xf32>
    %cst_155 = arith.constant 1.000000e+00 : f32
    %369 = vector.broadcast %cst_155 : f32 to vector<8x128xf32>
    %370 = arith.addf %368, %369 : vector<8x128xf32>
    %cst_156 = arith.constant 5.000000e-01 : f32
    %371 = vector.broadcast %cst_156 : f32 to vector<8x128xf32>
    %372 = arith.mulf %371, %370 : vector<8x128xf32>
    %373 = vector.extract_strided_slice %364 {offsets = [0, 128], sizes = [8, 128], strides = [1, 1]} : vector<8x512xf32> to vector<8x128xf32>
    %cst_157 = arith.constant 5.000000e-01 : f32
    %374 = vector.broadcast %cst_157 : f32 to vector<8x128xf32>
    %375 = arith.mulf %374, %373 : vector<8x128xf32>
    %376 = math.tanh %375 : vector<8x128xf32>
    %cst_158 = arith.constant 1.000000e+00 : f32
    %377 = vector.broadcast %cst_158 : f32 to vector<8x128xf32>
    %378 = arith.addf %376, %377 : vector<8x128xf32>
    %cst_159 = arith.constant 5.000000e-01 : f32
    %379 = vector.broadcast %cst_159 : f32 to vector<8x128xf32>
    %380 = arith.mulf %379, %378 : vector<8x128xf32>
    %381 = vector.extract_strided_slice %364 {offsets = [0, 256], sizes = [8, 128], strides = [1, 1]} : vector<8x512xf32> to vector<8x128xf32>
    %382 = math.tanh %381 : vector<8x128xf32>
    %383 = vector.extract_strided_slice %364 {offsets = [0, 384], sizes = [8, 128], strides = [1, 1]} : vector<8x512xf32> to vector<8x128xf32>
    %cst_160 = arith.constant 5.000000e-01 : f32
    %384 = vector.broadcast %cst_160 : f32 to vector<8x128xf32>
    %385 = arith.mulf %384, %383 : vector<8x128xf32>
    %386 = math.tanh %385 : vector<8x128xf32>
    %cst_161 = arith.constant 1.000000e+00 : f32
    %387 = vector.broadcast %cst_161 : f32 to vector<8x128xf32>
    %388 = arith.addf %386, %387 : vector<8x128xf32>
    %cst_162 = arith.constant 5.000000e-01 : f32
    %389 = vector.broadcast %cst_162 : f32 to vector<8x128xf32>
    %390 = arith.mulf %389, %388 : vector<8x128xf32>
    %391 = arith.mulf %380, %354 : vector<8x128xf32>
    %392 = arith.mulf %372, %382 : vector<8x128xf32>
    %393 = arith.addf %391, %392 : vector<8x128xf32>
    %394 = math.tanh %393 : vector<8x128xf32>
    %395 = arith.mulf %390, %394 : vector<8x128xf32>
    %c0_163 = arith.constant 0 : index
    %c0_164 = arith.constant 0 : index
    %396 = vector.load %arg4[%c0_163, %c0_164] : memref<128x512xbf16, #tpu.memory_space<vmem>>, vector<128x512xbf16>
    %397 = arith.truncf %121 : vector<8x128xf32> to vector<8x128xbf16>
    %cst_165 = arith.constant dense<0.000000e+00> : vector<8x512xf32>
    %398 = tpu.matmul %397, %396, %cst_165 {dimension_numbers = #tpu.dot_dimension_numbers<[1], [0], [0], [1], [0, 0, 1, 1], [], []>} : vector<8x128xbf16>, vector<128x512xbf16>, vector<8x512xf32> -> vector<8x512xf32>
    %399 = arith.addf %398, %315 : vector<8x512xf32>
    %c0_166 = arith.constant 0 : index
    %c0_167 = arith.constant 0 : index
    %400 = vector.load %arg5[%c0_166, %c0_167] : memref<128x512xbf16, #tpu.memory_space<vmem>>, vector<128x512xbf16>
    %401 = arith.truncf %395 : vector<8x128xf32> to vector<8x128xbf16>
    %cst_168 = arith.constant dense<0.000000e+00> : vector<8x512xf32>
    %402 = tpu.matmul %401, %400, %cst_168 {dimension_numbers = #tpu.dot_dimension_numbers<[1], [0], [0], [1], [0, 0, 1, 1], [], []>} : vector<8x128xbf16>, vector<128x512xbf16>, vector<8x512xf32> -> vector<8x512xf32>
    %403 = arith.addf %399, %402 : vector<8x512xf32>
    %404 = vector.extract_strided_slice %403 {offsets = [0, 0], sizes = [8, 128], strides = [1, 1]} : vector<8x512xf32> to vector<8x128xf32>
    %cst_169 = arith.constant 5.000000e-01 : f32
    %405 = vector.broadcast %cst_169 : f32 to vector<8x128xf32>
    %406 = arith.mulf %405, %404 : vector<8x128xf32>
    %407 = math.tanh %406 : vector<8x128xf32>
    %cst_170 = arith.constant 1.000000e+00 : f32
    %408 = vector.broadcast %cst_170 : f32 to vector<8x128xf32>
    %409 = arith.addf %407, %408 : vector<8x128xf32>
    %cst_171 = arith.constant 5.000000e-01 : f32
    %410 = vector.broadcast %cst_171 : f32 to vector<8x128xf32>
    %411 = arith.mulf %410, %409 : vector<8x128xf32>
    %412 = vector.extract_strided_slice %403 {offsets = [0, 128], sizes = [8, 128], strides = [1, 1]} : vector<8x512xf32> to vector<8x128xf32>
    %cst_172 = arith.constant 5.000000e-01 : f32
    %413 = vector.broadcast %cst_172 : f32 to vector<8x128xf32>
    %414 = arith.mulf %413, %412 : vector<8x128xf32>
    %415 = math.tanh %414 : vector<8x128xf32>
    %cst_173 = arith.constant 1.000000e+00 : f32
    %416 = vector.broadcast %cst_173 : f32 to vector<8x128xf32>
    %417 = arith.addf %415, %416 : vector<8x128xf32>
    %cst_174 = arith.constant 5.000000e-01 : f32
    %418 = vector.broadcast %cst_174 : f32 to vector<8x128xf32>
    %419 = arith.mulf %418, %417 : vector<8x128xf32>
    %420 = vector.extract_strided_slice %403 {offsets = [0, 256], sizes = [8, 128], strides = [1, 1]} : vector<8x512xf32> to vector<8x128xf32>
    %421 = math.tanh %420 : vector<8x128xf32>
    %422 = vector.extract_strided_slice %403 {offsets = [0, 384], sizes = [8, 128], strides = [1, 1]} : vector<8x512xf32> to vector<8x128xf32>
    %cst_175 = arith.constant 5.000000e-01 : f32
    %423 = vector.broadcast %cst_175 : f32 to vector<8x128xf32>
    %424 = arith.mulf %423, %422 : vector<8x128xf32>
    %425 = math.tanh %424 : vector<8x128xf32>
    %cst_176 = arith.constant 1.000000e+00 : f32
    %426 = vector.broadcast %cst_176 : f32 to vector<8x128xf32>
    %427 = arith.addf %425, %426 : vector<8x128xf32>
    %cst_177 = arith.constant 5.000000e-01 : f32
    %428 = vector.broadcast %cst_177 : f32 to vector<8x128xf32>
    %429 = arith.mulf %428, %427 : vector<8x128xf32>
    %430 = arith.mulf %419, %393 : vector<8x128xf32>
    %431 = arith.mulf %411, %421 : vector<8x128xf32>
    %432 = arith.addf %430, %431 : vector<8x128xf32>
    %433 = math.tanh %432 : vector<8x128xf32>
    %434 = arith.mulf %429, %433 : vector<8x128xf32>
    %c0_178 = arith.constant 0 : index
    %c0_179 = arith.constant 0 : index
    %435 = vector.load %arg4[%c0_178, %c0_179] : memref<128x512xbf16, #tpu.memory_space<vmem>>, vector<128x512xbf16>
    %436 = arith.truncf %158 : vector<8x128xf32> to vector<8x128xbf16>
    %cst_180 = arith.constant dense<0.000000e+00> : vector<8x512xf32>
    %437 = tpu.matmul %436, %435, %cst_180 {dimension_numbers = #tpu.dot_dimension_numbers<[1], [0], [0], [1], [0, 0, 1, 1], [], []>} : vector<8x128xbf16>, vector<128x512xbf16>, vector<8x512xf32> -> vector<8x512xf32>
    %438 = arith.addf %437, %315 : vector<8x512xf32>
    %c0_181 = arith.constant 0 : index
    %c0_182 = arith.constant 0 : index
    %439 = vector.load %arg5[%c0_181, %c0_182] : memref<128x512xbf16, #tpu.memory_space<vmem>>, vector<128x512xbf16>
    %440 = arith.truncf %434 : vector<8x128xf32> to vector<8x128xbf16>
    %cst_183 = arith.constant dense<0.000000e+00> : vector<8x512xf32>
    %441 = tpu.matmul %440, %439, %cst_183 {dimension_numbers = #tpu.dot_dimension_numbers<[1], [0], [0], [1], [0, 0, 1, 1], [], []>} : vector<8x128xbf16>, vector<128x512xbf16>, vector<8x512xf32> -> vector<8x512xf32>
    %442 = arith.addf %438, %441 : vector<8x512xf32>
    %443 = vector.extract_strided_slice %442 {offsets = [0, 0], sizes = [8, 128], strides = [1, 1]} : vector<8x512xf32> to vector<8x128xf32>
    %cst_184 = arith.constant 5.000000e-01 : f32
    %444 = vector.broadcast %cst_184 : f32 to vector<8x128xf32>
    %445 = arith.mulf %444, %443 : vector<8x128xf32>
    %446 = math.tanh %445 : vector<8x128xf32>
    %cst_185 = arith.constant 1.000000e+00 : f32
    %447 = vector.broadcast %cst_185 : f32 to vector<8x128xf32>
    %448 = arith.addf %446, %447 : vector<8x128xf32>
    %cst_186 = arith.constant 5.000000e-01 : f32
    %449 = vector.broadcast %cst_186 : f32 to vector<8x128xf32>
    %450 = arith.mulf %449, %448 : vector<8x128xf32>
    %451 = vector.extract_strided_slice %442 {offsets = [0, 128], sizes = [8, 128], strides = [1, 1]} : vector<8x512xf32> to vector<8x128xf32>
    %cst_187 = arith.constant 5.000000e-01 : f32
    %452 = vector.broadcast %cst_187 : f32 to vector<8x128xf32>
    %453 = arith.mulf %452, %451 : vector<8x128xf32>
    %454 = math.tanh %453 : vector<8x128xf32>
    %cst_188 = arith.constant 1.000000e+00 : f32
    %455 = vector.broadcast %cst_188 : f32 to vector<8x128xf32>
    %456 = arith.addf %454, %455 : vector<8x128xf32>
    %cst_189 = arith.constant 5.000000e-01 : f32
    %457 = vector.broadcast %cst_189 : f32 to vector<8x128xf32>
    %458 = arith.mulf %457, %456 : vector<8x128xf32>
    %459 = vector.extract_strided_slice %442 {offsets = [0, 256], sizes = [8, 128], strides = [1, 1]} : vector<8x512xf32> to vector<8x128xf32>
    %460 = math.tanh %459 : vector<8x128xf32>
    %461 = vector.extract_strided_slice %442 {offsets = [0, 384], sizes = [8, 128], strides = [1, 1]} : vector<8x512xf32> to vector<8x128xf32>
    %cst_190 = arith.constant 5.000000e-01 : f32
    %462 = vector.broadcast %cst_190 : f32 to vector<8x128xf32>
    %463 = arith.mulf %462, %461 : vector<8x128xf32>
    %464 = math.tanh %463 : vector<8x128xf32>
    %cst_191 = arith.constant 1.000000e+00 : f32
    %465 = vector.broadcast %cst_191 : f32 to vector<8x128xf32>
    %466 = arith.addf %464, %465 : vector<8x128xf32>
    %cst_192 = arith.constant 5.000000e-01 : f32
    %467 = vector.broadcast %cst_192 : f32 to vector<8x128xf32>
    %468 = arith.mulf %467, %466 : vector<8x128xf32>
    %469 = arith.mulf %458, %432 : vector<8x128xf32>
    %470 = arith.mulf %450, %460 : vector<8x128xf32>
    %471 = arith.addf %469, %470 : vector<8x128xf32>
    %472 = math.tanh %471 : vector<8x128xf32>
    %473 = arith.mulf %468, %472 : vector<8x128xf32>
    %c0_193 = arith.constant 0 : index
    %c0_194 = arith.constant 0 : index
    %474 = vector.load %arg4[%c0_193, %c0_194] : memref<128x512xbf16, #tpu.memory_space<vmem>>, vector<128x512xbf16>
    %475 = arith.truncf %195 : vector<8x128xf32> to vector<8x128xbf16>
    %cst_195 = arith.constant dense<0.000000e+00> : vector<8x512xf32>
    %476 = tpu.matmul %475, %474, %cst_195 {dimension_numbers = #tpu.dot_dimension_numbers<[1], [0], [0], [1], [0, 0, 1, 1], [], []>} : vector<8x128xbf16>, vector<128x512xbf16>, vector<8x512xf32> -> vector<8x512xf32>
    %477 = arith.addf %476, %315 : vector<8x512xf32>
    %c0_196 = arith.constant 0 : index
    %c0_197 = arith.constant 0 : index
    %478 = vector.load %arg5[%c0_196, %c0_197] : memref<128x512xbf16, #tpu.memory_space<vmem>>, vector<128x512xbf16>
    %479 = arith.truncf %473 : vector<8x128xf32> to vector<8x128xbf16>
    %cst_198 = arith.constant dense<0.000000e+00> : vector<8x512xf32>
    %480 = tpu.matmul %479, %478, %cst_198 {dimension_numbers = #tpu.dot_dimension_numbers<[1], [0], [0], [1], [0, 0, 1, 1], [], []>} : vector<8x128xbf16>, vector<128x512xbf16>, vector<8x512xf32> -> vector<8x512xf32>
    %481 = arith.addf %477, %480 : vector<8x512xf32>
    %482 = vector.extract_strided_slice %481 {offsets = [0, 0], sizes = [8, 128], strides = [1, 1]} : vector<8x512xf32> to vector<8x128xf32>
    %cst_199 = arith.constant 5.000000e-01 : f32
    %483 = vector.broadcast %cst_199 : f32 to vector<8x128xf32>
    %484 = arith.mulf %483, %482 : vector<8x128xf32>
    %485 = math.tanh %484 : vector<8x128xf32>
    %cst_200 = arith.constant 1.000000e+00 : f32
    %486 = vector.broadcast %cst_200 : f32 to vector<8x128xf32>
    %487 = arith.addf %485, %486 : vector<8x128xf32>
    %cst_201 = arith.constant 5.000000e-01 : f32
    %488 = vector.broadcast %cst_201 : f32 to vector<8x128xf32>
    %489 = arith.mulf %488, %487 : vector<8x128xf32>
    %490 = vector.extract_strided_slice %481 {offsets = [0, 128], sizes = [8, 128], strides = [1, 1]} : vector<8x512xf32> to vector<8x128xf32>
    %cst_202 = arith.constant 5.000000e-01 : f32
    %491 = vector.broadcast %cst_202 : f32 to vector<8x128xf32>
    %492 = arith.mulf %491, %490 : vector<8x128xf32>
    %493 = math.tanh %492 : vector<8x128xf32>
    %cst_203 = arith.constant 1.000000e+00 : f32
    %494 = vector.broadcast %cst_203 : f32 to vector<8x128xf32>
    %495 = arith.addf %493, %494 : vector<8x128xf32>
    %cst_204 = arith.constant 5.000000e-01 : f32
    %496 = vector.broadcast %cst_204 : f32 to vector<8x128xf32>
    %497 = arith.mulf %496, %495 : vector<8x128xf32>
    %498 = vector.extract_strided_slice %481 {offsets = [0, 256], sizes = [8, 128], strides = [1, 1]} : vector<8x512xf32> to vector<8x128xf32>
    %499 = math.tanh %498 : vector<8x128xf32>
    %500 = vector.extract_strided_slice %481 {offsets = [0, 384], sizes = [8, 128], strides = [1, 1]} : vector<8x512xf32> to vector<8x128xf32>
    %cst_205 = arith.constant 5.000000e-01 : f32
    %501 = vector.broadcast %cst_205 : f32 to vector<8x128xf32>
    %502 = arith.mulf %501, %500 : vector<8x128xf32>
    %503 = math.tanh %502 : vector<8x128xf32>
    %cst_206 = arith.constant 1.000000e+00 : f32
    %504 = vector.broadcast %cst_206 : f32 to vector<8x128xf32>
    %505 = arith.addf %503, %504 : vector<8x128xf32>
    %cst_207 = arith.constant 5.000000e-01 : f32
    %506 = vector.broadcast %cst_207 : f32 to vector<8x128xf32>
    %507 = arith.mulf %506, %505 : vector<8x128xf32>
    %508 = arith.mulf %497, %471 : vector<8x128xf32>
    %509 = arith.mulf %489, %499 : vector<8x128xf32>
    %510 = arith.addf %508, %509 : vector<8x128xf32>
    %511 = math.tanh %510 : vector<8x128xf32>
    %512 = arith.mulf %507, %511 : vector<8x128xf32>
    %c0_208 = arith.constant 0 : index
    %c0_209 = arith.constant 0 : index
    %513 = vector.load %arg4[%c0_208, %c0_209] : memref<128x512xbf16, #tpu.memory_space<vmem>>, vector<128x512xbf16>
    %514 = arith.truncf %232 : vector<8x128xf32> to vector<8x128xbf16>
    %cst_210 = arith.constant dense<0.000000e+00> : vector<8x512xf32>
    %515 = tpu.matmul %514, %513, %cst_210 {dimension_numbers = #tpu.dot_dimension_numbers<[1], [0], [0], [1], [0, 0, 1, 1], [], []>} : vector<8x128xbf16>, vector<128x512xbf16>, vector<8x512xf32> -> vector<8x512xf32>
    %516 = arith.addf %515, %315 : vector<8x512xf32>
    %c0_211 = arith.constant 0 : index
    %c0_212 = arith.constant 0 : index
    %517 = vector.load %arg5[%c0_211, %c0_212] : memref<128x512xbf16, #tpu.memory_space<vmem>>, vector<128x512xbf16>
    %518 = arith.truncf %512 : vector<8x128xf32> to vector<8x128xbf16>
    %cst_213 = arith.constant dense<0.000000e+00> : vector<8x512xf32>
    %519 = tpu.matmul %518, %517, %cst_213 {dimension_numbers = #tpu.dot_dimension_numbers<[1], [0], [0], [1], [0, 0, 1, 1], [], []>} : vector<8x128xbf16>, vector<128x512xbf16>, vector<8x512xf32> -> vector<8x512xf32>
    %520 = arith.addf %516, %519 : vector<8x512xf32>
    %521 = vector.extract_strided_slice %520 {offsets = [0, 0], sizes = [8, 128], strides = [1, 1]} : vector<8x512xf32> to vector<8x128xf32>
    %cst_214 = arith.constant 5.000000e-01 : f32
    %522 = vector.broadcast %cst_214 : f32 to vector<8x128xf32>
    %523 = arith.mulf %522, %521 : vector<8x128xf32>
    %524 = math.tanh %523 : vector<8x128xf32>
    %cst_215 = arith.constant 1.000000e+00 : f32
    %525 = vector.broadcast %cst_215 : f32 to vector<8x128xf32>
    %526 = arith.addf %524, %525 : vector<8x128xf32>
    %cst_216 = arith.constant 5.000000e-01 : f32
    %527 = vector.broadcast %cst_216 : f32 to vector<8x128xf32>
    %528 = arith.mulf %527, %526 : vector<8x128xf32>
    %529 = vector.extract_strided_slice %520 {offsets = [0, 128], sizes = [8, 128], strides = [1, 1]} : vector<8x512xf32> to vector<8x128xf32>
    %cst_217 = arith.constant 5.000000e-01 : f32
    %530 = vector.broadcast %cst_217 : f32 to vector<8x128xf32>
    %531 = arith.mulf %530, %529 : vector<8x128xf32>
    %532 = math.tanh %531 : vector<8x128xf32>
    %cst_218 = arith.constant 1.000000e+00 : f32
    %533 = vector.broadcast %cst_218 : f32 to vector<8x128xf32>
    %534 = arith.addf %532, %533 : vector<8x128xf32>
    %cst_219 = arith.constant 5.000000e-01 : f32
    %535 = vector.broadcast %cst_219 : f32 to vector<8x128xf32>
    %536 = arith.mulf %535, %534 : vector<8x128xf32>
    %537 = vector.extract_strided_slice %520 {offsets = [0, 256], sizes = [8, 128], strides = [1, 1]} : vector<8x512xf32> to vector<8x128xf32>
    %538 = math.tanh %537 : vector<8x128xf32>
    %539 = vector.extract_strided_slice %520 {offsets = [0, 384], sizes = [8, 128], strides = [1, 1]} : vector<8x512xf32> to vector<8x128xf32>
    %cst_220 = arith.constant 5.000000e-01 : f32
    %540 = vector.broadcast %cst_220 : f32 to vector<8x128xf32>
    %541 = arith.mulf %540, %539 : vector<8x128xf32>
    %542 = math.tanh %541 : vector<8x128xf32>
    %cst_221 = arith.constant 1.000000e+00 : f32
    %543 = vector.broadcast %cst_221 : f32 to vector<8x128xf32>
    %544 = arith.addf %542, %543 : vector<8x128xf32>
    %cst_222 = arith.constant 5.000000e-01 : f32
    %545 = vector.broadcast %cst_222 : f32 to vector<8x128xf32>
    %546 = arith.mulf %545, %544 : vector<8x128xf32>
    %547 = arith.mulf %536, %510 : vector<8x128xf32>
    %548 = arith.mulf %528, %538 : vector<8x128xf32>
    %549 = arith.addf %547, %548 : vector<8x128xf32>
    %550 = math.tanh %549 : vector<8x128xf32>
    %551 = arith.mulf %546, %550 : vector<8x128xf32>
    %c0_223 = arith.constant 0 : index
    %c0_224 = arith.constant 0 : index
    %552 = vector.load %arg4[%c0_223, %c0_224] : memref<128x512xbf16, #tpu.memory_space<vmem>>, vector<128x512xbf16>
    %553 = arith.truncf %269 : vector<8x128xf32> to vector<8x128xbf16>
    %cst_225 = arith.constant dense<0.000000e+00> : vector<8x512xf32>
    %554 = tpu.matmul %553, %552, %cst_225 {dimension_numbers = #tpu.dot_dimension_numbers<[1], [0], [0], [1], [0, 0, 1, 1], [], []>} : vector<8x128xbf16>, vector<128x512xbf16>, vector<8x512xf32> -> vector<8x512xf32>
    %555 = arith.addf %554, %315 : vector<8x512xf32>
    %c0_226 = arith.constant 0 : index
    %c0_227 = arith.constant 0 : index
    %556 = vector.load %arg5[%c0_226, %c0_227] : memref<128x512xbf16, #tpu.memory_space<vmem>>, vector<128x512xbf16>
    %557 = arith.truncf %551 : vector<8x128xf32> to vector<8x128xbf16>
    %cst_228 = arith.constant dense<0.000000e+00> : vector<8x512xf32>
    %558 = tpu.matmul %557, %556, %cst_228 {dimension_numbers = #tpu.dot_dimension_numbers<[1], [0], [0], [1], [0, 0, 1, 1], [], []>} : vector<8x128xbf16>, vector<128x512xbf16>, vector<8x512xf32> -> vector<8x512xf32>
    %559 = arith.addf %555, %558 : vector<8x512xf32>
    %560 = vector.extract_strided_slice %559 {offsets = [0, 0], sizes = [8, 128], strides = [1, 1]} : vector<8x512xf32> to vector<8x128xf32>
    %cst_229 = arith.constant 5.000000e-01 : f32
    %561 = vector.broadcast %cst_229 : f32 to vector<8x128xf32>
    %562 = arith.mulf %561, %560 : vector<8x128xf32>
    %563 = math.tanh %562 : vector<8x128xf32>
    %cst_230 = arith.constant 1.000000e+00 : f32
    %564 = vector.broadcast %cst_230 : f32 to vector<8x128xf32>
    %565 = arith.addf %563, %564 : vector<8x128xf32>
    %cst_231 = arith.constant 5.000000e-01 : f32
    %566 = vector.broadcast %cst_231 : f32 to vector<8x128xf32>
    %567 = arith.mulf %566, %565 : vector<8x128xf32>
    %568 = vector.extract_strided_slice %559 {offsets = [0, 128], sizes = [8, 128], strides = [1, 1]} : vector<8x512xf32> to vector<8x128xf32>
    %cst_232 = arith.constant 5.000000e-01 : f32
    %569 = vector.broadcast %cst_232 : f32 to vector<8x128xf32>
    %570 = arith.mulf %569, %568 : vector<8x128xf32>
    %571 = math.tanh %570 : vector<8x128xf32>
    %cst_233 = arith.constant 1.000000e+00 : f32
    %572 = vector.broadcast %cst_233 : f32 to vector<8x128xf32>
    %573 = arith.addf %571, %572 : vector<8x128xf32>
    %cst_234 = arith.constant 5.000000e-01 : f32
    %574 = vector.broadcast %cst_234 : f32 to vector<8x128xf32>
    %575 = arith.mulf %574, %573 : vector<8x128xf32>
    %576 = vector.extract_strided_slice %559 {offsets = [0, 256], sizes = [8, 128], strides = [1, 1]} : vector<8x512xf32> to vector<8x128xf32>
    %577 = math.tanh %576 : vector<8x128xf32>
    %578 = vector.extract_strided_slice %559 {offsets = [0, 384], sizes = [8, 128], strides = [1, 1]} : vector<8x512xf32> to vector<8x128xf32>
    %cst_235 = arith.constant 5.000000e-01 : f32
    %579 = vector.broadcast %cst_235 : f32 to vector<8x128xf32>
    %580 = arith.mulf %579, %578 : vector<8x128xf32>
    %581 = math.tanh %580 : vector<8x128xf32>
    %cst_236 = arith.constant 1.000000e+00 : f32
    %582 = vector.broadcast %cst_236 : f32 to vector<8x128xf32>
    %583 = arith.addf %581, %582 : vector<8x128xf32>
    %cst_237 = arith.constant 5.000000e-01 : f32
    %584 = vector.broadcast %cst_237 : f32 to vector<8x128xf32>
    %585 = arith.mulf %584, %583 : vector<8x128xf32>
    %586 = arith.mulf %575, %549 : vector<8x128xf32>
    %587 = arith.mulf %567, %577 : vector<8x128xf32>
    %588 = arith.addf %586, %587 : vector<8x128xf32>
    %589 = math.tanh %588 : vector<8x128xf32>
    %590 = arith.mulf %585, %589 : vector<8x128xf32>
    %c0_238 = arith.constant 0 : index
    %c0_239 = arith.constant 0 : index
    %591 = vector.load %arg4[%c0_238, %c0_239] : memref<128x512xbf16, #tpu.memory_space<vmem>>, vector<128x512xbf16>
    %592 = arith.truncf %306 : vector<8x128xf32> to vector<8x128xbf16>
    %cst_240 = arith.constant dense<0.000000e+00> : vector<8x512xf32>
    %593 = tpu.matmul %592, %591, %cst_240 {dimension_numbers = #tpu.dot_dimension_numbers<[1], [0], [0], [1], [0, 0, 1, 1], [], []>} : vector<8x128xbf16>, vector<128x512xbf16>, vector<8x512xf32> -> vector<8x512xf32>
    %594 = arith.addf %593, %315 : vector<8x512xf32>
    %c0_241 = arith.constant 0 : index
    %c0_242 = arith.constant 0 : index
    %595 = vector.load %arg5[%c0_241, %c0_242] : memref<128x512xbf16, #tpu.memory_space<vmem>>, vector<128x512xbf16>
    %596 = arith.truncf %590 : vector<8x128xf32> to vector<8x128xbf16>
    %cst_243 = arith.constant dense<0.000000e+00> : vector<8x512xf32>
    %597 = tpu.matmul %596, %595, %cst_243 {dimension_numbers = #tpu.dot_dimension_numbers<[1], [0], [0], [1], [0, 0, 1, 1], [], []>} : vector<8x128xbf16>, vector<128x512xbf16>, vector<8x512xf32> -> vector<8x512xf32>
    %598 = arith.addf %594, %597 : vector<8x512xf32>
    %599 = vector.extract_strided_slice %598 {offsets = [0, 0], sizes = [8, 128], strides = [1, 1]} : vector<8x512xf32> to vector<8x128xf32>
    %cst_244 = arith.constant 5.000000e-01 : f32
    %600 = vector.broadcast %cst_244 : f32 to vector<8x128xf32>
    %601 = arith.mulf %600, %599 : vector<8x128xf32>
    %602 = math.tanh %601 : vector<8x128xf32>
    %cst_245 = arith.constant 1.000000e+00 : f32
    %603 = vector.broadcast %cst_245 : f32 to vector<8x128xf32>
    %604 = arith.addf %602, %603 : vector<8x128xf32>
    %cst_246 = arith.constant 5.000000e-01 : f32
    %605 = vector.broadcast %cst_246 : f32 to vector<8x128xf32>
    %606 = arith.mulf %605, %604 : vector<8x128xf32>
    %607 = vector.extract_strided_slice %598 {offsets = [0, 128], sizes = [8, 128], strides = [1, 1]} : vector<8x512xf32> to vector<8x128xf32>
    %cst_247 = arith.constant 5.000000e-01 : f32
    %608 = vector.broadcast %cst_247 : f32 to vector<8x128xf32>
    %609 = arith.mulf %608, %607 : vector<8x128xf32>
    %610 = math.tanh %609 : vector<8x128xf32>
    %cst_248 = arith.constant 1.000000e+00 : f32
    %611 = vector.broadcast %cst_248 : f32 to vector<8x128xf32>
    %612 = arith.addf %610, %611 : vector<8x128xf32>
    %cst_249 = arith.constant 5.000000e-01 : f32
    %613 = vector.broadcast %cst_249 : f32 to vector<8x128xf32>
    %614 = arith.mulf %613, %612 : vector<8x128xf32>
    %615 = vector.extract_strided_slice %598 {offsets = [0, 256], sizes = [8, 128], strides = [1, 1]} : vector<8x512xf32> to vector<8x128xf32>
    %616 = math.tanh %615 : vector<8x128xf32>
    %617 = vector.extract_strided_slice %598 {offsets = [0, 384], sizes = [8, 128], strides = [1, 1]} : vector<8x512xf32> to vector<8x128xf32>
    %cst_250 = arith.constant 5.000000e-01 : f32
    %618 = vector.broadcast %cst_250 : f32 to vector<8x128xf32>
    %619 = arith.mulf %618, %617 : vector<8x128xf32>
    %620 = math.tanh %619 : vector<8x128xf32>
    %cst_251 = arith.constant 1.000000e+00 : f32
    %621 = vector.broadcast %cst_251 : f32 to vector<8x128xf32>
    %622 = arith.addf %620, %621 : vector<8x128xf32>
    %cst_252 = arith.constant 5.000000e-01 : f32
    %623 = vector.broadcast %cst_252 : f32 to vector<8x128xf32>
    %624 = arith.mulf %623, %622 : vector<8x128xf32>
    %625 = arith.mulf %614, %588 : vector<8x128xf32>
    %626 = arith.mulf %606, %616 : vector<8x128xf32>
    %627 = arith.addf %625, %626 : vector<8x128xf32>
    %628 = math.tanh %627 : vector<8x128xf32>
    %629 = arith.mulf %624, %628 : vector<8x128xf32>
    %c1_253 = arith.constant 1 : index
    %c0_254 = arith.constant 0 : index
    %c0_255 = arith.constant 0 : index
    %630 = vector.load %arg8[%c1_253, %c0_254, %c0_255] : memref<2x8x128xf32, #tpu.memory_space<vmem>>, vector<1x8x128xf32>
    %631 = vector.shape_cast %630 : vector<1x8x128xf32> to vector<8x128xf32>
    %632 = vector.shape_cast %629 : vector<8x128xf32> to vector<1x8x128xf32>
    tpu.vector_store %arg8[%c1_253, %c0_254, %c0_255], %632 {strides = array<i32>} : memref<2x8x128xf32, #tpu.memory_space<vmem>>, vector<1x8x128xf32>,
    %c1_256 = arith.constant 1 : index
    %c0_257 = arith.constant 0 : index
    %c0_258 = arith.constant 0 : index
    %633 = vector.load %arg9[%c1_256, %c0_257, %c0_258] : memref<2x8x128xf32, #tpu.memory_space<vmem>>, vector<1x8x128xf32>
    %634 = vector.shape_cast %633 : vector<1x8x128xf32> to vector<8x128xf32>
    %635 = vector.shape_cast %627 : vector<8x128xf32> to vector<1x8x128xf32>
    tpu.vector_store %arg9[%c1_256, %c0_257, %c0_258], %635 {strides = array<i32>} : memref<2x8x128xf32, #tpu.memory_space<vmem>>, vector<1x8x128xf32>,
    %c0_259 = arith.constant 0 : index
    %c0_260 = arith.constant 0 : index
    %c0_261 = arith.constant 0 : index
    %636 = vector.load %arg7[%c0_259, %c0_260, %c0_261] : memref<8x8x128xf32, #tpu.memory_space<vmem>>, vector<1x8x128xf32>
    %637 = vector.shape_cast %636 : vector<1x8x128xf32> to vector<8x128xf32>
    %638 = vector.shape_cast %356 : vector<8x128xf32> to vector<1x8x128xf32>
    tpu.vector_store %arg7[%c0_259, %c0_260, %c0_261], %638 {strides = array<i32>} : memref<8x8x128xf32, #tpu.memory_space<vmem>>, vector<1x8x128xf32>,
    %c1_262 = arith.constant 1 : index
    %c0_263 = arith.constant 0 : index
    %c0_264 = arith.constant 0 : index
    %639 = vector.load %arg7[%c1_262, %c0_263, %c0_264] : memref<8x8x128xf32, #tpu.memory_space<vmem>>, vector<1x8x128xf32>
    %640 = vector.shape_cast %639 : vector<1x8x128xf32> to vector<8x128xf32>
    %641 = vector.shape_cast %395 : vector<8x128xf32> to vector<1x8x128xf32>
    tpu.vector_store %arg7[%c1_262, %c0_263, %c0_264], %641 {strides = array<i32>} : memref<8x8x128xf32, #tpu.memory_space<vmem>>, vector<1x8x128xf32>,
    %c2_265 = arith.constant 2 : index
    %c0_266 = arith.constant 0 : index
    %c0_267 = arith.constant 0 : index
    %642 = vector.load %arg7[%c2_265, %c0_266, %c0_267] : memref<8x8x128xf32, #tpu.memory_space<vmem>>, vector<1x8x128xf32>
    %643 = vector.shape_cast %642 : vector<1x8x128xf32> to vector<8x128xf32>
    %644 = vector.shape_cast %434 : vector<8x128xf32> to vector<1x8x128xf32>
    tpu.vector_store %arg7[%c2_265, %c0_266, %c0_267], %644 {strides = array<i32>} : memref<8x8x128xf32, #tpu.memory_space<vmem>>, vector<1x8x128xf32>,
    %c3_268 = arith.constant 3 : index
    %c0_269 = arith.constant 0 : index
    %c0_270 = arith.constant 0 : index
    %645 = vector.load %arg7[%c3_268, %c0_269, %c0_270] : memref<8x8x128xf32, #tpu.memory_space<vmem>>, vector<1x8x128xf32>
    %646 = vector.shape_cast %645 : vector<1x8x128xf32> to vector<8x128xf32>
    %647 = vector.shape_cast %473 : vector<8x128xf32> to vector<1x8x128xf32>
    tpu.vector_store %arg7[%c3_268, %c0_269, %c0_270], %647 {strides = array<i32>} : memref<8x8x128xf32, #tpu.memory_space<vmem>>, vector<1x8x128xf32>,
    %c4_271 = arith.constant 4 : index
    %c0_272 = arith.constant 0 : index
    %c0_273 = arith.constant 0 : index
    %648 = vector.load %arg7[%c4_271, %c0_272, %c0_273] : memref<8x8x128xf32, #tpu.memory_space<vmem>>, vector<1x8x128xf32>
    %649 = vector.shape_cast %648 : vector<1x8x128xf32> to vector<8x128xf32>
    %650 = vector.shape_cast %512 : vector<8x128xf32> to vector<1x8x128xf32>
    tpu.vector_store %arg7[%c4_271, %c0_272, %c0_273], %650 {strides = array<i32>} : memref<8x8x128xf32, #tpu.memory_space<vmem>>, vector<1x8x128xf32>,
    %c5_274 = arith.constant 5 : index
    %c0_275 = arith.constant 0 : index
    %c0_276 = arith.constant 0 : index
    %651 = vector.load %arg7[%c5_274, %c0_275, %c0_276] : memref<8x8x128xf32, #tpu.memory_space<vmem>>, vector<1x8x128xf32>
    %652 = vector.shape_cast %651 : vector<1x8x128xf32> to vector<8x128xf32>
    %653 = vector.shape_cast %551 : vector<8x128xf32> to vector<1x8x128xf32>
    tpu.vector_store %arg7[%c5_274, %c0_275, %c0_276], %653 {strides = array<i32>} : memref<8x8x128xf32, #tpu.memory_space<vmem>>, vector<1x8x128xf32>,
    %c6_277 = arith.constant 6 : index
    %c0_278 = arith.constant 0 : index
    %c0_279 = arith.constant 0 : index
    %654 = vector.load %arg7[%c6_277, %c0_278, %c0_279] : memref<8x8x128xf32, #tpu.memory_space<vmem>>, vector<1x8x128xf32>
    %655 = vector.shape_cast %654 : vector<1x8x128xf32> to vector<8x128xf32>
    %656 = vector.shape_cast %590 : vector<8x128xf32> to vector<1x8x128xf32>
    tpu.vector_store %arg7[%c6_277, %c0_278, %c0_279], %656 {strides = array<i32>} : memref<8x8x128xf32, #tpu.memory_space<vmem>>, vector<1x8x128xf32>,
    %c7_280 = arith.constant 7 : index
    %c0_281 = arith.constant 0 : index
    %c0_282 = arith.constant 0 : index
    %657 = vector.load %arg7[%c7_280, %c0_281, %c0_282] : memref<8x8x128xf32, #tpu.memory_space<vmem>>, vector<1x8x128xf32>
    %658 = vector.shape_cast %657 : vector<1x8x128xf32> to vector<8x128xf32>
    %659 = vector.shape_cast %629 : vector<8x128xf32> to vector<1x8x128xf32>
    tpu.vector_store %arg7[%c7_280, %c0_281, %c0_282], %659 {strides = array<i32>} : memref<8x8x128xf32, #tpu.memory_space<vmem>>, vector<1x8x128xf32>,
    return
  }
}

</mosaic_0001>

<llo_original>
// kernel: rnn_model_forward.1
$region0: #{rnn_model_forward.1}
  #allocation0 [shape = 'u32[]', space=smem, size = 0x4, offset = 0x4, fixed_abs, tag = 'smem constant byte address 0x4 - core index']
  #allocation1 [shape = 'u32[144,128]{1,0:T(1,128)}', space=vmem, size = 0x12000, scoped, tag = 'internal scratch']
  #allocation2 [shape = 'f32[8,8,512]{2,1,0:T(8,128)}', space=vmem, size = 0x20000, scoped, tag = 'scratch operand']
  %s0 = inlined_call_operand.vmem [shape: f32[64,16], index: 0, kind: input, shape index: {}]
  %s1 = inlined_call_operand.vmem [shape: bf16[16,512], index: 1, kind: input, shape index: {}]
  %s2 = inlined_call_operand.hbm [shape: bf16[128,512], index: 2, kind: input, shape index: {}]
  %s3 = inlined_call_operand.vmem [shape: f32[1,512], index: 3, kind: input, shape index: {}]
  %s4 = inlined_call_operand.hbm [shape: bf16[128,512], index: 4, kind: input, shape index: {}]
  %s5 = inlined_call_operand.hbm [shape: bf16[128,512], index: 5, kind: input, shape index: {}]
  %s6 = inlined_call_operand.vmem [shape: f32[1,512], index: 6, kind: input, shape index: {}]
  %s7 = inlined_call_operand.vmem [shape: f32[8,8,128], index: 7, kind: output, shape index: {0}]
  %s8 = inlined_call_operand.vmem [shape: f32[2,8,128], index: 8, kind: output, shape index: {1}]
  %s9 = inlined_call_operand.vmem [shape: f32[2,8,128], index: 9, kind: output, shape index: {2}]
  %10 = xla_tuple %s7, %s8, %s9
  %s11 = sld [smem:[#allocation0]]
  $region66: #{rnn_model_forward.1} parent=0
    _
  %s13 = ssub.s32 1, %s11
  %s14 = scalar_select 0, %s13, %s11
  $region1: #{rnn_model_forward.1} parent=0
    #allocation3 [shape = 'u8[131072]{0}', space=vmem, size = 0x20000, scoped, tag = 'input window, operand 2, single buffered']
    #allocation4 [shape = 's32[1]{0}', space=sflag, size = 0x4, scoped, tag = 'scoped memory for rnn_model_forward.1']
    #allocation5 [shape = 'u8[131072]{0}', space=vmem, size = 0x20000, scoped, tag = 'input window, operand 4, single buffered']
    #allocation6 [shape = 's32[1]{0}', space=sflag, size = 0x4, scoped, tag = 'scoped memory for rnn_model_forward.1']
    #allocation7 [shape = 'u8[131072]{0}', space=vmem, size = 0x20000, scoped, tag = 'input window, operand 5, single buffered']
    %15 = vsyncpa [#allocation4], 0
    %16 = vsyncpa [#allocation6], 0
    // Predicated region
    $region2: #{rnn_model_forward.1} parent=1 // pred_check
      _
    $region3: #{rnn_model_forward.1} parent=1 // pred_check_branch
      %18 = sbr.rel (0) target = $region5
    $region4: #{rnn_model_forward.1} parent=1 // pred_region
      _
    $region5: #{rnn_model_forward.1} parent=1 // pred_fallthru
      _
    // Predicated region
    $region6: #{rnn_model_forward.1} parent=1 // pred_check
      _
    $region7: #{rnn_model_forward.1} parent=1 // pred_check_branch
      %20 = sbr.rel (0) target = $region9
    $region8: #{rnn_model_forward.1} parent=1 // pred_region
      _
    $region9: #{rnn_model_forward.1} parent=1 // pred_fallthru
      _
    // Predicated region
    $region10: #{rnn_model_forward.1} parent=1 // pred_check
      _
    $region11: #{rnn_model_forward.1} parent=1 // pred_check_branch
      %22 = sbr.rel (0) target = $region13
    $region12: #{rnn_model_forward.1} parent=1 // pred_region
      %s24 = ssub.s32 4096, 4096
      %25 = vsyncadd [#allocation4], %s24
      %s26 = sshll.u32 [#allocation3], 4
      %s27 = int_to_ptr.vmem [resolvable:$true] %s26
      %32 = dma.hbm_to_vmem [thread:$0]  %s2, 4096, %s27, [#allocation4], 256, 256, 16
    $region13: #{rnn_model_forward.1} parent=1 // pred_fallthru
      _
    // Predicated region
    $region14: #{rnn_model_forward.1} parent=1 // pred_check
      _
    $region15: #{rnn_model_forward.1} parent=1 // pred_check_branch
      %34 = sbr.rel (0) target = $region17
    $region16: #{rnn_model_forward.1} parent=1 // pred_region
      _
    $region17: #{rnn_model_forward.1} parent=1 // pred_fallthru
      _
    // Predicated region
    $region18: #{rnn_model_forward.1} parent=1 // pred_check
      _
    $region19: #{rnn_model_forward.1} parent=1 // pred_check_branch
      %36 = sbr.rel (0) target = $region21
    $region20: #{rnn_model_forward.1} parent=1 // pred_region
      %s38 = ssub.s32 4096, 4096
      %39 = vsyncadd [#allocation6], %s38
      %s40 = sshll.u32 [#allocation5], 4
      %s41 = int_to_ptr.vmem [resolvable:$true] %s40
      %46 = dma.hbm_to_vmem [thread:$0]  %s4, 4096, %s41, [#allocation6], 256, 256, 16
    $region21: #{rnn_model_forward.1} parent=1 // pred_fallthru
      _
    // Predicated region
    $region22: #{rnn_model_forward.1} parent=1 // pred_check
      _
    $region23: #{rnn_model_forward.1} parent=1 // pred_check_branch
      %48 = sbr.rel (0) target = $region25
    $region24: #{rnn_model_forward.1} parent=1 // pred_region
      %s50 = ssub.s32 4096, 4096
      %51 = vsyncadd [#allocation6], %s50
      %s52 = sshll.u32 [#allocation7], 4
      %s53 = int_to_ptr.vmem [resolvable:$true] %s52
      %58 = dma.hbm_to_vmem [thread:$0]  %s5, 4096, %s53, [#allocation6], 256, 256, 16
    $region25: #{rnn_model_forward.1} parent=1 // pred_fallthru
      _
    // Predicated region
    $region26: #{rnn_model_forward.1} parent=1 // pred_check
      _
    $region27: #{rnn_model_forward.1} parent=1 // pred_check_branch
      %60 = sbr.rel (0) target = $region29
    $region28: #{rnn_model_forward.1} parent=1 // pred_region
      _
    $region29: #{rnn_model_forward.1} parent=1 // pred_fallthru
      _
    // Predicated region
    $region30: #{rnn_model_forward.1} parent=1 // pred_check
      _
    $region31: #{rnn_model_forward.1} parent=1 // pred_check_branch
      %62 = sbr.rel (0) target = $region33
    $region32: #{rnn_model_forward.1} parent=1 // pred_region
      %63 = dma.done [#allocation4], 4096
    $region33: #{rnn_model_forward.1} parent=1 // pred_fallthru
      _
    // Predicated region
    $region34: #{rnn_model_forward.1} parent=1 // pred_check
      _
    $region35: #{rnn_model_forward.1} parent=1 // pred_check_branch
      %65 = sbr.rel (0) target = $region37
    $region36: #{rnn_model_forward.1} parent=1 // pred_region
      %66 = dma.done [#allocation6], 4096
    $region37: #{rnn_model_forward.1} parent=1 // pred_fallthru
      _
    // Predicated region
    $region38: #{rnn_model_forward.1} parent=1 // pred_check
      _
    $region39: #{rnn_model_forward.1} parent=1 // pred_check_branch
      %68 = sbr.rel (0) target = $region41
    $region40: #{rnn_model_forward.1} parent=1 // pred_region
      %69 = dma.done [#allocation6], 4096
    $region41: #{rnn_model_forward.1} parent=1 // pred_fallthru
      _
    %v71 = vld [vmem:[%s0] sm:$0xff]
    %v72 = vld [vmem:[%s0 + $0x8] sm:$0xff]
    %v73 = vld [vmem:[%s0 + $0x10] sm:$0xff]
    %v74 = vld [vmem:[%s0 + $0x18] sm:$0xff]
    %v75 = vld [vmem:[%s0 + $0x20] sm:$0xff]
    %v76 = vld [vmem:[%s0 + $0x28] sm:$0xff]
    %v77 = vld [vmem:[%s0 + $0x30] sm:$0xff]
    %v78 = vld [vmem:[%s0 + $0x38] sm:$0xff]
    %v79 = vld [vmem:[%s1] sm:$0xff]
    %v80 = vld [vmem:[%s1 + $0x8] sm:$0xff]
    %v81 = vld [vmem:[%s1 + $0x10] sm:$0xff]
    %v82 = vld [vmem:[%s1 + $0x18] sm:$0xff]
    %v83 = vpack.c.bf16 %v72, %v71
    %v84 = vpack.c.bf16 %v74, %v73
    %v85 = vpack.c.bf16 %v76, %v75
    %v86 = vpack.c.bf16 %v78, %v77
    %v87 = vld [vmem:[%s3] sm:$0xf]
    %v89 = vlaneseq
    %v90 = vshrl.u32 %v89, 7
    %v91 = vsub.s32 0, %v90
    %v92 = vrot.slane %v87, %v91
    %v93 = vlaneseq
    %v94 = vshrl.u32 %v93, 7
    %v95 = vsub.s32 1, %v94
    %v96 = vrot.slane %v87, %v95
    %v97 = vlaneseq
    %v98 = vshrl.u32 %v97, 7
    %v99 = vsub.s32 2, %v98
    %v100 = vrot.slane %v87, %v99
    %v101 = vlaneseq
    %v102 = vshrl.u32 %v101, 7
    %v103 = vsub.s32 3, %v102
    %v104 = vrot.slane %v87, %v103
    %v113 = vunpack.c.l.b16 %v79
    %v114 = vunpack.c.h.b16 %v79
    %v115 = vunpack.c.l.b16 %v80
    %v116 = vunpack.c.h.b16 %v80
    %v117 = vunpack.c.l.b16 %v81
    %v118 = vunpack.c.h.b16 %v81
    %v119 = vunpack.c.l.b16 %v82
    %v120 = vunpack.c.h.b16 %v82
    %v121 = vpack.c.b16 %v117, %v113
    %v122 = vpack.c.b16 %v118, %v114
    %v123 = vpack.c.b16 %v119, %v115
    %v124 = vpack.c.b16 %v120, %v116
    %vm129 = vcmask 130048
    %v131 = vsel %vm129, %v83, 0
    %v134 = vsel %vm129, %v84, 0
    %v137 = vsel %vm129, %v85, 0
    %v140 = vsel %vm129, %v86, 0
    %142 = vmatprep.subr.bf16.mxu0 %v122
    %143 = vmatpush1.bf16.msra.mxu0 %v121
    %144 = vmatprep.subr.bf16.mxu0 0
    %145 = vmatpush1.bf16.msra.mxu0 0
    %146 = vmatprep.subr.bf16.mxu0 0
    %147 = vmatpush1.bf16.msra.mxu0 0
    %148 = vmatprep.subr.bf16.mxu0 0
    %149 = vmatpush1.bf16.msra.mxu0 0
    %150 = vmatprep.subr.bf16.mxu0 0
    %151 = vmatpush1.bf16.msra.mxu0 0
    %152 = vmatprep.subr.bf16.mxu0 0
    %153 = vmatpush1.bf16.msra.mxu0 0
    %154 = vmatprep.subr.bf16.mxu0 0
    %155 = vmatpush1.bf16.msra.mxu0 0
    %156 = vmatprep.subr.bf16.mxu0 0
    %157 = vmatpush1.bf16.msra.mxu0 0
    %158 = vmatprep.subr.bf16.mxu0 0
    %159 = vmatpush1.bf16.msra.mxu0 0
    %160 = vmatprep.subr.bf16.mxu0 0
    %161 = vmatpush1.bf16.msra.mxu0 0
    %162 = vmatprep.subr.bf16.mxu0 0
    %163 = vmatpush1.bf16.msra.mxu0 0
    %164 = vmatprep.subr.bf16.mxu0 0
    %165 = vmatpush1.bf16.msra.mxu0 0
    %166 = vmatprep.subr.bf16.mxu0 0
    %167 = vmatpush1.bf16.msra.mxu0 0
    %168 = vmatprep.subr.bf16.mxu0 0
    %169 = vmatpush1.bf16.msra.mxu0 0
    %170 = vmatprep.subr.bf16.mxu0 0
    %171 = vmatpush1.bf16.msra.mxu0 0
    %172 = vmatprep.subr.bf16.mxu0 0
    %173 = vmatpush1.bf16.msra.mxu0 0
    %174 = vmatprep.mubr.bf16.mxu0 0
    %175 = vmatmul.mubr.bf16.gmra.mrb[0].mxu0 %v131
    %v176 = vpop.f32.mrb[0].mxu0
    %v177 = vadd.f32 %v92, %v176
    %v178 = vpop.f32.mrb[0].mxu0
    %v179 = vadd.f32 %v96, %v178
    %v180 = vpop.f32.mrb[0].mxu0
    %v181 = vadd.f32 %v92, %v180
    %v182 = vpop.f32.mrb[0].mxu0
    %v183 = vadd.f32 %v96, %v182
    %184 = vmatprep.mubr.bf16.mxu0 0
    %185 = vmatmul.mubr.bf16.gmra.mrb[0].mxu0 %v134
    %v186 = vpop.f32.mrb[0].mxu0
    %v187 = vadd.f32 %v92, %v186
    %v188 = vpop.f32.mrb[0].mxu0
    %v189 = vadd.f32 %v96, %v188
    %v190 = vpop.f32.mrb[0].mxu0
    %v191 = vadd.f32 %v92, %v190
    %v192 = vpop.f32.mrb[0].mxu0
    %v193 = vadd.f32 %v96, %v192
    %194 = vmatprep.mubr.bf16.mxu0 0
    %195 = vmatmul.mubr.bf16.gmra.mrb[0].mxu0 %v137
    %v196 = vpop.f32.mrb[0].mxu0
    %v197 = vadd.f32 %v92, %v196
    %v198 = vpop.f32.mrb[0].mxu0
    %v199 = vadd.f32 %v96, %v198
    %v200 = vpop.f32.mrb[0].mxu0
    %v201 = vadd.f32 %v92, %v200
    %v202 = vpop.f32.mrb[0].mxu0
    %v203 = vadd.f32 %v96, %v202
    %204 = vmatprep.mubr.bf16.mxu0 0
    %205 = vmatmul.mubr.bf16.gmra.mrb[0].mxu0 %v140
    %v206 = vpop.f32.mrb[0].mxu0
    %v207 = vadd.f32 %v92, %v206
    %v208 = vpop.f32.mrb[0].mxu0
    %v209 = vadd.f32 %v96, %v208
    %v210 = vpop.f32.mrb[0].mxu0
    %v211 = vadd.f32 %v92, %v210
    %v212 = vpop.f32.mrb[0].mxu0
    %v213 = vadd.f32 %v96, %v212
    %214 = vdwg.mxu0
    %215 = vmatprep.subr.bf16.mxu0 %v124
    %216 = vmatpush1.bf16.msra.mxu0 %v123
    %217 = vmatprep.subr.bf16.mxu0 0
    %218 = vmatpush1.bf16.msra.mxu0 0
    %219 = vmatprep.subr.bf16.mxu0 0
    %220 = vmatpush1.bf16.msra.mxu0 0
    %221 = vmatprep.subr.bf16.mxu0 0
    %222 = vmatpush1.bf16.msra.mxu0 0
    %223 = vmatprep.subr.bf16.mxu0 0
    %224 = vmatpush1.bf16.msra.mxu0 0
    %225 = vmatprep.subr.bf16.mxu0 0
    %226 = vmatpush1.bf16.msra.mxu0 0
    %227 = vmatprep.subr.bf16.mxu0 0
    %228 = vmatpush1.bf16.msra.mxu0 0
    %229 = vmatprep.subr.bf16.mxu0 0
    %230 = vmatpush1.bf16.msra.mxu0 0
    %231 = vmatprep.subr.bf16.mxu0 0
    %232 = vmatpush1.bf16.msra.mxu0 0
    %233 = vmatprep.subr.bf16.mxu0 0
    %234 = vmatpush1.bf16.msra.mxu0 0
    %235 = vmatprep.subr.bf16.mxu0 0
    %236 = vmatpush1.bf16.msra.mxu0 0
    %237 = vmatprep.subr.bf16.mxu0 0
    %238 = vmatpush1.bf16.msra.mxu0 0
    %239 = vmatprep.subr.bf16.mxu0 0
    %240 = vmatpush1.bf16.msra.mxu0 0
    %241 = vmatprep.subr.bf16.mxu0 0
    %242 = vmatpush1.bf16.msra.mxu0 0
    %243 = vmatprep.subr.bf16.mxu0 0
    %244 = vmatpush1.bf16.msra.mxu0 0
    %245 = vmatprep.subr.bf16.mxu0 0
    %246 = vmatpush1.bf16.msra.mxu0 0
    %247 = vmatprep.mubr.bf16.mxu0 0
    %248 = vmatmul.mubr.bf16.gmra.mrb[0].mxu0 %v131
    %v249 = vpop.f32.mrb[0].mxu0
    %v250 = vadd.f32 %v100, %v249
    %v251 = vpop.f32.mrb[0].mxu0
    %v252 = vadd.f32 %v104, %v251
    %v253 = vpop.f32.mrb[0].mxu0
    %v254 = vadd.f32 %v100, %v253
    %v255 = vpop.f32.mrb[0].mxu0
    %v256 = vadd.f32 %v104, %v255
    %257 = vmatprep.mubr.bf16.mxu0 0
    %258 = vmatmul.mubr.bf16.gmra.mrb[0].mxu0 %v134
    %v259 = vpop.f32.mrb[0].mxu0
    %v260 = vadd.f32 %v100, %v259
    %v261 = vpop.f32.mrb[0].mxu0
    %v262 = vadd.f32 %v104, %v261
    %v263 = vpop.f32.mrb[0].mxu0
    %v264 = vadd.f32 %v100, %v263
    %v265 = vpop.f32.mrb[0].mxu0
    %v266 = vadd.f32 %v104, %v265
    %267 = vmatprep.mubr.bf16.mxu0 0
    %268 = vmatmul.mubr.bf16.gmra.mrb[0].mxu0 %v137
    %v269 = vpop.f32.mrb[0].mxu0
    %v270 = vadd.f32 %v100, %v269
    %v271 = vpop.f32.mrb[0].mxu0
    %v272 = vadd.f32 %v104, %v271
    %v273 = vpop.f32.mrb[0].mxu0
    %v274 = vadd.f32 %v100, %v273
    %v275 = vpop.f32.mrb[0].mxu0
    %v276 = vadd.f32 %v104, %v275
    %277 = vmatprep.mubr.bf16.mxu0 0
    %278 = vmatmul.mubr.bf16.gmra.mrb[0].mxu0 %v140
    %v279 = vpop.f32.mrb[0].mxu0
    %v280 = vadd.f32 %v100, %v279
    %v281 = vpop.f32.mrb[0].mxu0
    %v282 = vadd.f32 %v104, %v281
    %v283 = vpop.f32.mrb[0].mxu0
    %v284 = vadd.f32 %v100, %v283
    %v285 = vpop.f32.mrb[0].mxu0
    %v286 = vadd.f32 %v104, %v285
    %287 = vdwg.mxu0
    %288 = vst [vmem:[#allocation2] sm:$0xff] %v177
    %289 = vst [vmem:[#allocation2 + $0x8] sm:$0xff] %v179
    %290 = vst [vmem:[#allocation2 + $0x10] sm:$0xff] %v250
    %291 = vst [vmem:[#allocation2 + $0x18] sm:$0xff] %v252
    %292 = vst [vmem:[#allocation2 + $0x20] sm:$0xff] %v181
    %293 = vst [vmem:[#allocation2 + $0x28] sm:$0xff] %v183
    %294 = vst [vmem:[#allocation2 + $0x30] sm:$0xff] %v254
    %295 = vst [vmem:[#allocation2 + $0x38] sm:$0xff] %v256
    %296 = vst [vmem:[#allocation2 + $0x40] sm:$0xff] %v187
    %297 = vst [vmem:[#allocation2 + $0x48] sm:$0xff] %v189
    %298 = vst [vmem:[#allocation2 + $0x50] sm:$0xff] %v260
    %299 = vst [vmem:[#allocation2 + $0x58] sm:$0xff] %v262
    %300 = vst [vmem:[#allocation2 + $0x60] sm:$0xff] %v191
    %301 = vst [vmem:[#allocation2 + $0x68] sm:$0xff] %v193
    %302 = vst [vmem:[#allocation2 + $0x70] sm:$0xff] %v264
    %303 = vst [vmem:[#allocation2 + $0x78] sm:$0xff] %v266
    %304 = vst [vmem:[#allocation2 + $0x80] sm:$0xff] %v197
    %305 = vst [vmem:[#allocation2 + $0x88] sm:$0xff] %v199
    %306 = vst [vmem:[#allocation2 + $0x90] sm:$0xff] %v270
    %307 = vst [vmem:[#allocation2 + $0x98] sm:$0xff] %v272
    %308 = vst [vmem:[#allocation2 + $0xa0] sm:$0xff] %v201
    %309 = vst [vmem:[#allocation2 + $0xa8] sm:$0xff] %v203
    %310 = vst [vmem:[#allocation2 + $0xb0] sm:$0xff] %v274
    %311 = vst [vmem:[#allocation2 + $0xb8] sm:$0xff] %v276
    %312 = vst [vmem:[#allocation2 + $0xc0] sm:$0xff] %v207
    %313 = vst [vmem:[#allocation2 + $0xc8] sm:$0xff] %v209
    %314 = vst [vmem:[#allocation2 + $0xd0] sm:$0xff] %v280
    %315 = vst [vmem:[#allocation2 + $0xd8] sm:$0xff] %v282
    %316 = vst [vmem:[#allocation2 + $0xe0] sm:$0xff] %v211
    %317 = vst [vmem:[#allocation2 + $0xe8] sm:$0xff] %v213
    %318 = vst [vmem:[#allocation2 + $0xf0] sm:$0xff] %v284
    %319 = vst [vmem:[#allocation2 + $0xf8] sm:$0xff] %v286
    %v320 = vld [vmem:[#allocation2] sm:$0xff]
    %v321 = vld [vmem:[#allocation2 + $0x8] sm:$0xff]
    %v322 = vld [vmem:[#allocation2 + $0x10] sm:$0xff]
    %v323 = vld [vmem:[#allocation2 + $0x18] sm:$0xff]
    %v324 = vld [vmem:[#allocation3] sm:$0xff]
    %v325 = vld [vmem:[#allocation3 + $0x8] sm:$0xff]
    %v326 = vld [vmem:[#allocation3 + $0x10] sm:$0xff]
    %v327 = vld [vmem:[#allocation3 + $0x18] sm:$0xff]
    %v328 = vld [vmem:[#allocation3 + $0x20] sm:$0xff]
    %v329 = vld [vmem:[#allocation3 + $0x28] sm:$0xff]
    %v330 = vld [vmem:[#allocation3 + $0x30] sm:$0xff]
    %v331 = vld [vmem:[#allocation3 + $0x38] sm:$0xff]
    %v332 = vld [vmem:[#allocation3 + $0x40] sm:$0xff]
    %v333 = vld [vmem:[#allocation3 + $0x48] sm:$0xff]
    %v334 = vld [vmem:[#allocation3 + $0x50] sm:$0xff]
    %v335 = vld [vmem:[#allocation3 + $0x58] sm:$0xff]
    %v336 = vld [vmem:[#allocation3 + $0x60] sm:$0xff]
    %v337 = vld [vmem:[#allocation3 + $0x68] sm:$0xff]
    %v338 = vld [vmem:[#allocation3 + $0x70] sm:$0xff]
    %v339 = vld [vmem:[#allocation3 + $0x78] sm:$0xff]
    %v340 = vld [vmem:[#allocation3 + $0x80] sm:$0xff]
    %v341 = vld [vmem:[#allocation3 + $0x88] sm:$0xff]
    %v342 = vld [vmem:[#allocation3 + $0x90] sm:$0xff]
    %v343 = vld [vmem:[#allocation3 + $0x98] sm:$0xff]
    %v344 = vld [vmem:[#allocation3 + $0xa0] sm:$0xff]
    %v345 = vld [vmem:[#allocation3 + $0xa8] sm:$0xff]
    %v346 = vld [vmem:[#allocation3 + $0xb0] sm:$0xff]
    %v347 = vld [vmem:[#allocation3 + $0xb8] sm:$0xff]
    %v348 = vld [vmem:[#allocation3 + $0xc0] sm:$0xff]
    %v349 = vld [vmem:[#allocation3 + $0xc8] sm:$0xff]
    %v350 = vld [vmem:[#allocation3 + $0xd0] sm:$0xff]
    %v351 = vld [vmem:[#allocation3 + $0xd8] sm:$0xff]
    %v352 = vld [vmem:[#allocation3 + $0xe0] sm:$0xff]
    %v353 = vld [vmem:[#allocation3 + $0xe8] sm:$0xff]
    %v354 = vld [vmem:[#allocation3 + $0xf0] sm:$0xff]
    %v355 = vld [vmem:[#allocation3 + $0xf8] sm:$0xff]
    %v388 = vunpack.c.l.b16 %v324
    %v389 = vunpack.c.h.b16 %v324
    %v390 = vunpack.c.l.b16 %v325
    %v391 = vunpack.c.h.b16 %v325
    %v392 = vunpack.c.l.b16 %v326
    %v393 = vunpack.c.h.b16 %v326
    %v394 = vunpack.c.l.b16 %v327
    %v395 = vunpack.c.h.b16 %v327
    %v396 = vunpack.c.l.b16 %v328
    %v397 = vunpack.c.h.b16 %v328
    %v398 = vunpack.c.l.b16 %v329
    %v399 = vunpack.c.h.b16 %v329
    %v400 = vunpack.c.l.b16 %v330
    %v401 = vunpack.c.h.b16 %v330
    %v402 = vunpack.c.l.b16 %v331
    %v403 = vunpack.c.h.b16 %v331
    %v404 = vunpack.c.l.b16 %v332
    %v405 = vunpack.c.h.b16 %v332
    %v406 = vunpack.c.l.b16 %v333
    %v407 = vunpack.c.h.b16 %v333
    %v408 = vunpack.c.l.b16 %v334
    %v409 = vunpack.c.h.b16 %v334
    %v410 = vunpack.c.l.b16 %v335
    %v411 = vunpack.c.h.b16 %v335
    %v412 = vunpack.c.l.b16 %v336
    %v413 = vunpack.c.h.b16 %v336
    %v414 = vunpack.c.l.b16 %v337
    %v415 = vunpack.c.h.b16 %v337
    %v416 = vunpack.c.l.b16 %v338
    %v417 = vunpack.c.h.b16 %v338
    %v418 = vunpack.c.l.b16 %v339
    %v419 = vunpack.c.h.b16 %v339
    %v420 = vunpack.c.l.b16 %v340
    %v421 = vunpack.c.h.b16 %v340
    %v422 = vunpack.c.l.b16 %v341
    %v423 = vunpack.c.h.b16 %v341
    %v424 = vunpack.c.l.b16 %v342
    %v425 = vunpack.c.h.b16 %v342
    %v426 = vunpack.c.l.b16 %v343
    %v427 = vunpack.c.h.b16 %v343
    %v428 = vunpack.c.l.b16 %v344
    %v429 = vunpack.c.h.b16 %v344
    %v430 = vunpack.c.l.b16 %v345
    %v431 = vunpack.c.h.b16 %v345
    %v432 = vunpack.c.l.b16 %v346
    %v433 = vunpack.c.h.b16 %v346
    %v434 = vunpack.c.l.b16 %v347
    %v435 = vunpack.c.h.b16 %v347
    %v436 = vunpack.c.l.b16 %v348
    %v437 = vunpack.c.h.b16 %v348
    %v438 = vunpack.c.l.b16 %v349
    %v439 = vunpack.c.h.b16 %v349
    %v440 = vunpack.c.l.b16 %v350
    %v441 = vunpack.c.h.b16 %v350
    %v442 = vunpack.c.l.b16 %v351
    %v443 = vunpack.c.h.b16 %v351
    %v444 = vunpack.c.l.b16 %v352
    %v445 = vunpack.c.h.b16 %v352
    %v446 = vunpack.c.l.b16 %v353
    %v447 = vunpack.c.h.b16 %v353
    %v448 = vunpack.c.l.b16 %v354
    %v449 = vunpack.c.h.b16 %v354
    %v450 = vunpack.c.l.b16 %v355
    %v451 = vunpack.c.h.b16 %v355
    %v452 = vpack.c.b16 %v392, %v388
    %v453 = vpack.c.b16 %v393, %v389
    %v454 = vpack.c.b16 %v394, %v390
    %v455 = vpack.c.b16 %v395, %v391
    %v456 = vpack.c.b16 %v400, %v396
    %v457 = vpack.c.b16 %v401, %v397
    %v458 = vpack.c.b16 %v402, %v398
    %v459 = vpack.c.b16 %v403, %v399
    %v460 = vpack.c.b16 %v408, %v404
    %v461 = vpack.c.b16 %v409, %v405
    %v462 = vpack.c.b16 %v410, %v406
    %v463 = vpack.c.b16 %v411, %v407
    %v464 = vpack.c.b16 %v416, %v412
    %v465 = vpack.c.b16 %v417, %v413
    %v466 = vpack.c.b16 %v418, %v414
    %v467 = vpack.c.b16 %v419, %v415
    %v468 = vpack.c.b16 %v424, %v420
    %v469 = vpack.c.b16 %v425, %v421
    %v470 = vpack.c.b16 %v426, %v422
    %v471 = vpack.c.b16 %v427, %v423
    %v472 = vpack.c.b16 %v432, %v428
    %v473 = vpack.c.b16 %v433, %v429
    %v474 = vpack.c.b16 %v434, %v430
    %v475 = vpack.c.b16 %v435, %v431
    %v476 = vpack.c.b16 %v440, %v436
    %v477 = vpack.c.b16 %v441, %v437
    %v478 = vpack.c.b16 %v442, %v438
    %v479 = vpack.c.b16 %v443, %v439
    %v480 = vpack.c.b16 %v448, %v444
    %v481 = vpack.c.b16 %v449, %v445
    %v482 = vpack.c.b16 %v450, %v446
    %v483 = vpack.c.b16 %v451, %v447
    %516 = vmatprep.subr.bf16.mxu0 %v453
    %517 = vmatpush1.bf16.msra.mxu0 %v452
    %518 = vmatprep.subr.bf16.mxu0 %v457
    %519 = vmatpush1.bf16.msra.mxu0 %v456
    %520 = vmatprep.subr.bf16.mxu0 %v461
    %521 = vmatpush1.bf16.msra.mxu0 %v460
    %522 = vmatprep.subr.bf16.mxu0 %v465
    %523 = vmatpush1.bf16.msra.mxu0 %v464
    %524 = vmatprep.subr.bf16.mxu0 %v469
    %525 = vmatpush1.bf16.msra.mxu0 %v468
    %526 = vmatprep.subr.bf16.mxu0 %v473
    %527 = vmatpush1.bf16.msra.mxu0 %v472
    %528 = vmatprep.subr.bf16.mxu0 %v477
    %529 = vmatpush1.bf16.msra.mxu0 %v476
    %530 = vmatprep.subr.bf16.mxu0 %v481
    %531 = vmatpush1.bf16.msra.mxu0 %v480
    %532 = vmatprep.subr.bf16.mxu0 0
    %533 = vmatpush1.bf16.msra.mxu0 0
    %534 = vmatprep.subr.bf16.mxu0 0
    %535 = vmatpush1.bf16.msra.mxu0 0
    %536 = vmatprep.subr.bf16.mxu0 0
    %537 = vmatpush1.bf16.msra.mxu0 0
    %538 = vmatprep.subr.bf16.mxu0 0
    %539 = vmatpush1.bf16.msra.mxu0 0
    %540 = vmatprep.subr.bf16.mxu0 0
    %541 = vmatpush1.bf16.msra.mxu0 0
    %542 = vmatprep.subr.bf16.mxu0 0
    %543 = vmatpush1.bf16.msra.mxu0 0
    %544 = vmatprep.subr.bf16.mxu0 0
    %545 = vmatpush1.bf16.msra.mxu0 0
    %546 = vmatprep.subr.bf16.mxu0 0
    %547 = vmatpush1.bf16.msra.mxu0 0
    %548 = vmatprep.mubr.bf16.mxu0 0
    %549 = vmatmul.mubr.bf16.gmra.mrb[0].mxu0 0
    %v550 = vpop.f32.mrb[0].mxu0
    %v551 = vadd.f32 0.0, %v550
    %v552 = vpop.f32.mrb[0].mxu0
    %v553 = vadd.f32 0.0, %v552
    %v554 = vpop.f32.mrb[0].mxu0
    %v555 = vpop.f32.mrb[0].mxu0
    %556 = vdwg.mxu0
    %557 = vmatprep.subr.bf16.mxu0 %v455
    %558 = vmatpush1.bf16.msra.mxu0 %v454
    %559 = vmatprep.subr.bf16.mxu0 %v459
    %560 = vmatpush1.bf16.msra.mxu0 %v458
    %561 = vmatprep.subr.bf16.mxu0 %v463
    %562 = vmatpush1.bf16.msra.mxu0 %v462
    %563 = vmatprep.subr.bf16.mxu0 %v467
    %564 = vmatpush1.bf16.msra.mxu0 %v466
    %565 = vmatprep.subr.bf16.mxu0 %v471
    %566 = vmatpush1.bf16.msra.mxu0 %v470
    %567 = vmatprep.subr.bf16.mxu0 %v475
    %568 = vmatpush1.bf16.msra.mxu0 %v474
    %569 = vmatprep.subr.bf16.mxu0 %v479
    %570 = vmatpush1.bf16.msra.mxu0 %v478
    %571 = vmatprep.subr.bf16.mxu0 %v483
    %572 = vmatpush1.bf16.msra.mxu0 %v482
    %573 = vmatprep.subr.bf16.mxu0 0
    %574 = vmatpush1.bf16.msra.mxu0 0
    %575 = vmatprep.subr.bf16.mxu0 0
    %576 = vmatpush1.bf16.msra.mxu0 0
    %577 = vmatprep.subr.bf16.mxu0 0
    %578 = vmatpush1.bf16.msra.mxu0 0
    %579 = vmatprep.subr.bf16.mxu0 0
    %580 = vmatpush1.bf16.msra.mxu0 0
    %581 = vmatprep.subr.bf16.mxu0 0
    %582 = vmatpush1.bf16.msra.mxu0 0
    %583 = vmatprep.subr.bf16.mxu0 0
    %584 = vmatpush1.bf16.msra.mxu0 0
    %585 = vmatprep.subr.bf16.mxu0 0
    %586 = vmatpush1.bf16.msra.mxu0 0
    %587 = vmatprep.subr.bf16.mxu0 0
    %588 = vmatpush1.bf16.msra.mxu0 0
    %589 = vmatprep.mubr.bf16.mxu0 0
    %590 = vmatmul.mubr.bf16.gmra.mrb[0].mxu0 0
    %v591 = vpop.f32.mrb[0].mxu0
    %v592 = vadd.f32 0.0, %v591
    %v593 = vpop.f32.mrb[0].mxu0
    %v594 = vadd.f32 0.0, %v593
    %v595 = vpop.f32.mrb[0].mxu0
    %v596 = vpop.f32.mrb[0].mxu0
    %597 = vdwg.mxu0
    %v598 = vadd.f32 %v320, %v551
    %v599 = vadd.f32 %v321, %v553
    %v600 = vadd.f32 %v322, %v592
    %v601 = vadd.f32 %v323, %v594
    %v602 = vmul.f32 %v598, 0.5
    %v603 = vtanh.pop %v602
    %v604 = vadd.f32 %v603, 1.0
    %v605 = vmul.f32 %v604, 0.5
    %v606 = vmul.f32 %v599, 0.5
    %v607 = vtanh.pop %v606
    %v608 = vadd.f32 %v607, 1.0
    %v609 = vmul.f32 %v608, 0.5
    %v610 = vtanh.pop %v600
    %v611 = vmul.f32 %v601, 0.5
    %v612 = vtanh.pop %v611
    %v613 = vadd.f32 %v612, 1.0
    %v614 = vmul.f32 %v613, 0.5
    %v615 = vmul.f32 %v609, 0.0
    %v616 = vmul.f32 %v605, %v610
    %v617 = vadd.f32 %v615, %v616
    %v618 = vtanh.pop %v617
    %v619 = vmul.f32 %v614, %v618
    %s620 = scalar_lea.vmem [#allocation2], 32
    %v621 = vld [vmem:[%s620] sm:$0xff]
    %v622 = vld [vmem:[%s620 + $0x8] sm:$0xff]
    %v623 = vld [vmem:[%s620 + $0x10] sm:$0xff]
    %v624 = vld [vmem:[%s620 + $0x18] sm:$0xff]
    %v625 = vpack.c.bf16 %v619, %v619
    %626 = vmatprep.subr.bf16.mxu0 %v453
    %627 = vmatpush1.bf16.msra.mxu0 %v452
    %628 = vmatprep.subr.bf16.mxu0 %v457
    %629 = vmatpush1.bf16.msra.mxu0 %v456
    %630 = vmatprep.subr.bf16.mxu0 %v461
    %631 = vmatpush1.bf16.msra.mxu0 %v460
    %632 = vmatprep.subr.bf16.mxu0 %v465
    %633 = vmatpush1.bf16.msra.mxu0 %v464
    %634 = vmatprep.subr.bf16.mxu0 %v469
    %635 = vmatpush1.bf16.msra.mxu0 %v468
    %636 = vmatprep.subr.bf16.mxu0 %v473
    %637 = vmatpush1.bf16.msra.mxu0 %v472
    %638 = vmatprep.subr.bf16.mxu0 %v477
    %639 = vmatpush1.bf16.msra.mxu0 %v476
    %640 = vmatprep.subr.bf16.mxu0 %v481
    %641 = vmatpush1.bf16.msra.mxu0 %v480
    %642 = vmatprep.subr.bf16.mxu0 0
    %643 = vmatpush1.bf16.msra.mxu0 0
    %644 = vmatprep.subr.bf16.mxu0 0
    %645 = vmatpush1.bf16.msra.mxu0 0
    %646 = vmatprep.subr.bf16.mxu0 0
    %647 = vmatpush1.bf16.msra.mxu0 0
    %648 = vmatprep.subr.bf16.mxu0 0
    %649 = vmatpush1.bf16.msra.mxu0 0
    %650 = vmatprep.subr.bf16.mxu0 0
    %651 = vmatpush1.bf16.msra.mxu0 0
    %652 = vmatprep.subr.bf16.mxu0 0
    %653 = vmatpush1.bf16.msra.mxu0 0
    %654 = vmatprep.subr.bf16.mxu0 0
    %655 = vmatpush1.bf16.msra.mxu0 0
    %656 = vmatprep.subr.bf16.mxu0 0
    %657 = vmatpush1.bf16.msra.mxu0 0
    %658 = vmatprep.mubr.bf16.mxu0 0
    %659 = vmatmul.mubr.bf16.gmra.mrb[0].mxu0 %v625
    %v660 = vpop.f32.mrb[0].mxu0
    %v661 = vadd.f32 0.0, %v660
    %v662 = vpop.f32.mrb[0].mxu0
    %v663 = vadd.f32 0.0, %v662
    %v664 = vpop.f32.mrb[0].mxu0
    %v665 = vpop.f32.mrb[0].mxu0
    %666 = vdwg.mxu0
    %667 = vmatprep.subr.bf16.mxu0 %v455
    %668 = vmatpush1.bf16.msra.mxu0 %v454
    %669 = vmatprep.subr.bf16.mxu0 %v459
    %670 = vmatpush1.bf16.msra.mxu0 %v458
    %671 = vmatprep.subr.bf16.mxu0 %v463
    %672 = vmatpush1.bf16.msra.mxu0 %v462
    %673 = vmatprep.subr.bf16.mxu0 %v467
    %674 = vmatpush1.bf16.msra.mxu0 %v466
    %675 = vmatprep.subr.bf16.mxu0 %v471
    %676 = vmatpush1.bf16.msra.mxu0 %v470
    %677 = vmatprep.subr.bf16.mxu0 %v475
    %678 = vmatpush1.bf16.msra.mxu0 %v474
    %679 = vmatprep.subr.bf16.mxu0 %v479
    %680 = vmatpush1.bf16.msra.mxu0 %v478
    %681 = vmatprep.subr.bf16.mxu0 %v483
    %682 = vmatpush1.bf16.msra.mxu0 %v482
    %683 = vmatprep.subr.bf16.mxu0 0
    %684 = vmatpush1.bf16.msra.mxu0 0
    %685 = vmatprep.subr.bf16.mxu0 0
    %686 = vmatpush1.bf16.msra.mxu0 0
    %687 = vmatprep.subr.bf16.mxu0 0
    %688 = vmatpush1.bf16.msra.mxu0 0
    %689 = vmatprep.subr.bf16.mxu0 0
    %690 = vmatpush1.bf16.msra.mxu0 0
    %691 = vmatprep.subr.bf16.mxu0 0
    %692 = vmatpush1.bf16.msra.mxu0 0
    %693 = vmatprep.subr.bf16.mxu0 0
    %694 = vmatpush1.bf16.msra.mxu0 0
    %695 = vmatprep.subr.bf16.mxu0 0
    %696 = vmatpush1.bf16.msra.mxu0 0
    %697 = vmatprep.subr.bf16.mxu0 0
    %698 = vmatpush1.bf16.msra.mxu0 0
    %699 = vmatprep.mubr.bf16.mxu0 0
    %700 = vmatmul.mubr.bf16.gmra.mrb[0].mxu0 %v625
    %v701 = vpop.f32.mrb[0].mxu0
    %v702 = vadd.f32 0.0, %v701
    %v703 = vpop.f32.mrb[0].mxu0
    %v704 = vadd.f32 0.0, %v703
    %v705 = vpop.f32.mrb[0].mxu0
    %v706 = vpop.f32.mrb[0].mxu0
    %707 = vdwg.mxu0
    %v708 = vadd.f32 %v621, %v661
    %v709 = vadd.f32 %v622, %v663
    %v710 = vadd.f32 %v623, %v702
    %v711 = vadd.f32 %v624, %v704
    %v712 = vmul.f32 %v708, 0.5
    %v713 = vtanh.pop %v712
    %v714 = vadd.f32 %v713, 1.0
    %v715 = vmul.f32 %v714, 0.5
    %v716 = vmul.f32 %v709, 0.5
    %v717 = vtanh.pop %v716
    %v718 = vadd.f32 %v717, 1.0
    %v719 = vmul.f32 %v718, 0.5
    %v720 = vtanh.pop %v710
    %v721 = vmul.f32 %v711, 0.5
    %v722 = vtanh.pop %v721
    %v723 = vadd.f32 %v722, 1.0
    %v724 = vmul.f32 %v723, 0.5
    %v725 = vmul.f32 %v719, %v617
    %v726 = vmul.f32 %v715, %v720
    %v727 = vadd.f32 %v725, %v726
    %v728 = vtanh.pop %v727
    %v729 = vmul.f32 %v724, %v728
    %s730 = scalar_lea.vmem [#allocation2], 64
    %v731 = vld [vmem:[%s730] sm:$0xff]
    %v732 = vld [vmem:[%s730 + $0x8] sm:$0xff]
    %v733 = vld [vmem:[%s730 + $0x10] sm:$0xff]
    %v734 = vld [vmem:[%s730 + $0x18] sm:$0xff]
    %v735 = vpack.c.bf16 %v729, %v729
    %736 = vmatprep.subr.bf16.mxu0 %v453
    %737 = vmatpush1.bf16.msra.mxu0 %v452
    %738 = vmatprep.subr.bf16.mxu0 %v457
    %739 = vmatpush1.bf16.msra.mxu0 %v456
    %740 = vmatprep.subr.bf16.mxu0 %v461
    %741 = vmatpush1.bf16.msra.mxu0 %v460
    %742 = vmatprep.subr.bf16.mxu0 %v465
    %743 = vmatpush1.bf16.msra.mxu0 %v464
    %744 = vmatprep.subr.bf16.mxu0 %v469
    %745 = vmatpush1.bf16.msra.mxu0 %v468
    %746 = vmatprep.subr.bf16.mxu0 %v473
    %747 = vmatpush1.bf16.msra.mxu0 %v472
    %748 = vmatprep.subr.bf16.mxu0 %v477
    %749 = vmatpush1.bf16.msra.mxu0 %v476
    %750 = vmatprep.subr.bf16.mxu0 %v481
    %751 = vmatpush1.bf16.msra.mxu0 %v480
    %752 = vmatprep.subr.bf16.mxu0 0
    %753 = vmatpush1.bf16.msra.mxu0 0
    %754 = vmatprep.subr.bf16.mxu0 0
    %755 = vmatpush1.bf16.msra.mxu0 0
    %756 = vmatprep.subr.bf16.mxu0 0
    %757 = vmatpush1.bf16.msra.mxu0 0
    %758 = vmatprep.subr.bf16.mxu0 0
    %759 = vmatpush1.bf16.msra.mxu0 0
    %760 = vmatprep.subr.bf16.mxu0 0
    %761 = vmatpush1.bf16.msra.mxu0 0
    %762 = vmatprep.subr.bf16.mxu0 0
    %763 = vmatpush1.bf16.msra.mxu0 0
    %764 = vmatprep.subr.bf16.mxu0 0
    %765 = vmatpush1.bf16.msra.mxu0 0
    %766 = vmatprep.subr.bf16.mxu0 0
    %767 = vmatpush1.bf16.msra.mxu0 0
    %768 = vmatprep.mubr.bf16.mxu0 0
    %769 = vmatmul.mubr.bf16.gmra.mrb[0].mxu0 %v735
    %v770 = vpop.f32.mrb[0].mxu0
    %v771 = vadd.f32 0.0, %v770
    %v772 = vpop.f32.mrb[0].mxu0
    %v773 = vadd.f32 0.0, %v772
    %v774 = vpop.f32.mrb[0].mxu0
    %v775 = vpop.f32.mrb[0].mxu0
    %776 = vdwg.mxu0
    %777 = vmatprep.subr.bf16.mxu0 %v455
    %778 = vmatpush1.bf16.msra.mxu0 %v454
    %779 = vmatprep.subr.bf16.mxu0 %v459
    %780 = vmatpush1.bf16.msra.mxu0 %v458
    %781 = vmatprep.subr.bf16.mxu0 %v463
    %782 = vmatpush1.bf16.msra.mxu0 %v462
    %783 = vmatprep.subr.bf16.mxu0 %v467
    %784 = vmatpush1.bf16.msra.mxu0 %v466
    %785 = vmatprep.subr.bf16.mxu0 %v471
    %786 = vmatpush1.bf16.msra.mxu0 %v470
    %787 = vmatprep.subr.bf16.mxu0 %v475
    %788 = vmatpush1.bf16.msra.mxu0 %v474
    %789 = vmatprep.subr.bf16.mxu0 %v479
    %790 = vmatpush1.bf16.msra.mxu0 %v478
    %791 = vmatprep.subr.bf16.mxu0 %v483
    %792 = vmatpush1.bf16.msra.mxu0 %v482
    %793 = vmatprep.subr.bf16.mxu0 0
    %794 = vmatpush1.bf16.msra.mxu0 0
    %795 = vmatprep.subr.bf16.mxu0 0
    %796 = vmatpush1.bf16.msra.mxu0 0
    %797 = vmatprep.subr.bf16.mxu0 0
    %798 = vmatpush1.bf16.msra.mxu0 0
    %799 = vmatprep.subr.bf16.mxu0 0
    %800 = vmatpush1.bf16.msra.mxu0 0
    %801 = vmatprep.subr.bf16.mxu0 0
    %802 = vmatpush1.bf16.msra.mxu0 0
    %803 = vmatprep.subr.bf16.mxu0 0
    %804 = vmatpush1.bf16.msra.mxu0 0
    %805 = vmatprep.subr.bf16.mxu0 0
    %806 = vmatpush1.bf16.msra.mxu0 0
    %807 = vmatprep.subr.bf16.mxu0 0
    %808 = vmatpush1.bf16.msra.mxu0 0
    %809 = vmatprep.mubr.bf16.mxu0 0
    %810 = vmatmul.mubr.bf16.gmra.mrb[0].mxu0 %v735
    %v811 = vpop.f32.mrb[0].mxu0
    %v812 = vadd.f32 0.0, %v811
    %v813 = vpop.f32.mrb[0].mxu0
    %v814 = vadd.f32 0.0, %v813
    %v815 = vpop.f32.mrb[0].mxu0
    %v816 = vpop.f32.mrb[0].mxu0
    %817 = vdwg.mxu0
    %v818 = vadd.f32 %v731, %v771
    %v819 = vadd.f32 %v732, %v773
    %v820 = vadd.f32 %v733, %v812
    %v821 = vadd.f32 %v734, %v814
    %v822 = vmul.f32 %v818, 0.5
    %v823 = vtanh.pop %v822
    %v824 = vadd.f32 %v823, 1.0
    %v825 = vmul.f32 %v824, 0.5
    %v826 = vmul.f32 %v819, 0.5
    %v827 = vtanh.pop %v826
    %v828 = vadd.f32 %v827, 1.0
    %v829 = vmul.f32 %v828, 0.5
    %v830 = vtanh.pop %v820
    %v831 = vmul.f32 %v821, 0.5
    %v832 = vtanh.pop %v831
    %v833 = vadd.f32 %v832, 1.0
    %v834 = vmul.f32 %v833, 0.5
    %v835 = vmul.f32 %v829, %v727
    %v836 = vmul.f32 %v825, %v830
    %v837 = vadd.f32 %v835, %v836
    %v838 = vtanh.pop %v837
    %v839 = vmul.f32 %v834, %v838
    %s840 = scalar_lea.vmem [#allocation2], 96
    %v841 = vld [vmem:[%s840] sm:$0xff]
    %v842 = vld [vmem:[%s840 + $0x8] sm:$0xff]
    %v843 = vld [vmem:[%s840 + $0x10] sm:$0xff]
    %v844 = vld [vmem:[%s840 + $0x18] sm:$0xff]
    %v845 = vpack.c.bf16 %v839, %v839
    %846 = vmatprep.subr.bf16.mxu0 %v453
    %847 = vmatpush1.bf16.msra.mxu0 %v452
    %848 = vmatprep.subr.bf16.mxu0 %v457
    %849 = vmatpush1.bf16.msra.mxu0 %v456
    %850 = vmatprep.subr.bf16.mxu0 %v461
    %851 = vmatpush1.bf16.msra.mxu0 %v460
    %852 = vmatprep.subr.bf16.mxu0 %v465
    %853 = vmatpush1.bf16.msra.mxu0 %v464
    %854 = vmatprep.subr.bf16.mxu0 %v469
    %855 = vmatpush1.bf16.msra.mxu0 %v468
    %856 = vmatprep.subr.bf16.mxu0 %v473
    %857 = vmatpush1.bf16.msra.mxu0 %v472
    %858 = vmatprep.subr.bf16.mxu0 %v477
    %859 = vmatpush1.bf16.msra.mxu0 %v476
    %860 = vmatprep.subr.bf16.mxu0 %v481
    %861 = vmatpush1.bf16.msra.mxu0 %v480
    %862 = vmatprep.subr.bf16.mxu0 0
    %863 = vmatpush1.bf16.msra.mxu0 0
    %864 = vmatprep.subr.bf16.mxu0 0
    %865 = vmatpush1.bf16.msra.mxu0 0
    %866 = vmatprep.subr.bf16.mxu0 0
    %867 = vmatpush1.bf16.msra.mxu0 0
    %868 = vmatprep.subr.bf16.mxu0 0
    %869 = vmatpush1.bf16.msra.mxu0 0
    %870 = vmatprep.subr.bf16.mxu0 0
    %871 = vmatpush1.bf16.msra.mxu0 0
    %872 = vmatprep.subr.bf16.mxu0 0
    %873 = vmatpush1.bf16.msra.mxu0 0
    %874 = vmatprep.subr.bf16.mxu0 0
    %875 = vmatpush1.bf16.msra.mxu0 0
    %876 = vmatprep.subr.bf16.mxu0 0
    %877 = vmatpush1.bf16.msra.mxu0 0
    %878 = vmatprep.mubr.bf16.mxu0 0
    %879 = vmatmul.mubr.bf16.gmra.mrb[0].mxu0 %v845
    %v880 = vpop.f32.mrb[0].mxu0
    %v881 = vadd.f32 0.0, %v880
    %v882 = vpop.f32.mrb[0].mxu0
    %v883 = vadd.f32 0.0, %v882
    %v884 = vpop.f32.mrb[0].mxu0
    %v885 = vpop.f32.mrb[0].mxu0
    %886 = vdwg.mxu0
    %887 = vmatprep.subr.bf16.mxu0 %v455
    %888 = vmatpush1.bf16.msra.mxu0 %v454
    %889 = vmatprep.subr.bf16.mxu0 %v459
    %890 = vmatpush1.bf16.msra.mxu0 %v458
    %891 = vmatprep.subr.bf16.mxu0 %v463
    %892 = vmatpush1.bf16.msra.mxu0 %v462
    %893 = vmatprep.subr.bf16.mxu0 %v467
    %894 = vmatpush1.bf16.msra.mxu0 %v466
    %895 = vmatprep.subr.bf16.mxu0 %v471
    %896 = vmatpush1.bf16.msra.mxu0 %v470
    %897 = vmatprep.subr.bf16.mxu0 %v475
    %898 = vmatpush1.bf16.msra.mxu0 %v474
    %899 = vmatprep.subr.bf16.mxu0 %v479
    %900 = vmatpush1.bf16.msra.mxu0 %v478
    %901 = vmatprep.subr.bf16.mxu0 %v483
    %902 = vmatpush1.bf16.msra.mxu0 %v482
    %903 = vmatprep.subr.bf16.mxu0 0
    %904 = vmatpush1.bf16.msra.mxu0 0
    %905 = vmatprep.subr.bf16.mxu0 0
    %906 = vmatpush1.bf16.msra.mxu0 0
    %907 = vmatprep.subr.bf16.mxu0 0
    %908 = vmatpush1.bf16.msra.mxu0 0
    %909 = vmatprep.subr.bf16.mxu0 0
    %910 = vmatpush1.bf16.msra.mxu0 0
    %911 = vmatprep.subr.bf16.mxu0 0
    %912 = vmatpush1.bf16.msra.mxu0 0
    %913 = vmatprep.subr.bf16.mxu0 0
    %914 = vmatpush1.bf16.msra.mxu0 0
    %915 = vmatprep.subr.bf16.mxu0 0
    %916 = vmatpush1.bf16.msra.mxu0 0
    %917 = vmatprep.subr.bf16.mxu0 0
    %918 = vmatpush1.bf16.msra.mxu0 0
    %919 = vmatprep.mubr.bf16.mxu0 0
    %920 = vmatmul.mubr.bf16.gmra.mrb[0].mxu0 %v845
    %v921 = vpop.f32.mrb[0].mxu0
    %v922 = vadd.f32 0.0, %v921
    %v923 = vpop.f32.mrb[0].mxu0
    %v924 = vadd.f32 0.0, %v923
    %v925 = vpop.f32.mrb[0].mxu0
    %v926 = vpop.f32.mrb[0].mxu0
    %927 = vdwg.mxu0
    %v928 = vadd.f32 %v841, %v881
    %v929 = vadd.f32 %v842, %v883
    %v930 = vadd.f32 %v843, %v922
    %v931 = vadd.f32 %v844, %v924
    %v932 = vmul.f32 %v928, 0.5
    %v933 = vtanh.pop %v932
    %v934 = vadd.f32 %v933, 1.0
    %v935 = vmul.f32 %v934, 0.5
    %v936 = vmul.f32 %v929, 0.5
    %v937 = vtanh.pop %v936
    %v938 = vadd.f32 %v937, 1.0
    %v939 = vmul.f32 %v938, 0.5
    %v940 = vtanh.pop %v930
    %v941 = vmul.f32 %v931, 0.5
    %v942 = vtanh.pop %v941
    %v943 = vadd.f32 %v942, 1.0
    %v944 = vmul.f32 %v943, 0.5
    %v945 = vmul.f32 %v939, %v837
    %v946 = vmul.f32 %v935, %v940
    %v947 = vadd.f32 %v945, %v946
    %v948 = vtanh.pop %v947
    %v949 = vmul.f32 %v944, %v948
    %s950 = scalar_lea.vmem [#allocation2], 128
    %v951 = vld [vmem:[%s950] sm:$0xff]
    %v952 = vld [vmem:[%s950 + $0x8] sm:$0xff]
    %v953 = vld [vmem:[%s950 + $0x10] sm:$0xff]
    %v954 = vld [vmem:[%s950 + $0x18] sm:$0xff]
    %v955 = vpack.c.bf16 %v949, %v949
    %956 = vmatprep.subr.bf16.mxu0 %v453
    %957 = vmatpush1.bf16.msra.mxu0 %v452
    %958 = vmatprep.subr.bf16.mxu0 %v457
    %959 = vmatpush1.bf16.msra.mxu0 %v456
    %960 = vmatprep.subr.bf16.mxu0 %v461
    %961 = vmatpush1.bf16.msra.mxu0 %v460
    %962 = vmatprep.subr.bf16.mxu0 %v465
    %963 = vmatpush1.bf16.msra.mxu0 %v464
    %964 = vmatprep.subr.bf16.mxu0 %v469
    %965 = vmatpush1.bf16.msra.mxu0 %v468
    %966 = vmatprep.subr.bf16.mxu0 %v473
    %967 = vmatpush1.bf16.msra.mxu0 %v472
    %968 = vmatprep.subr.bf16.mxu0 %v477
    %969 = vmatpush1.bf16.msra.mxu0 %v476
    %970 = vmatprep.subr.bf16.mxu0 %v481
    %971 = vmatpush1.bf16.msra.mxu0 %v480
    %972 = vmatprep.subr.bf16.mxu0 0
    %973 = vmatpush1.bf16.msra.mxu0 0
    %974 = vmatprep.subr.bf16.mxu0 0
    %975 = vmatpush1.bf16.msra.mxu0 0
    %976 = vmatprep.subr.bf16.mxu0 0
    %977 = vmatpush1.bf16.msra.mxu0 0
    %978 = vmatprep.subr.bf16.mxu0 0
    %979 = vmatpush1.bf16.msra.mxu0 0
    %980 = vmatprep.subr.bf16.mxu0 0
    %981 = vmatpush1.bf16.msra.mxu0 0
    %982 = vmatprep.subr.bf16.mxu0 0
    %983 = vmatpush1.bf16.msra.mxu0 0
    %984 = vmatprep.subr.bf16.mxu0 0
    %985 = vmatpush1.bf16.msra.mxu0 0
    %986 = vmatprep.subr.bf16.mxu0 0
    %987 = vmatpush1.bf16.msra.mxu0 0
    %988 = vmatprep.mubr.bf16.mxu0 0
    %989 = vmatmul.mubr.bf16.gmra.mrb[0].mxu0 %v955
    %v990 = vpop.f32.mrb[0].mxu0
    %v991 = vadd.f32 0.0, %v990
    %v992 = vpop.f32.mrb[0].mxu0
    %v993 = vadd.f32 0.0, %v992
    %v994 = vpop.f32.mrb[0].mxu0
    %v995 = vpop.f32.mrb[0].mxu0
    %996 = vdwg.mxu0
    %997 = vmatprep.subr.bf16.mxu0 %v455
    %998 = vmatpush1.bf16.msra.mxu0 %v454
    %999 = vmatprep.subr.bf16.mxu0 %v459
    %1000 = vmatpush1.bf16.msra.mxu0 %v458
    %1001 = vmatprep.subr.bf16.mxu0 %v463
    %1002 = vmatpush1.bf16.msra.mxu0 %v462
    %1003 = vmatprep.subr.bf16.mxu0 %v467
    %1004 = vmatpush1.bf16.msra.mxu0 %v466
    %1005 = vmatprep.subr.bf16.mxu0 %v471
    %1006 = vmatpush1.bf16.msra.mxu0 %v470
    %1007 = vmatprep.subr.bf16.mxu0 %v475
    %1008 = vmatpush1.bf16.msra.mxu0 %v474
    %1009 = vmatprep.subr.bf16.mxu0 %v479
    %1010 = vmatpush1.bf16.msra.mxu0 %v478
    %1011 = vmatprep.subr.bf16.mxu0 %v483
    %1012 = vmatpush1.bf16.msra.mxu0 %v482
    %1013 = vmatprep.subr.bf16.mxu0 0
    %1014 = vmatpush1.bf16.msra.mxu0 0
    %1015 = vmatprep.subr.bf16.mxu0 0
    %1016 = vmatpush1.bf16.msra.mxu0 0
    %1017 = vmatprep.subr.bf16.mxu0 0
    %1018 = vmatpush1.bf16.msra.mxu0 0
    %1019 = vmatprep.subr.bf16.mxu0 0
    %1020 = vmatpush1.bf16.msra.mxu0 0
    %1021 = vmatprep.subr.bf16.mxu0 0
    %1022 = vmatpush1.bf16.msra.mxu0 0
    %1023 = vmatprep.subr.bf16.mxu0 0
    %1024 = vmatpush1.bf16.msra.mxu0 0
    %1025 = vmatprep.subr.bf16.mxu0 0
    %1026 = vmatpush1.bf16.msra.mxu0 0
    %1027 = vmatprep.subr.bf16.mxu0 0
    %1028 = vmatpush1.bf16.msra.mxu0 0
    %1029 = vmatprep.mubr.bf16.mxu0 0
    %1030 = vmatmul.mubr.bf16.gmra.mrb[0].mxu0 %v955
    %v1031 = vpop.f32.mrb[0].mxu0
    %v1032 = vadd.f32 0.0, %v1031
    %v1033 = vpop.f32.mrb[0].mxu0
    %v1034 = vadd.f32 0.0, %v1033
    %v1035 = vpop.f32.mrb[0].mxu0
    %v1036 = vpop.f32.mrb[0].mxu0
    %1037 = vdwg.mxu0
    %v1038 = vadd.f32 %v951, %v991
    %v1039 = vadd.f32 %v952, %v993
    %v1040 = vadd.f32 %v953, %v1032
    %v1041 = vadd.f32 %v954, %v1034
    %v1042 = vmul.f32 %v1038, 0.5
    %v1043 = vtanh.pop %v1042
    %v1044 = vadd.f32 %v1043, 1.0
    %v1045 = vmul.f32 %v1044, 0.5
    %v1046 = vmul.f32 %v1039, 0.5
    %v1047 = vtanh.pop %v1046
    %v1048 = vadd.f32 %v1047, 1.0
    %v1049 = vmul.f32 %v1048, 0.5
    %v1050 = vtanh.pop %v1040
    %v1051 = vmul.f32 %v1041, 0.5
    %v1052 = vtanh.pop %v1051
    %v1053 = vadd.f32 %v1052, 1.0
    %v1054 = vmul.f32 %v1053, 0.5
    %v1055 = vmul.f32 %v1049, %v947
    %v1056 = vmul.f32 %v1045, %v1050
    %v1057 = vadd.f32 %v1055, %v1056
    %v1058 = vtanh.pop %v1057
    %v1059 = vmul.f32 %v1054, %v1058
    %s1060 = scalar_lea.vmem [#allocation2], 160
    %v1061 = vld [vmem:[%s1060] sm:$0xff]
    %v1062 = vld [vmem:[%s1060 + $0x8] sm:$0xff]
    %v1063 = vld [vmem:[%s1060 + $0x10] sm:$0xff]
    %v1064 = vld [vmem:[%s1060 + $0x18] sm:$0xff]
    %v1065 = vpack.c.bf16 %v1059, %v1059
    %1066 = vmatprep.subr.bf16.mxu0 %v453
    %1067 = vmatpush1.bf16.msra.mxu0 %v452
    %1068 = vmatprep.subr.bf16.mxu0 %v457
    %1069 = vmatpush1.bf16.msra.mxu0 %v456
    %1070 = vmatprep.subr.bf16.mxu0 %v461
    %1071 = vmatpush1.bf16.msra.mxu0 %v460
    %1072 = vmatprep.subr.bf16.mxu0 %v465
    %1073 = vmatpush1.bf16.msra.mxu0 %v464
    %1074 = vmatprep.subr.bf16.mxu0 %v469
    %1075 = vmatpush1.bf16.msra.mxu0 %v468
    %1076 = vmatprep.subr.bf16.mxu0 %v473
    %1077 = vmatpush1.bf16.msra.mxu0 %v472
    %1078 = vmatprep.subr.bf16.mxu0 %v477
    %1079 = vmatpush1.bf16.msra.mxu0 %v476
    %1080 = vmatprep.subr.bf16.mxu0 %v481
    %1081 = vmatpush1.bf16.msra.mxu0 %v480
    %1082 = vmatprep.subr.bf16.mxu0 0
    %1083 = vmatpush1.bf16.msra.mxu0 0
    %1084 = vmatprep.subr.bf16.mxu0 0
    %1085 = vmatpush1.bf16.msra.mxu0 0
    %1086 = vmatprep.subr.bf16.mxu0 0
    %1087 = vmatpush1.bf16.msra.mxu0 0
    %1088 = vmatprep.subr.bf16.mxu0 0
    %1089 = vmatpush1.bf16.msra.mxu0 0
    %1090 = vmatprep.subr.bf16.mxu0 0
    %1091 = vmatpush1.bf16.msra.mxu0 0
    %1092 = vmatprep.subr.bf16.mxu0 0
    %1093 = vmatpush1.bf16.msra.mxu0 0
    %1094 = vmatprep.subr.bf16.mxu0 0
    %1095 = vmatpush1.bf16.msra.mxu0 0
    %1096 = vmatprep.subr.bf16.mxu0 0
    %1097 = vmatpush1.bf16.msra.mxu0 0
    %1098 = vmatprep.mubr.bf16.mxu0 0
    %1099 = vmatmul.mubr.bf16.gmra.mrb[0].mxu0 %v1065
    %v1100 = vpop.f32.mrb[0].mxu0
    %v1101 = vadd.f32 0.0, %v1100
    %v1102 = vpop.f32.mrb[0].mxu0
    %v1103 = vadd.f32 0.0, %v1102
    %v1104 = vpop.f32.mrb[0].mxu0
    %v1105 = vpop.f32.mrb[0].mxu0
    %1106 = vdwg.mxu0
    %1107 = vmatprep.subr.bf16.mxu0 %v455
    %1108 = vmatpush1.bf16.msra.mxu0 %v454
    %1109 = vmatprep.subr.bf16.mxu0 %v459
    %1110 = vmatpush1.bf16.msra.mxu0 %v458
    %1111 = vmatprep.subr.bf16.mxu0 %v463
    %1112 = vmatpush1.bf16.msra.mxu0 %v462
    %1113 = vmatprep.subr.bf16.mxu0 %v467
    %1114 = vmatpush1.bf16.msra.mxu0 %v466
    %1115 = vmatprep.subr.bf16.mxu0 %v471
    %1116 = vmatpush1.bf16.msra.mxu0 %v470
    %1117 = vmatprep.subr.bf16.mxu0 %v475
    %1118 = vmatpush1.bf16.msra.mxu0 %v474
    %1119 = vmatprep.subr.bf16.mxu0 %v479
    %1120 = vmatpush1.bf16.msra.mxu0 %v478
    %1121 = vmatprep.subr.bf16.mxu0 %v483
    %1122 = vmatpush1.bf16.msra.mxu0 %v482
    %1123 = vmatprep.subr.bf16.mxu0 0
    %1124 = vmatpush1.bf16.msra.mxu0 0
    %1125 = vmatprep.subr.bf16.mxu0 0
    %1126 = vmatpush1.bf16.msra.mxu0 0
    %1127 = vmatprep.subr.bf16.mxu0 0
    %1128 = vmatpush1.bf16.msra.mxu0 0
    %1129 = vmatprep.subr.bf16.mxu0 0
    %1130 = vmatpush1.bf16.msra.mxu0 0
    %1131 = vmatprep.subr.bf16.mxu0 0
    %1132 = vmatpush1.bf16.msra.mxu0 0
    %1133 = vmatprep.subr.bf16.mxu0 0
    %1134 = vmatpush1.bf16.msra.mxu0 0
    %1135 = vmatprep.subr.bf16.mxu0 0
    %1136 = vmatpush1.bf16.msra.mxu0 0
    %1137 = vmatprep.subr.bf16.mxu0 0
    %1138 = vmatpush1.bf16.msra.mxu0 0
    %1139 = vmatprep.mubr.bf16.mxu0 0
    %1140 = vmatmul.mubr.bf16.gmra.mrb[0].mxu0 %v1065
    %v1141 = vpop.f32.mrb[0].mxu0
    %v1142 = vadd.f32 0.0, %v1141
    %v1143 = vpop.f32.mrb[0].mxu0
    %v1144 = vadd.f32 0.0, %v1143
    %v1145 = vpop.f32.mrb[0].mxu0
    %v1146 = vpop.f32.mrb[0].mxu0
    %1147 = vdwg.mxu0
    %v1148 = vadd.f32 %v1061, %v1101
    %v1149 = vadd.f32 %v1062, %v1103
    %v1150 = vadd.f32 %v1063, %v1142
    %v1151 = vadd.f32 %v1064, %v1144
    %v1152 = vmul.f32 %v1148, 0.5
    %v1153 = vtanh.pop %v1152
    %v1154 = vadd.f32 %v1153, 1.0
    %v1155 = vmul.f32 %v1154, 0.5
    %v1156 = vmul.f32 %v1149, 0.5
    %v1157 = vtanh.pop %v1156
    %v1158 = vadd.f32 %v1157, 1.0
    %v1159 = vmul.f32 %v1158, 0.5
    %v1160 = vtanh.pop %v1150
    %v1161 = vmul.f32 %v1151, 0.5
    %v1162 = vtanh.pop %v1161
    %v1163 = vadd.f32 %v1162, 1.0
    %v1164 = vmul.f32 %v1163, 0.5
    %v1165 = vmul.f32 %v1159, %v1057
    %v1166 = vmul.f32 %v1155, %v1160
    %v1167 = vadd.f32 %v1165, %v1166
    %v1168 = vtanh.pop %v1167
    %v1169 = vmul.f32 %v1164, %v1168
    %s1170 = scalar_lea.vmem [#allocation2], 192
    %v1171 = vld [vmem:[%s1170] sm:$0xff]
    %v1172 = vld [vmem:[%s1170 + $0x8] sm:$0xff]
    %v1173 = vld [vmem:[%s1170 + $0x10] sm:$0xff]
    %v1174 = vld [vmem:[%s1170 + $0x18] sm:$0xff]
    %v1175 = vpack.c.bf16 %v1169, %v1169
    %1176 = vmatprep.subr.bf16.mxu0 %v453
    %1177 = vmatpush1.bf16.msra.mxu0 %v452
    %1178 = vmatprep.subr.bf16.mxu0 %v457
    %1179 = vmatpush1.bf16.msra.mxu0 %v456
    %1180 = vmatprep.subr.bf16.mxu0 %v461
    %1181 = vmatpush1.bf16.msra.mxu0 %v460
    %1182 = vmatprep.subr.bf16.mxu0 %v465
    %1183 = vmatpush1.bf16.msra.mxu0 %v464
    %1184 = vmatprep.subr.bf16.mxu0 %v469
    %1185 = vmatpush1.bf16.msra.mxu0 %v468
    %1186 = vmatprep.subr.bf16.mxu0 %v473
    %1187 = vmatpush1.bf16.msra.mxu0 %v472
    %1188 = vmatprep.subr.bf16.mxu0 %v477
    %1189 = vmatpush1.bf16.msra.mxu0 %v476
    %1190 = vmatprep.subr.bf16.mxu0 %v481
    %1191 = vmatpush1.bf16.msra.mxu0 %v480
    %1192 = vmatprep.subr.bf16.mxu0 0
    %1193 = vmatpush1.bf16.msra.mxu0 0
    %1194 = vmatprep.subr.bf16.mxu0 0
    %1195 = vmatpush1.bf16.msra.mxu0 0
    %1196 = vmatprep.subr.bf16.mxu0 0
    %1197 = vmatpush1.bf16.msra.mxu0 0
    %1198 = vmatprep.subr.bf16.mxu0 0
    %1199 = vmatpush1.bf16.msra.mxu0 0
    %1200 = vmatprep.subr.bf16.mxu0 0
    %1201 = vmatpush1.bf16.msra.mxu0 0
    %1202 = vmatprep.subr.bf16.mxu0 0
    %1203 = vmatpush1.bf16.msra.mxu0 0
    %1204 = vmatprep.subr.bf16.mxu0 0
    %1205 = vmatpush1.bf16.msra.mxu0 0
    %1206 = vmatprep.subr.bf16.mxu0 0
    %1207 = vmatpush1.bf16.msra.mxu0 0
    %1208 = vmatprep.mubr.bf16.mxu0 0
    %1209 = vmatmul.mubr.bf16.gmra.mrb[0].mxu0 %v1175
    %v1210 = vpop.f32.mrb[0].mxu0
    %v1211 = vadd.f32 0.0, %v1210
    %v1212 = vpop.f32.mrb[0].mxu0
    %v1213 = vadd.f32 0.0, %v1212
    %v1214 = vpop.f32.mrb[0].mxu0
    %v1215 = vpop.f32.mrb[0].mxu0
    %1216 = vdwg.mxu0
    %1217 = vmatprep.subr.bf16.mxu0 %v455
    %1218 = vmatpush1.bf16.msra.mxu0 %v454
    %1219 = vmatprep.subr.bf16.mxu0 %v459
    %1220 = vmatpush1.bf16.msra.mxu0 %v458
    %1221 = vmatprep.subr.bf16.mxu0 %v463
    %1222 = vmatpush1.bf16.msra.mxu0 %v462
    %1223 = vmatprep.subr.bf16.mxu0 %v467
    %1224 = vmatpush1.bf16.msra.mxu0 %v466
    %1225 = vmatprep.subr.bf16.mxu0 %v471
    %1226 = vmatpush1.bf16.msra.mxu0 %v470
    %1227 = vmatprep.subr.bf16.mxu0 %v475
    %1228 = vmatpush1.bf16.msra.mxu0 %v474
    %1229 = vmatprep.subr.bf16.mxu0 %v479
    %1230 = vmatpush1.bf16.msra.mxu0 %v478
    %1231 = vmatprep.subr.bf16.mxu0 %v483
    %1232 = vmatpush1.bf16.msra.mxu0 %v482
    %1233 = vmatprep.subr.bf16.mxu0 0
    %1234 = vmatpush1.bf16.msra.mxu0 0
    %1235 = vmatprep.subr.bf16.mxu0 0
    %1236 = vmatpush1.bf16.msra.mxu0 0
    %1237 = vmatprep.subr.bf16.mxu0 0
    %1238 = vmatpush1.bf16.msra.mxu0 0
    %1239 = vmatprep.subr.bf16.mxu0 0
    %1240 = vmatpush1.bf16.msra.mxu0 0
    %1241 = vmatprep.subr.bf16.mxu0 0
    %1242 = vmatpush1.bf16.msra.mxu0 0
    %1243 = vmatprep.subr.bf16.mxu0 0
    %1244 = vmatpush1.bf16.msra.mxu0 0
    %1245 = vmatprep.subr.bf16.mxu0 0
    %1246 = vmatpush1.bf16.msra.mxu0 0
    %1247 = vmatprep.subr.bf16.mxu0 0
    %1248 = vmatpush1.bf16.msra.mxu0 0
    %1249 = vmatprep.mubr.bf16.mxu0 0
    %1250 = vmatmul.mubr.bf16.gmra.mrb[0].mxu0 %v1175
    %v1251 = vpop.f32.mrb[0].mxu0
    %v1252 = vadd.f32 0.0, %v1251
    %v1253 = vpop.f32.mrb[0].mxu0
    %v1254 = vadd.f32 0.0, %v1253
    %v1255 = vpop.f32.mrb[0].mxu0
    %v1256 = vpop.f32.mrb[0].mxu0
    %1257 = vdwg.mxu0
    %v1258 = vadd.f32 %v1171, %v1211
    %v1259 = vadd.f32 %v1172, %v1213
    %v1260 = vadd.f32 %v1173, %v1252
    %v1261 = vadd.f32 %v1174, %v1254
    %v1262 = vmul.f32 %v1258, 0.5
    %v1263 = vtanh.pop %v1262
    %v1264 = vadd.f32 %v1263, 1.0
    %v1265 = vmul.f32 %v1264, 0.5
    %v1266 = vmul.f32 %v1259, 0.5
    %v1267 = vtanh.pop %v1266
    %v1268 = vadd.f32 %v1267, 1.0
    %v1269 = vmul.f32 %v1268, 0.5
    %v1270 = vtanh.pop %v1260
    %v1271 = vmul.f32 %v1261, 0.5
    %v1272 = vtanh.pop %v1271
    %v1273 = vadd.f32 %v1272, 1.0
    %v1274 = vmul.f32 %v1273, 0.5
    %v1275 = vmul.f32 %v1269, %v1167
    %v1276 = vmul.f32 %v1265, %v1270
    %v1277 = vadd.f32 %v1275, %v1276
    %v1278 = vtanh.pop %v1277
    %v1279 = vmul.f32 %v1274, %v1278
    %s1280 = scalar_lea.vmem [#allocation2], 224
    %v1281 = vld [vmem:[%s1280] sm:$0xff]
    %v1282 = vld [vmem:[%s1280 + $0x8] sm:$0xff]
    %v1283 = vld [vmem:[%s1280 + $0x10] sm:$0xff]
    %v1284 = vld [vmem:[%s1280 + $0x18] sm:$0xff]
    %v1285 = vpack.c.bf16 %v1279, %v1279
    %1286 = vmatprep.subr.bf16.mxu0 %v453
    %1287 = vmatpush1.bf16.msra.mxu0 %v452
    %1288 = vmatprep.subr.bf16.mxu0 %v457
    %1289 = vmatpush1.bf16.msra.mxu0 %v456
    %1290 = vmatprep.subr.bf16.mxu0 %v461
    %1291 = vmatpush1.bf16.msra.mxu0 %v460
    %1292 = vmatprep.subr.bf16.mxu0 %v465
    %1293 = vmatpush1.bf16.msra.mxu0 %v464
    %1294 = vmatprep.subr.bf16.mxu0 %v469
    %1295 = vmatpush1.bf16.msra.mxu0 %v468
    %1296 = vmatprep.subr.bf16.mxu0 %v473
    %1297 = vmatpush1.bf16.msra.mxu0 %v472
    %1298 = vmatprep.subr.bf16.mxu0 %v477
    %1299 = vmatpush1.bf16.msra.mxu0 %v476
    %1300 = vmatprep.subr.bf16.mxu0 %v481
    %1301 = vmatpush1.bf16.msra.mxu0 %v480
    %1302 = vmatprep.subr.bf16.mxu0 0
    %1303 = vmatpush1.bf16.msra.mxu0 0
    %1304 = vmatprep.subr.bf16.mxu0 0
    %1305 = vmatpush1.bf16.msra.mxu0 0
    %1306 = vmatprep.subr.bf16.mxu0 0
    %1307 = vmatpush1.bf16.msra.mxu0 0
    %1308 = vmatprep.subr.bf16.mxu0 0
    %1309 = vmatpush1.bf16.msra.mxu0 0
    %1310 = vmatprep.subr.bf16.mxu0 0
    %1311 = vmatpush1.bf16.msra.mxu0 0
    %1312 = vmatprep.subr.bf16.mxu0 0
    %1313 = vmatpush1.bf16.msra.mxu0 0
    %1314 = vmatprep.subr.bf16.mxu0 0
    %1315 = vmatpush1.bf16.msra.mxu0 0
    %1316 = vmatprep.subr.bf16.mxu0 0
    %1317 = vmatpush1.bf16.msra.mxu0 0
    %1318 = vmatprep.mubr.bf16.mxu0 0
    %1319 = vmatmul.mubr.bf16.gmra.mrb[0].mxu0 %v1285
    %v1320 = vpop.f32.mrb[0].mxu0
    %v1321 = vadd.f32 0.0, %v1320
    %v1322 = vpop.f32.mrb[0].mxu0
    %v1323 = vadd.f32 0.0, %v1322
    %v1324 = vpop.f32.mrb[0].mxu0
    %v1325 = vpop.f32.mrb[0].mxu0
    %1326 = vdwg.mxu0
    %1327 = vmatprep.subr.bf16.mxu0 %v455
    %1328 = vmatpush1.bf16.msra.mxu0 %v454
    %1329 = vmatprep.subr.bf16.mxu0 %v459
    %1330 = vmatpush1.bf16.msra.mxu0 %v458
    %1331 = vmatprep.subr.bf16.mxu0 %v463
    %1332 = vmatpush1.bf16.msra.mxu0 %v462
    %1333 = vmatprep.subr.bf16.mxu0 %v467
    %1334 = vmatpush1.bf16.msra.mxu0 %v466
    %1335 = vmatprep.subr.bf16.mxu0 %v471
    %1336 = vmatpush1.bf16.msra.mxu0 %v470
    %1337 = vmatprep.subr.bf16.mxu0 %v475
    %1338 = vmatpush1.bf16.msra.mxu0 %v474
    %1339 = vmatprep.subr.bf16.mxu0 %v479
    %1340 = vmatpush1.bf16.msra.mxu0 %v478
    %1341 = vmatprep.subr.bf16.mxu0 %v483
    %1342 = vmatpush1.bf16.msra.mxu0 %v482
    %1343 = vmatprep.subr.bf16.mxu0 0
    %1344 = vmatpush1.bf16.msra.mxu0 0
    %1345 = vmatprep.subr.bf16.mxu0 0
    %1346 = vmatpush1.bf16.msra.mxu0 0
    %1347 = vmatprep.subr.bf16.mxu0 0
    %1348 = vmatpush1.bf16.msra.mxu0 0
    %1349 = vmatprep.subr.bf16.mxu0 0
    %1350 = vmatpush1.bf16.msra.mxu0 0
    %1351 = vmatprep.subr.bf16.mxu0 0
    %1352 = vmatpush1.bf16.msra.mxu0 0
    %1353 = vmatprep.subr.bf16.mxu0 0
    %1354 = vmatpush1.bf16.msra.mxu0 0
    %1355 = vmatprep.subr.bf16.mxu0 0
    %1356 = vmatpush1.bf16.msra.mxu0 0
    %1357 = vmatprep.subr.bf16.mxu0 0
    %1358 = vmatpush1.bf16.msra.mxu0 0
    %1359 = vmatprep.mubr.bf16.mxu0 0
    %1360 = vmatmul.mubr.bf16.gmra.mrb[0].mxu0 %v1285
    %v1361 = vpop.f32.mrb[0].mxu0
    %v1362 = vadd.f32 0.0, %v1361
    %v1363 = vpop.f32.mrb[0].mxu0
    %v1364 = vadd.f32 0.0, %v1363
    %v1365 = vpop.f32.mrb[0].mxu0
    %v1366 = vpop.f32.mrb[0].mxu0
    %1367 = vdwg.mxu0
    %v1368 = vadd.f32 %v1281, %v1321
    %v1369 = vadd.f32 %v1282, %v1323
    %v1370 = vadd.f32 %v1283, %v1362
    %v1371 = vadd.f32 %v1284, %v1364
    %v1372 = vmul.f32 %v1368, 0.5
    %v1373 = vtanh.pop %v1372
    %v1374 = vadd.f32 %v1373, 1.0
    %v1375 = vmul.f32 %v1374, 0.5
    %v1376 = vmul.f32 %v1369, 0.5
    %v1377 = vtanh.pop %v1376
    %v1378 = vadd.f32 %v1377, 1.0
    %v1379 = vmul.f32 %v1378, 0.5
    %v1380 = vtanh.pop %v1370
    %v1381 = vmul.f32 %v1371, 0.5
    %v1382 = vtanh.pop %v1381
    %v1383 = vadd.f32 %v1382, 1.0
    %v1384 = vmul.f32 %v1383, 0.5
    %v1385 = vmul.f32 %v1379, %v1277
    %v1386 = vmul.f32 %v1375, %v1380
    %v1387 = vadd.f32 %v1385, %v1386
    %v1388 = vtanh.pop %v1387
    %v1389 = vmul.f32 %v1384, %v1388
    %1390 = vst [vmem:[%s8] sm:$0xff] %v1389
    %1391 = vst [vmem:[%s9] sm:$0xff] %v1387
    %v1392 = vld [vmem:[%s6] sm:$0xf]
    %v1394 = vlaneseq
    %v1395 = vshrl.u32 %v1394, 7
    %v1396 = vsub.s32 0, %v1395
    %v1397 = vrot.slane %v1392, %v1396
    %v1398 = vlaneseq
    %v1399 = vshrl.u32 %v1398, 7
    %v1400 = vsub.s32 1, %v1399
    %v1401 = vrot.slane %v1392, %v1400
    %v1402 = vlaneseq
    %v1403 = vshrl.u32 %v1402, 7
    %v1404 = vsub.s32 2, %v1403
    %v1405 = vrot.slane %v1392, %v1404
    %v1406 = vlaneseq
    %v1407 = vshrl.u32 %v1406, 7
    %v1408 = vsub.s32 3, %v1407
    %v1409 = vrot.slane %v1392, %v1408
    %v1414 = vld [vmem:[#allocation5] sm:$0xff]
    %v1415 = vld [vmem:[#allocation5 + $0x8] sm:$0xff]
    %v1416 = vld [vmem:[#allocation5 + $0x10] sm:$0xff]
    %v1417 = vld [vmem:[#allocation5 + $0x18] sm:$0xff]
    %v1418 = vld [vmem:[#allocation5 + $0x20] sm:$0xff]
    %v1419 = vld [vmem:[#allocation5 + $0x28] sm:$0xff]
    %v1420 = vld [vmem:[#allocation5 + $0x30] sm:$0xff]
    %v1421 = vld [vmem:[#allocation5 + $0x38] sm:$0xff]
    %v1422 = vld [vmem:[#allocation5 + $0x40] sm:$0xff]
    %v1423 = vld [vmem:[#allocation5 + $0x48] sm:$0xff]
    %v1424 = vld [vmem:[#allocation5 + $0x50] sm:$0xff]
    %v1425 = vld [vmem:[#allocation5 + $0x58] sm:$0xff]
    %v1426 = vld [vmem:[#allocation5 + $0x60] sm:$0xff]
    %v1427 = vld [vmem:[#allocation5 + $0x68] sm:$0xff]
    %v1428 = vld [vmem:[#allocation5 + $0x70] sm:$0xff]
    %v1429 = vld [vmem:[#allocation5 + $0x78] sm:$0xff]
    %v1430 = vld [vmem:[#allocation5 + $0x80] sm:$0xff]
    %v1431 = vld [vmem:[#allocation5 + $0x88] sm:$0xff]
    %v1432 = vld [vmem:[#allocation5 + $0x90] sm:$0xff]
    %v1433 = vld [vmem:[#allocation5 + $0x98] sm:$0xff]
    %v1434 = vld [vmem:[#allocation5 + $0xa0] sm:$0xff]
    %v1435 = vld [vmem:[#allocation5 + $0xa8] sm:$0xff]
    %v1436 = vld [vmem:[#allocation5 + $0xb0] sm:$0xff]
    %v1437 = vld [vmem:[#allocation5 + $0xb8] sm:$0xff]
    %v1438 = vld [vmem:[#allocation5 + $0xc0] sm:$0xff]
    %v1439 = vld [vmem:[#allocation5 + $0xc8] sm:$0xff]
    %v1440 = vld [vmem:[#allocation5 + $0xd0] sm:$0xff]
    %v1441 = vld [vmem:[#allocation5 + $0xd8] sm:$0xff]
    %v1442 = vld [vmem:[#allocation5 + $0xe0] sm:$0xff]
    %v1443 = vld [vmem:[#allocation5 + $0xe8] sm:$0xff]
    %v1444 = vld [vmem:[#allocation5 + $0xf0] sm:$0xff]
    %v1445 = vld [vmem:[#allocation5 + $0xf8] sm:$0xff]
    %v1478 = vunpack.c.l.b16 %v1414
    %v1479 = vunpack.c.h.b16 %v1414
    %v1480 = vunpack.c.l.b16 %v1415
    %v1481 = vunpack.c.h.b16 %v1415
    %v1482 = vunpack.c.l.b16 %v1416
    %v1483 = vunpack.c.h.b16 %v1416
    %v1484 = vunpack.c.l.b16 %v1417
    %v1485 = vunpack.c.h.b16 %v1417
    %v1486 = vunpack.c.l.b16 %v1418
    %v1487 = vunpack.c.h.b16 %v1418
    %v1488 = vunpack.c.l.b16 %v1419
    %v1489 = vunpack.c.h.b16 %v1419
    %v1490 = vunpack.c.l.b16 %v1420
    %v1491 = vunpack.c.h.b16 %v1420
    %v1492 = vunpack.c.l.b16 %v1421
    %v1493 = vunpack.c.h.b16 %v1421
    %v1494 = vunpack.c.l.b16 %v1422
    %v1495 = vunpack.c.h.b16 %v1422
    %v1496 = vunpack.c.l.b16 %v1423
    %v1497 = vunpack.c.h.b16 %v1423
    %v1498 = vunpack.c.l.b16 %v1424
    %v1499 = vunpack.c.h.b16 %v1424
    %v1500 = vunpack.c.l.b16 %v1425
    %v1501 = vunpack.c.h.b16 %v1425
    %v1502 = vunpack.c.l.b16 %v1426
    %v1503 = vunpack.c.h.b16 %v1426
    %v1504 = vunpack.c.l.b16 %v1427
    %v1505 = vunpack.c.h.b16 %v1427
    %v1506 = vunpack.c.l.b16 %v1428
    %v1507 = vunpack.c.h.b16 %v1428
    %v1508 = vunpack.c.l.b16 %v1429
    %v1509 = vunpack.c.h.b16 %v1429
    %v1510 = vunpack.c.l.b16 %v1430
    %v1511 = vunpack.c.h.b16 %v1430
    %v1512 = vunpack.c.l.b16 %v1431
    %v1513 = vunpack.c.h.b16 %v1431
    %v1514 = vunpack.c.l.b16 %v1432
    %v1515 = vunpack.c.h.b16 %v1432
    %v1516 = vunpack.c.l.b16 %v1433
    %v1517 = vunpack.c.h.b16 %v1433
    %v1518 = vunpack.c.l.b16 %v1434
    %v1519 = vunpack.c.h.b16 %v1434
    %v1520 = vunpack.c.l.b16 %v1435
    %v1521 = vunpack.c.h.b16 %v1435
    %v1522 = vunpack.c.l.b16 %v1436
    %v1523 = vunpack.c.h.b16 %v1436
    %v1524 = vunpack.c.l.b16 %v1437
    %v1525 = vunpack.c.h.b16 %v1437
    %v1526 = vunpack.c.l.b16 %v1438
    %v1527 = vunpack.c.h.b16 %v1438
    %v1528 = vunpack.c.l.b16 %v1439
    %v1529 = vunpack.c.h.b16 %v1439
    %v1530 = vunpack.c.l.b16 %v1440
    %v1531 = vunpack.c.h.b16 %v1440
    %v1532 = vunpack.c.l.b16 %v1441
    %v1533 = vunpack.c.h.b16 %v1441
    %v1534 = vunpack.c.l.b16 %v1442
    %v1535 = vunpack.c.h.b16 %v1442
    %v1536 = vunpack.c.l.b16 %v1443
    %v1537 = vunpack.c.h.b16 %v1443
    %v1538 = vunpack.c.l.b16 %v1444
    %v1539 = vunpack.c.h.b16 %v1444
    %v1540 = vunpack.c.l.b16 %v1445
    %v1541 = vunpack.c.h.b16 %v1445
    %v1542 = vpack.c.b16 %v1482, %v1478
    %v1543 = vpack.c.b16 %v1483, %v1479
    %v1544 = vpack.c.b16 %v1484, %v1480
    %v1545 = vpack.c.b16 %v1485, %v1481
    %v1546 = vpack.c.b16 %v1490, %v1486
    %v1547 = vpack.c.b16 %v1491, %v1487
    %v1548 = vpack.c.b16 %v1492, %v1488
    %v1549 = vpack.c.b16 %v1493, %v1489
    %v1550 = vpack.c.b16 %v1498, %v1494
    %v1551 = vpack.c.b16 %v1499, %v1495
    %v1552 = vpack.c.b16 %v1500, %v1496
    %v1553 = vpack.c.b16 %v1501, %v1497
    %v1554 = vpack.c.b16 %v1506, %v1502
    %v1555 = vpack.c.b16 %v1507, %v1503
    %v1556 = vpack.c.b16 %v1508, %v1504
    %v1557 = vpack.c.b16 %v1509, %v1505
    %v1558 = vpack.c.b16 %v1514, %v1510
    %v1559 = vpack.c.b16 %v1515, %v1511
    %v1560 = vpack.c.b16 %v1516, %v1512
    %v1561 = vpack.c.b16 %v1517, %v1513
    %v1562 = vpack.c.b16 %v1522, %v1518
    %v1563 = vpack.c.b16 %v1523, %v1519
    %v1564 = vpack.c.b16 %v1524, %v1520
    %v1565 = vpack.c.b16 %v1525, %v1521
    %v1566 = vpack.c.b16 %v1530, %v1526
    %v1567 = vpack.c.b16 %v1531, %v1527
    %v1568 = vpack.c.b16 %v1532, %v1528
    %v1569 = vpack.c.b16 %v1533, %v1529
    %v1570 = vpack.c.b16 %v1538, %v1534
    %v1571 = vpack.c.b16 %v1539, %v1535
    %v1572 = vpack.c.b16 %v1540, %v1536
    %v1573 = vpack.c.b16 %v1541, %v1537
    %1606 = vmatprep.subr.bf16.mxu0 %v1543
    %1607 = vmatpush1.bf16.msra.mxu0 %v1542
    %1608 = vmatprep.subr.bf16.mxu0 %v1547
    %1609 = vmatpush1.bf16.msra.mxu0 %v1546
    %1610 = vmatprep.subr.bf16.mxu0 %v1551
    %1611 = vmatpush1.bf16.msra.mxu0 %v1550
    %1612 = vmatprep.subr.bf16.mxu0 %v1555
    %1613 = vmatpush1.bf16.msra.mxu0 %v1554
    %1614 = vmatprep.subr.bf16.mxu0 %v1559
    %1615 = vmatpush1.bf16.msra.mxu0 %v1558
    %1616 = vmatprep.subr.bf16.mxu0 %v1563
    %1617 = vmatpush1.bf16.msra.mxu0 %v1562
    %1618 = vmatprep.subr.bf16.mxu0 %v1567
    %1619 = vmatpush1.bf16.msra.mxu0 %v1566
    %1620 = vmatprep.subr.bf16.mxu0 %v1571
    %1621 = vmatpush1.bf16.msra.mxu0 %v1570
    %1622 = vmatprep.subr.bf16.mxu0 0
    %1623 = vmatpush1.bf16.msra.mxu0 0
    %1624 = vmatprep.subr.bf16.mxu0 0
    %1625 = vmatpush1.bf16.msra.mxu0 0
    %1626 = vmatprep.subr.bf16.mxu0 0
    %1627 = vmatpush1.bf16.msra.mxu0 0
    %1628 = vmatprep.subr.bf16.mxu0 0
    %1629 = vmatpush1.bf16.msra.mxu0 0
    %1630 = vmatprep.subr.bf16.mxu0 0
    %1631 = vmatpush1.bf16.msra.mxu0 0
    %1632 = vmatprep.subr.bf16.mxu0 0
    %1633 = vmatpush1.bf16.msra.mxu0 0
    %1634 = vmatprep.subr.bf16.mxu0 0
    %1635 = vmatpush1.bf16.msra.mxu0 0
    %1636 = vmatprep.subr.bf16.mxu0 0
    %1637 = vmatpush1.bf16.msra.mxu0 0
    %1638 = vmatprep.mubr.bf16.mxu0 0
    %1639 = vmatmul.mubr.bf16.gmra.mrb[0].mxu0 %v625
    %v1640 = vpop.f32.mrb[0].mxu0
    %v1641 = vadd.f32 %v1397, %v1640
    %v1642 = vpop.f32.mrb[0].mxu0
    %v1643 = vadd.f32 %v1401, %v1642
    %v1644 = vpop.f32.mrb[0].mxu0
    %v1645 = vpop.f32.mrb[0].mxu0
    %1646 = vdwg.mxu0
    %1647 = vmatprep.subr.bf16.mxu0 %v1545
    %1648 = vmatpush1.bf16.msra.mxu0 %v1544
    %1649 = vmatprep.subr.bf16.mxu0 %v1549
    %1650 = vmatpush1.bf16.msra.mxu0 %v1548
    %1651 = vmatprep.subr.bf16.mxu0 %v1553
    %1652 = vmatpush1.bf16.msra.mxu0 %v1552
    %1653 = vmatprep.subr.bf16.mxu0 %v1557
    %1654 = vmatpush1.bf16.msra.mxu0 %v1556
    %1655 = vmatprep.subr.bf16.mxu0 %v1561
    %1656 = vmatpush1.bf16.msra.mxu0 %v1560
    %1657 = vmatprep.subr.bf16.mxu0 %v1565
    %1658 = vmatpush1.bf16.msra.mxu0 %v1564
    %1659 = vmatprep.subr.bf16.mxu0 %v1569
    %1660 = vmatpush1.bf16.msra.mxu0 %v1568
    %1661 = vmatprep.subr.bf16.mxu0 %v1573
    %1662 = vmatpush1.bf16.msra.mxu0 %v1572
    %1663 = vmatprep.subr.bf16.mxu0 0
    %1664 = vmatpush1.bf16.msra.mxu0 0
    %1665 = vmatprep.subr.bf16.mxu0 0
    %1666 = vmatpush1.bf16.msra.mxu0 0
    %1667 = vmatprep.subr.bf16.mxu0 0
    %1668 = vmatpush1.bf16.msra.mxu0 0
    %1669 = vmatprep.subr.bf16.mxu0 0
    %1670 = vmatpush1.bf16.msra.mxu0 0
    %1671 = vmatprep.subr.bf16.mxu0 0
    %1672 = vmatpush1.bf16.msra.mxu0 0
    %1673 = vmatprep.subr.bf16.mxu0 0
    %1674 = vmatpush1.bf16.msra.mxu0 0
    %1675 = vmatprep.subr.bf16.mxu0 0
    %1676 = vmatpush1.bf16.msra.mxu0 0
    %1677 = vmatprep.subr.bf16.mxu0 0
    %1678 = vmatpush1.bf16.msra.mxu0 0
    %1679 = vmatprep.mubr.bf16.mxu0 0
    %1680 = vmatmul.mubr.bf16.gmra.mrb[0].mxu0 %v625
    %v1681 = vpop.f32.mrb[0].mxu0
    %v1682 = vadd.f32 %v1405, %v1681
    %v1683 = vpop.f32.mrb[0].mxu0
    %v1684 = vadd.f32 %v1409, %v1683
    %v1685 = vpop.f32.mrb[0].mxu0
    %v1686 = vpop.f32.mrb[0].mxu0
    %1687 = vdwg.mxu0
    %v1688 = vld [vmem:[#allocation7] sm:$0xff]
    %v1689 = vld [vmem:[#allocation7 + $0x8] sm:$0xff]
    %v1690 = vld [vmem:[#allocation7 + $0x10] sm:$0xff]
    %v1691 = vld [vmem:[#allocation7 + $0x18] sm:$0xff]
    %v1692 = vld [vmem:[#allocation7 + $0x20] sm:$0xff]
    %v1693 = vld [vmem:[#allocation7 + $0x28] sm:$0xff]
    %v1694 = vld [vmem:[#allocation7 + $0x30] sm:$0xff]
    %v1695 = vld [vmem:[#allocation7 + $0x38] sm:$0xff]
    %v1696 = vld [vmem:[#allocation7 + $0x40] sm:$0xff]
    %v1697 = vld [vmem:[#allocation7 + $0x48] sm:$0xff]
    %v1698 = vld [vmem:[#allocation7 + $0x50] sm:$0xff]
    %v1699 = vld [vmem:[#allocation7 + $0x58] sm:$0xff]
    %v1700 = vld [vmem:[#allocation7 + $0x60] sm:$0xff]
    %v1701 = vld [vmem:[#allocation7 + $0x68] sm:$0xff]
    %v1702 = vld [vmem:[#allocation7 + $0x70] sm:$0xff]
    %v1703 = vld [vmem:[#allocation7 + $0x78] sm:$0xff]
    %v1704 = vld [vmem:[#allocation7 + $0x80] sm:$0xff]
    %v1705 = vld [vmem:[#allocation7 + $0x88] sm:$0xff]
    %v1706 = vld [vmem:[#allocation7 + $0x90] sm:$0xff]
    %v1707 = vld [vmem:[#allocation7 + $0x98] sm:$0xff]
    %v1708 = vld [vmem:[#allocation7 + $0xa0] sm:$0xff]
    %v1709 = vld [vmem:[#allocation7 + $0xa8] sm:$0xff]
    %v1710 = vld [vmem:[#allocation7 + $0xb0] sm:$0xff]
    %v1711 = vld [vmem:[#allocation7 + $0xb8] sm:$0xff]
    %v1712 = vld [vmem:[#allocation7 + $0xc0] sm:$0xff]
    %v1713 = vld [vmem:[#allocation7 + $0xc8] sm:$0xff]
    %v1714 = vld [vmem:[#allocation7 + $0xd0] sm:$0xff]
    %v1715 = vld [vmem:[#allocation7 + $0xd8] sm:$0xff]
    %v1716 = vld [vmem:[#allocation7 + $0xe0] sm:$0xff]
    %v1717 = vld [vmem:[#allocation7 + $0xe8] sm:$0xff]
    %v1718 = vld [vmem:[#allocation7 + $0xf0] sm:$0xff]
    %v1719 = vld [vmem:[#allocation7 + $0xf8] sm:$0xff]
    %v1752 = vunpack.c.l.b16 %v1688
    %v1753 = vunpack.c.h.b16 %v1688
    %v1754 = vunpack.c.l.b16 %v1689
    %v1755 = vunpack.c.h.b16 %v1689
    %v1756 = vunpack.c.l.b16 %v1690
    %v1757 = vunpack.c.h.b16 %v1690
    %v1758 = vunpack.c.l.b16 %v1691
    %v1759 = vunpack.c.h.b16 %v1691
    %v1760 = vunpack.c.l.b16 %v1692
    %v1761 = vunpack.c.h.b16 %v1692
    %v1762 = vunpack.c.l.b16 %v1693
    %v1763 = vunpack.c.h.b16 %v1693
    %v1764 = vunpack.c.l.b16 %v1694
    %v1765 = vunpack.c.h.b16 %v1694
    %v1766 = vunpack.c.l.b16 %v1695
    %v1767 = vunpack.c.h.b16 %v1695
    %v1768 = vunpack.c.l.b16 %v1696
    %v1769 = vunpack.c.h.b16 %v1696
    %v1770 = vunpack.c.l.b16 %v1697
    %v1771 = vunpack.c.h.b16 %v1697
    %v1772 = vunpack.c.l.b16 %v1698
    %v1773 = vunpack.c.h.b16 %v1698
    %v1774 = vunpack.c.l.b16 %v1699
    %v1775 = vunpack.c.h.b16 %v1699
    %v1776 = vunpack.c.l.b16 %v1700
    %v1777 = vunpack.c.h.b16 %v1700
    %v1778 = vunpack.c.l.b16 %v1701
    %v1779 = vunpack.c.h.b16 %v1701
    %v1780 = vunpack.c.l.b16 %v1702
    %v1781 = vunpack.c.h.b16 %v1702
    %v1782 = vunpack.c.l.b16 %v1703
    %v1783 = vunpack.c.h.b16 %v1703
    %v1784 = vunpack.c.l.b16 %v1704
    %v1785 = vunpack.c.h.b16 %v1704
    %v1786 = vunpack.c.l.b16 %v1705
    %v1787 = vunpack.c.h.b16 %v1705
    %v1788 = vunpack.c.l.b16 %v1706
    %v1789 = vunpack.c.h.b16 %v1706
    %v1790 = vunpack.c.l.b16 %v1707
    %v1791 = vunpack.c.h.b16 %v1707
    %v1792 = vunpack.c.l.b16 %v1708
    %v1793 = vunpack.c.h.b16 %v1708
    %v1794 = vunpack.c.l.b16 %v1709
    %v1795 = vunpack.c.h.b16 %v1709
    %v1796 = vunpack.c.l.b16 %v1710
    %v1797 = vunpack.c.h.b16 %v1710
    %v1798 = vunpack.c.l.b16 %v1711
    %v1799 = vunpack.c.h.b16 %v1711
    %v1800 = vunpack.c.l.b16 %v1712
    %v1801 = vunpack.c.h.b16 %v1712
    %v1802 = vunpack.c.l.b16 %v1713
    %v1803 = vunpack.c.h.b16 %v1713
    %v1804 = vunpack.c.l.b16 %v1714
    %v1805 = vunpack.c.h.b16 %v1714
    %v1806 = vunpack.c.l.b16 %v1715
    %v1807 = vunpack.c.h.b16 %v1715
    %v1808 = vunpack.c.l.b16 %v1716
    %v1809 = vunpack.c.h.b16 %v1716
    %v1810 = vunpack.c.l.b16 %v1717
    %v1811 = vunpack.c.h.b16 %v1717
    %v1812 = vunpack.c.l.b16 %v1718
    %v1813 = vunpack.c.h.b16 %v1718
    %v1814 = vunpack.c.l.b16 %v1719
    %v1815 = vunpack.c.h.b16 %v1719
    %v1816 = vpack.c.b16 %v1756, %v1752
    %v1817 = vpack.c.b16 %v1757, %v1753
    %v1818 = vpack.c.b16 %v1758, %v1754
    %v1819 = vpack.c.b16 %v1759, %v1755
    %v1820 = vpack.c.b16 %v1764, %v1760
    %v1821 = vpack.c.b16 %v1765, %v1761
    %v1822 = vpack.c.b16 %v1766, %v1762
    %v1823 = vpack.c.b16 %v1767, %v1763
    %v1824 = vpack.c.b16 %v1772, %v1768
    %v1825 = vpack.c.b16 %v1773, %v1769
    %v1826 = vpack.c.b16 %v1774, %v1770
    %v1827 = vpack.c.b16 %v1775, %v1771
    %v1828 = vpack.c.b16 %v1780, %v1776
    %v1829 = vpack.c.b16 %v1781, %v1777
    %v1830 = vpack.c.b16 %v1782, %v1778
    %v1831 = vpack.c.b16 %v1783, %v1779
    %v1832 = vpack.c.b16 %v1788, %v1784
    %v1833 = vpack.c.b16 %v1789, %v1785
    %v1834 = vpack.c.b16 %v1790, %v1786
    %v1835 = vpack.c.b16 %v1791, %v1787
    %v1836 = vpack.c.b16 %v1796, %v1792
    %v1837 = vpack.c.b16 %v1797, %v1793
    %v1838 = vpack.c.b16 %v1798, %v1794
    %v1839 = vpack.c.b16 %v1799, %v1795
    %v1840 = vpack.c.b16 %v1804, %v1800
    %v1841 = vpack.c.b16 %v1805, %v1801
    %v1842 = vpack.c.b16 %v1806, %v1802
    %v1843 = vpack.c.b16 %v1807, %v1803
    %v1844 = vpack.c.b16 %v1812, %v1808
    %v1845 = vpack.c.b16 %v1813, %v1809
    %v1846 = vpack.c.b16 %v1814, %v1810
    %v1847 = vpack.c.b16 %v1815, %v1811
    %1880 = vmatprep.subr.bf16.mxu0 %v1817
    %1881 = vmatpush1.bf16.msra.mxu0 %v1816
    %1882 = vmatprep.subr.bf16.mxu0 %v1821
    %1883 = vmatpush1.bf16.msra.mxu0 %v1820
    %1884 = vmatprep.subr.bf16.mxu0 %v1825
    %1885 = vmatpush1.bf16.msra.mxu0 %v1824
    %1886 = vmatprep.subr.bf16.mxu0 %v1829
    %1887 = vmatpush1.bf16.msra.mxu0 %v1828
    %1888 = vmatprep.subr.bf16.mxu0 %v1833
    %1889 = vmatpush1.bf16.msra.mxu0 %v1832
    %1890 = vmatprep.subr.bf16.mxu0 %v1837
    %1891 = vmatpush1.bf16.msra.mxu0 %v1836
    %1892 = vmatprep.subr.bf16.mxu0 %v1841
    %1893 = vmatpush1.bf16.msra.mxu0 %v1840
    %1894 = vmatprep.subr.bf16.mxu0 %v1845
    %1895 = vmatpush1.bf16.msra.mxu0 %v1844
    %1896 = vmatprep.subr.bf16.mxu0 0
    %1897 = vmatpush1.bf16.msra.mxu0 0
    %1898 = vmatprep.subr.bf16.mxu0 0
    %1899 = vmatpush1.bf16.msra.mxu0 0
    %1900 = vmatprep.subr.bf16.mxu0 0
    %1901 = vmatpush1.bf16.msra.mxu0 0
    %1902 = vmatprep.subr.bf16.mxu0 0
    %1903 = vmatpush1.bf16.msra.mxu0 0
    %1904 = vmatprep.subr.bf16.mxu0 0
    %1905 = vmatpush1.bf16.msra.mxu0 0
    %1906 = vmatprep.subr.bf16.mxu0 0
    %1907 = vmatpush1.bf16.msra.mxu0 0
    %1908 = vmatprep.subr.bf16.mxu0 0
    %1909 = vmatpush1.bf16.msra.mxu0 0
    %1910 = vmatprep.subr.bf16.mxu0 0
    %1911 = vmatpush1.bf16.msra.mxu0 0
    %1912 = vmatprep.mubr.bf16.mxu0 0
    %1913 = vmatmul.mubr.bf16.gmra.mrb[0].mxu0 0
    %v1914 = vpop.f32.mrb[0].mxu0
    %v1915 = vadd.f32 0.0, %v1914
    %v1916 = vpop.f32.mrb[0].mxu0
    %v1917 = vadd.f32 0.0, %v1916
    %v1918 = vpop.f32.mrb[0].mxu0
    %v1919 = vpop.f32.mrb[0].mxu0
    %1920 = vdwg.mxu0
    %1921 = vmatprep.subr.bf16.mxu0 %v1819
    %1922 = vmatpush1.bf16.msra.mxu0 %v1818
    %1923 = vmatprep.subr.bf16.mxu0 %v1823
    %1924 = vmatpush1.bf16.msra.mxu0 %v1822
    %1925 = vmatprep.subr.bf16.mxu0 %v1827
    %1926 = vmatpush1.bf16.msra.mxu0 %v1826
    %1927 = vmatprep.subr.bf16.mxu0 %v1831
    %1928 = vmatpush1.bf16.msra.mxu0 %v1830
    %1929 = vmatprep.subr.bf16.mxu0 %v1835
    %1930 = vmatpush1.bf16.msra.mxu0 %v1834
    %1931 = vmatprep.subr.bf16.mxu0 %v1839
    %1932 = vmatpush1.bf16.msra.mxu0 %v1838
    %1933 = vmatprep.subr.bf16.mxu0 %v1843
    %1934 = vmatpush1.bf16.msra.mxu0 %v1842
    %1935 = vmatprep.subr.bf16.mxu0 %v1847
    %1936 = vmatpush1.bf16.msra.mxu0 %v1846
    %1937 = vmatprep.subr.bf16.mxu0 0
    %1938 = vmatpush1.bf16.msra.mxu0 0
    %1939 = vmatprep.subr.bf16.mxu0 0
    %1940 = vmatpush1.bf16.msra.mxu0 0
    %1941 = vmatprep.subr.bf16.mxu0 0
    %1942 = vmatpush1.bf16.msra.mxu0 0
    %1943 = vmatprep.subr.bf16.mxu0 0
    %1944 = vmatpush1.bf16.msra.mxu0 0
    %1945 = vmatprep.subr.bf16.mxu0 0
    %1946 = vmatpush1.bf16.msra.mxu0 0
    %1947 = vmatprep.subr.bf16.mxu0 0
    %1948 = vmatpush1.bf16.msra.mxu0 0
    %1949 = vmatprep.subr.bf16.mxu0 0
    %1950 = vmatpush1.bf16.msra.mxu0 0
    %1951 = vmatprep.subr.bf16.mxu0 0
    %1952 = vmatpush1.bf16.msra.mxu0 0
    %1953 = vmatprep.mubr.bf16.mxu0 0
    %1954 = vmatmul.mubr.bf16.gmra.mrb[0].mxu0 0
    %v1955 = vpop.f32.mrb[0].mxu0
    %v1956 = vadd.f32 0.0, %v1955
    %v1957 = vpop.f32.mrb[0].mxu0
    %v1958 = vadd.f32 0.0, %v1957
    %v1959 = vpop.f32.mrb[0].mxu0
    %v1960 = vpop.f32.mrb[0].mxu0
    %1961 = vdwg.mxu0
    %v1962 = vadd.f32 %v1641, %v1915
    %v1963 = vadd.f32 %v1643, %v1917
    %v1964 = vadd.f32 %v1682, %v1956
    %v1965 = vadd.f32 %v1684, %v1958
    %v1966 = vmul.f32 %v1962, 0.5
    %v1967 = vtanh.pop %v1966
    %v1968 = vadd.f32 %v1967, 1.0
    %v1969 = vmul.f32 %v1968, 0.5
    %v1970 = vmul.f32 %v1963, 0.5
    %v1971 = vtanh.pop %v1970
    %v1972 = vadd.f32 %v1971, 1.0
    %v1973 = vmul.f32 %v1972, 0.5
    %v1974 = vtanh.pop %v1964
    %v1975 = vmul.f32 %v1965, 0.5
    %v1976 = vtanh.pop %v1975
    %v1977 = vadd.f32 %v1976, 1.0
    %v1978 = vmul.f32 %v1977, 0.5
    %v1979 = vmul.f32 %v1973, 0.0
    %v1980 = vmul.f32 %v1969, %v1974
    %v1981 = vadd.f32 %v1979, %v1980
    %v1982 = vtanh.pop %v1981
    %v1983 = vmul.f32 %v1978, %v1982
    %1984 = vmatprep.subr.bf16.mxu0 %v1543
    %1985 = vmatpush1.bf16.msra.mxu0 %v1542
    %1986 = vmatprep.subr.bf16.mxu0 %v1547
    %1987 = vmatpush1.bf16.msra.mxu0 %v1546
    %1988 = vmatprep.subr.bf16.mxu0 %v1551
    %1989 = vmatpush1.bf16.msra.mxu0 %v1550
    %1990 = vmatprep.subr.bf16.mxu0 %v1555
    %1991 = vmatpush1.bf16.msra.mxu0 %v1554
    %1992 = vmatprep.subr.bf16.mxu0 %v1559
    %1993 = vmatpush1.bf16.msra.mxu0 %v1558
    %1994 = vmatprep.subr.bf16.mxu0 %v1563
    %1995 = vmatpush1.bf16.msra.mxu0 %v1562
    %1996 = vmatprep.subr.bf16.mxu0 %v1567
    %1997 = vmatpush1.bf16.msra.mxu0 %v1566
    %1998 = vmatprep.subr.bf16.mxu0 %v1571
    %1999 = vmatpush1.bf16.msra.mxu0 %v1570
    %2000 = vmatprep.subr.bf16.mxu0 0
    %2001 = vmatpush1.bf16.msra.mxu0 0
    %2002 = vmatprep.subr.bf16.mxu0 0
    %2003 = vmatpush1.bf16.msra.mxu0 0
    %2004 = vmatprep.subr.bf16.mxu0 0
    %2005 = vmatpush1.bf16.msra.mxu0 0
    %2006 = vmatprep.subr.bf16.mxu0 0
    %2007 = vmatpush1.bf16.msra.mxu0 0
    %2008 = vmatprep.subr.bf16.mxu0 0
    %2009 = vmatpush1.bf16.msra.mxu0 0
    %2010 = vmatprep.subr.bf16.mxu0 0
    %2011 = vmatpush1.bf16.msra.mxu0 0
    %2012 = vmatprep.subr.bf16.mxu0 0
    %2013 = vmatpush1.bf16.msra.mxu0 0
    %2014 = vmatprep.subr.bf16.mxu0 0
    %2015 = vmatpush1.bf16.msra.mxu0 0
    %2016 = vmatprep.mubr.bf16.mxu0 0
    %2017 = vmatmul.mubr.bf16.gmra.mrb[0].mxu0 %v735
    %v2018 = vpop.f32.mrb[0].mxu0
    %v2019 = vadd.f32 %v1397, %v2018
    %v2020 = vpop.f32.mrb[0].mxu0
    %v2021 = vadd.f32 %v1401, %v2020
    %v2022 = vpop.f32.mrb[0].mxu0
    %v2023 = vpop.f32.mrb[0].mxu0
    %2024 = vdwg.mxu0
    %2025 = vmatprep.subr.bf16.mxu0 %v1545
    %2026 = vmatpush1.bf16.msra.mxu0 %v1544
    %2027 = vmatprep.subr.bf16.mxu0 %v1549
    %2028 = vmatpush1.bf16.msra.mxu0 %v1548
    %2029 = vmatprep.subr.bf16.mxu0 %v1553
    %2030 = vmatpush1.bf16.msra.mxu0 %v1552
    %2031 = vmatprep.subr.bf16.mxu0 %v1557
    %2032 = vmatpush1.bf16.msra.mxu0 %v1556
    %2033 = vmatprep.subr.bf16.mxu0 %v1561
    %2034 = vmatpush1.bf16.msra.mxu0 %v1560
    %2035 = vmatprep.subr.bf16.mxu0 %v1565
    %2036 = vmatpush1.bf16.msra.mxu0 %v1564
    %2037 = vmatprep.subr.bf16.mxu0 %v1569
    %2038 = vmatpush1.bf16.msra.mxu0 %v1568
    %2039 = vmatprep.subr.bf16.mxu0 %v1573
    %2040 = vmatpush1.bf16.msra.mxu0 %v1572
    %2041 = vmatprep.subr.bf16.mxu0 0
    %2042 = vmatpush1.bf16.msra.mxu0 0
    %2043 = vmatprep.subr.bf16.mxu0 0
    %2044 = vmatpush1.bf16.msra.mxu0 0
    %2045 = vmatprep.subr.bf16.mxu0 0
    %2046 = vmatpush1.bf16.msra.mxu0 0
    %2047 = vmatprep.subr.bf16.mxu0 0
    %2048 = vmatpush1.bf16.msra.mxu0 0
    %2049 = vmatprep.subr.bf16.mxu0 0
    %2050 = vmatpush1.bf16.msra.mxu0 0
    %2051 = vmatprep.subr.bf16.mxu0 0
    %2052 = vmatpush1.bf16.msra.mxu0 0
    %2053 = vmatprep.subr.bf16.mxu0 0
    %2054 = vmatpush1.bf16.msra.mxu0 0
    %2055 = vmatprep.subr.bf16.mxu0 0
    %2056 = vmatpush1.bf16.msra.mxu0 0
    %2057 = vmatprep.mubr.bf16.mxu0 0
    %2058 = vmatmul.mubr.bf16.gmra.mrb[0].mxu0 %v735
    %v2059 = vpop.f32.mrb[0].mxu0
    %v2060 = vadd.f32 %v1405, %v2059
    %v2061 = vpop.f32.mrb[0].mxu0
    %v2062 = vadd.f32 %v1409, %v2061
    %v2063 = vpop.f32.mrb[0].mxu0
    %v2064 = vpop.f32.mrb[0].mxu0
    %2065 = vdwg.mxu0
    %v2066 = vpack.c.bf16 %v1983, %v1983
    %2067 = vmatprep.subr.bf16.mxu0 %v1817
    %2068 = vmatpush1.bf16.msra.mxu0 %v1816
    %2069 = vmatprep.subr.bf16.mxu0 %v1821
    %2070 = vmatpush1.bf16.msra.mxu0 %v1820
    %2071 = vmatprep.subr.bf16.mxu0 %v1825
    %2072 = vmatpush1.bf16.msra.mxu0 %v1824
    %2073 = vmatprep.subr.bf16.mxu0 %v1829
    %2074 = vmatpush1.bf16.msra.mxu0 %v1828
    %2075 = vmatprep.subr.bf16.mxu0 %v1833
    %2076 = vmatpush1.bf16.msra.mxu0 %v1832
    %2077 = vmatprep.subr.bf16.mxu0 %v1837
    %2078 = vmatpush1.bf16.msra.mxu0 %v1836
    %2079 = vmatprep.subr.bf16.mxu0 %v1841
    %2080 = vmatpush1.bf16.msra.mxu0 %v1840
    %2081 = vmatprep.subr.bf16.mxu0 %v1845
    %2082 = vmatpush1.bf16.msra.mxu0 %v1844
    %2083 = vmatprep.subr.bf16.mxu0 0
    %2084 = vmatpush1.bf16.msra.mxu0 0
    %2085 = vmatprep.subr.bf16.mxu0 0
    %2086 = vmatpush1.bf16.msra.mxu0 0
    %2087 = vmatprep.subr.bf16.mxu0 0
    %2088 = vmatpush1.bf16.msra.mxu0 0
    %2089 = vmatprep.subr.bf16.mxu0 0
    %2090 = vmatpush1.bf16.msra.mxu0 0
    %2091 = vmatprep.subr.bf16.mxu0 0
    %2092 = vmatpush1.bf16.msra.mxu0 0
    %2093 = vmatprep.subr.bf16.mxu0 0
    %2094 = vmatpush1.bf16.msra.mxu0 0
    %2095 = vmatprep.subr.bf16.mxu0 0
    %2096 = vmatpush1.bf16.msra.mxu0 0
    %2097 = vmatprep.subr.bf16.mxu0 0
    %2098 = vmatpush1.bf16.msra.mxu0 0
    %2099 = vmatprep.mubr.bf16.mxu0 0
    %2100 = vmatmul.mubr.bf16.gmra.mrb[0].mxu0 %v2066
    %v2101 = vpop.f32.mrb[0].mxu0
    %v2102 = vadd.f32 0.0, %v2101
    %v2103 = vpop.f32.mrb[0].mxu0
    %v2104 = vadd.f32 0.0, %v2103
    %v2105 = vpop.f32.mrb[0].mxu0
    %v2106 = vpop.f32.mrb[0].mxu0
    %2107 = vdwg.mxu0
    %2108 = vmatprep.subr.bf16.mxu0 %v1819
    %2109 = vmatpush1.bf16.msra.mxu0 %v1818
    %2110 = vmatprep.subr.bf16.mxu0 %v1823
    %2111 = vmatpush1.bf16.msra.mxu0 %v1822
    %2112 = vmatprep.subr.bf16.mxu0 %v1827
    %2113 = vmatpush1.bf16.msra.mxu0 %v1826
    %2114 = vmatprep.subr.bf16.mxu0 %v1831
    %2115 = vmatpush1.bf16.msra.mxu0 %v1830
    %2116 = vmatprep.subr.bf16.mxu0 %v1835
    %2117 = vmatpush1.bf16.msra.mxu0 %v1834
    %2118 = vmatprep.subr.bf16.mxu0 %v1839
    %2119 = vmatpush1.bf16.msra.mxu0 %v1838
    %2120 = vmatprep.subr.bf16.mxu0 %v1843
    %2121 = vmatpush1.bf16.msra.mxu0 %v1842
    %2122 = vmatprep.subr.bf16.mxu0 %v1847
    %2123 = vmatpush1.bf16.msra.mxu0 %v1846
    %2124 = vmatprep.subr.bf16.mxu0 0
    %2125 = vmatpush1.bf16.msra.mxu0 0
    %2126 = vmatprep.subr.bf16.mxu0 0
    %2127 = vmatpush1.bf16.msra.mxu0 0
    %2128 = vmatprep.subr.bf16.mxu0 0
    %2129 = vmatpush1.bf16.msra.mxu0 0
    %2130 = vmatprep.subr.bf16.mxu0 0
    %2131 = vmatpush1.bf16.msra.mxu0 0
    %2132 = vmatprep.subr.bf16.mxu0 0
    %2133 = vmatpush1.bf16.msra.mxu0 0
    %2134 = vmatprep.subr.bf16.mxu0 0
    %2135 = vmatpush1.bf16.msra.mxu0 0
    %2136 = vmatprep.subr.bf16.mxu0 0
    %2137 = vmatpush1.bf16.msra.mxu0 0
    %2138 = vmatprep.subr.bf16.mxu0 0
    %2139 = vmatpush1.bf16.msra.mxu0 0
    %2140 = vmatprep.mubr.bf16.mxu0 0
    %2141 = vmatmul.mubr.bf16.gmra.mrb[0].mxu0 %v2066
    %v2142 = vpop.f32.mrb[0].mxu0
    %v2143 = vadd.f32 0.0, %v2142
    %v2144 = vpop.f32.mrb[0].mxu0
    %v2145 = vadd.f32 0.0, %v2144
    %v2146 = vpop.f32.mrb[0].mxu0
    %v2147 = vpop.f32.mrb[0].mxu0
    %2148 = vdwg.mxu0
    %v2149 = vadd.f32 %v2019, %v2102
    %v2150 = vadd.f32 %v2021, %v2104
    %v2151 = vadd.f32 %v2060, %v2143
    %v2152 = vadd.f32 %v2062, %v2145
    %v2153 = vmul.f32 %v2149, 0.5
    %v2154 = vtanh.pop %v2153
    %v2155 = vadd.f32 %v2154, 1.0
    %v2156 = vmul.f32 %v2155, 0.5
    %v2157 = vmul.f32 %v2150, 0.5
    %v2158 = vtanh.pop %v2157
    %v2159 = vadd.f32 %v2158, 1.0
    %v2160 = vmul.f32 %v2159, 0.5
    %v2161 = vtanh.pop %v2151
    %v2162 = vmul.f32 %v2152, 0.5
    %v2163 = vtanh.pop %v2162
    %v2164 = vadd.f32 %v2163, 1.0
    %v2165 = vmul.f32 %v2164, 0.5
    %v2166 = vmul.f32 %v2160, %v1981
    %v2167 = vmul.f32 %v2156, %v2161
    %v2168 = vadd.f32 %v2166, %v2167
    %v2169 = vtanh.pop %v2168
    %v2170 = vmul.f32 %v2165, %v2169
    %2171 = vmatprep.subr.bf16.mxu0 %v1543
    %2172 = vmatpush1.bf16.msra.mxu0 %v1542
    %2173 = vmatprep.subr.bf16.mxu0 %v1547
    %2174 = vmatpush1.bf16.msra.mxu0 %v1546
    %2175 = vmatprep.subr.bf16.mxu0 %v1551
    %2176 = vmatpush1.bf16.msra.mxu0 %v1550
    %2177 = vmatprep.subr.bf16.mxu0 %v1555
    %2178 = vmatpush1.bf16.msra.mxu0 %v1554
    %2179 = vmatprep.subr.bf16.mxu0 %v1559
    %2180 = vmatpush1.bf16.msra.mxu0 %v1558
    %2181 = vmatprep.subr.bf16.mxu0 %v1563
    %2182 = vmatpush1.bf16.msra.mxu0 %v1562
    %2183 = vmatprep.subr.bf16.mxu0 %v1567
    %2184 = vmatpush1.bf16.msra.mxu0 %v1566
    %2185 = vmatprep.subr.bf16.mxu0 %v1571
    %2186 = vmatpush1.bf16.msra.mxu0 %v1570
    %2187 = vmatprep.subr.bf16.mxu0 0
    %2188 = vmatpush1.bf16.msra.mxu0 0
    %2189 = vmatprep.subr.bf16.mxu0 0
    %2190 = vmatpush1.bf16.msra.mxu0 0
    %2191 = vmatprep.subr.bf16.mxu0 0
    %2192 = vmatpush1.bf16.msra.mxu0 0
    %2193 = vmatprep.subr.bf16.mxu0 0
    %2194 = vmatpush1.bf16.msra.mxu0 0
    %2195 = vmatprep.subr.bf16.mxu0 0
    %2196 = vmatpush1.bf16.msra.mxu0 0
    %2197 = vmatprep.subr.bf16.mxu0 0
    %2198 = vmatpush1.bf16.msra.mxu0 0
    %2199 = vmatprep.subr.bf16.mxu0 0
    %2200 = vmatpush1.bf16.msra.mxu0 0
    %2201 = vmatprep.subr.bf16.mxu0 0
    %2202 = vmatpush1.bf16.msra.mxu0 0
    %2203 = vmatprep.mubr.bf16.mxu0 0
    %2204 = vmatmul.mubr.bf16.gmra.mrb[0].mxu0 %v845
    %v2205 = vpop.f32.mrb[0].mxu0
    %v2206 = vadd.f32 %v1397, %v2205
    %v2207 = vpop.f32.mrb[0].mxu0
    %v2208 = vadd.f32 %v1401, %v2207
    %v2209 = vpop.f32.mrb[0].mxu0
    %v2210 = vpop.f32.mrb[0].mxu0
    %2211 = vdwg.mxu0
    %2212 = vmatprep.subr.bf16.mxu0 %v1545
    %2213 = vmatpush1.bf16.msra.mxu0 %v1544
    %2214 = vmatprep.subr.bf16.mxu0 %v1549
    %2215 = vmatpush1.bf16.msra.mxu0 %v1548
    %2216 = vmatprep.subr.bf16.mxu0 %v1553
    %2217 = vmatpush1.bf16.msra.mxu0 %v1552
    %2218 = vmatprep.subr.bf16.mxu0 %v1557
    %2219 = vmatpush1.bf16.msra.mxu0 %v1556
    %2220 = vmatprep.subr.bf16.mxu0 %v1561
    %2221 = vmatpush1.bf16.msra.mxu0 %v1560
    %2222 = vmatprep.subr.bf16.mxu0 %v1565
    %2223 = vmatpush1.bf16.msra.mxu0 %v1564
    %2224 = vmatprep.subr.bf16.mxu0 %v1569
    %2225 = vmatpush1.bf16.msra.mxu0 %v1568
    %2226 = vmatprep.subr.bf16.mxu0 %v1573
    %2227 = vmatpush1.bf16.msra.mxu0 %v1572
    %2228 = vmatprep.subr.bf16.mxu0 0
    %2229 = vmatpush1.bf16.msra.mxu0 0
    %2230 = vmatprep.subr.bf16.mxu0 0
    %2231 = vmatpush1.bf16.msra.mxu0 0
    %2232 = vmatprep.subr.bf16.mxu0 0
    %2233 = vmatpush1.bf16.msra.mxu0 0
    %2234 = vmatprep.subr.bf16.mxu0 0
    %2235 = vmatpush1.bf16.msra.mxu0 0
    %2236 = vmatprep.subr.bf16.mxu0 0
    %2237 = vmatpush1.bf16.msra.mxu0 0
    %2238 = vmatprep.subr.bf16.mxu0 0
    %2239 = vmatpush1.bf16.msra.mxu0 0
    %2240 = vmatprep.subr.bf16.mxu0 0
    %2241 = vmatpush1.bf16.msra.mxu0 0
    %2242 = vmatprep.subr.bf16.mxu0 0
    %2243 = vmatpush1.bf16.msra.mxu0 0
    %2244 = vmatprep.mubr.bf16.mxu0 0
    %2245 = vmatmul.mubr.bf16.gmra.mrb[0].mxu0 %v845
    %v2246 = vpop.f32.mrb[0].mxu0
    %v2247 = vadd.f32 %v1405, %v2246
    %v2248 = vpop.f32.mrb[0].mxu0
    %v2249 = vadd.f32 %v1409, %v2248
    %v2250 = vpop.f32.mrb[0].mxu0
    %v2251 = vpop.f32.mrb[0].mxu0
    %2252 = vdwg.mxu0
    %v2253 = vpack.c.bf16 %v2170, %v2170
    %2254 = vmatprep.subr.bf16.mxu0 %v1817
    %2255 = vmatpush1.bf16.msra.mxu0 %v1816
    %2256 = vmatprep.subr.bf16.mxu0 %v1821
    %2257 = vmatpush1.bf16.msra.mxu0 %v1820
    %2258 = vmatprep.subr.bf16.mxu0 %v1825
    %2259 = vmatpush1.bf16.msra.mxu0 %v1824
    %2260 = vmatprep.subr.bf16.mxu0 %v1829
    %2261 = vmatpush1.bf16.msra.mxu0 %v1828
    %2262 = vmatprep.subr.bf16.mxu0 %v1833
    %2263 = vmatpush1.bf16.msra.mxu0 %v1832
    %2264 = vmatprep.subr.bf16.mxu0 %v1837
    %2265 = vmatpush1.bf16.msra.mxu0 %v1836
    %2266 = vmatprep.subr.bf16.mxu0 %v1841
    %2267 = vmatpush1.bf16.msra.mxu0 %v1840
    %2268 = vmatprep.subr.bf16.mxu0 %v1845
    %2269 = vmatpush1.bf16.msra.mxu0 %v1844
    %2270 = vmatprep.subr.bf16.mxu0 0
    %2271 = vmatpush1.bf16.msra.mxu0 0
    %2272 = vmatprep.subr.bf16.mxu0 0
    %2273 = vmatpush1.bf16.msra.mxu0 0
    %2274 = vmatprep.subr.bf16.mxu0 0
    %2275 = vmatpush1.bf16.msra.mxu0 0
    %2276 = vmatprep.subr.bf16.mxu0 0
    %2277 = vmatpush1.bf16.msra.mxu0 0
    %2278 = vmatprep.subr.bf16.mxu0 0
    %2279 = vmatpush1.bf16.msra.mxu0 0
    %2280 = vmatprep.subr.bf16.mxu0 0
    %2281 = vmatpush1.bf16.msra.mxu0 0
    %2282 = vmatprep.subr.bf16.mxu0 0
    %2283 = vmatpush1.bf16.msra.mxu0 0
    %2284 = vmatprep.subr.bf16.mxu0 0
    %2285 = vmatpush1.bf16.msra.mxu0 0
    %2286 = vmatprep.mubr.bf16.mxu0 0
    %2287 = vmatmul.mubr.bf16.gmra.mrb[0].mxu0 %v2253
    %v2288 = vpop.f32.mrb[0].mxu0
    %v2289 = vadd.f32 0.0, %v2288
    %v2290 = vpop.f32.mrb[0].mxu0
    %v2291 = vadd.f32 0.0, %v2290
    %v2292 = vpop.f32.mrb[0].mxu0
    %v2293 = vpop.f32.mrb[0].mxu0
    %2294 = vdwg.mxu0
    %2295 = vmatprep.subr.bf16.mxu0 %v1819
    %2296 = vmatpush1.bf16.msra.mxu0 %v1818
    %2297 = vmatprep.subr.bf16.mxu0 %v1823
    %2298 = vmatpush1.bf16.msra.mxu0 %v1822
    %2299 = vmatprep.subr.bf16.mxu0 %v1827
    %2300 = vmatpush1.bf16.msra.mxu0 %v1826
    %2301 = vmatprep.subr.bf16.mxu0 %v1831
    %2302 = vmatpush1.bf16.msra.mxu0 %v1830
    %2303 = vmatprep.subr.bf16.mxu0 %v1835
    %2304 = vmatpush1.bf16.msra.mxu0 %v1834
    %2305 = vmatprep.subr.bf16.mxu0 %v1839
    %2306 = vmatpush1.bf16.msra.mxu0 %v1838
    %2307 = vmatprep.subr.bf16.mxu0 %v1843
    %2308 = vmatpush1.bf16.msra.mxu0 %v1842
    %2309 = vmatprep.subr.bf16.mxu0 %v1847
    %2310 = vmatpush1.bf16.msra.mxu0 %v1846
    %2311 = vmatprep.subr.bf16.mxu0 0
    %2312 = vmatpush1.bf16.msra.mxu0 0
    %2313 = vmatprep.subr.bf16.mxu0 0
    %2314 = vmatpush1.bf16.msra.mxu0 0
    %2315 = vmatprep.subr.bf16.mxu0 0
    %2316 = vmatpush1.bf16.msra.mxu0 0
    %2317 = vmatprep.subr.bf16.mxu0 0
    %2318 = vmatpush1.bf16.msra.mxu0 0
    %2319 = vmatprep.subr.bf16.mxu0 0
    %2320 = vmatpush1.bf16.msra.mxu0 0
    %2321 = vmatprep.subr.bf16.mxu0 0
    %2322 = vmatpush1.bf16.msra.mxu0 0
    %2323 = vmatprep.subr.bf16.mxu0 0
    %2324 = vmatpush1.bf16.msra.mxu0 0
    %2325 = vmatprep.subr.bf16.mxu0 0
    %2326 = vmatpush1.bf16.msra.mxu0 0
    %2327 = vmatprep.mubr.bf16.mxu0 0
    %2328 = vmatmul.mubr.bf16.gmra.mrb[0].mxu0 %v2253
    %v2329 = vpop.f32.mrb[0].mxu0
    %v2330 = vadd.f32 0.0, %v2329
    %v2331 = vpop.f32.mrb[0].mxu0
    %v2332 = vadd.f32 0.0, %v2331
    %v2333 = vpop.f32.mrb[0].mxu0
    %v2334 = vpop.f32.mrb[0].mxu0
    %2335 = vdwg.mxu0
    %v2336 = vadd.f32 %v2206, %v2289
    %v2337 = vadd.f32 %v2208, %v2291
    %v2338 = vadd.f32 %v2247, %v2330
    %v2339 = vadd.f32 %v2249, %v2332
    %v2340 = vmul.f32 %v2336, 0.5
    %v2341 = vtanh.pop %v2340
    %v2342 = vadd.f32 %v2341, 1.0
    %v2343 = vmul.f32 %v2342, 0.5
    %v2344 = vmul.f32 %v2337, 0.5
    %v2345 = vtanh.pop %v2344
    %v2346 = vadd.f32 %v2345, 1.0
    %v2347 = vmul.f32 %v2346, 0.5
    %v2348 = vtanh.pop %v2338
    %v2349 = vmul.f32 %v2339, 0.5
    %v2350 = vtanh.pop %v2349
    %v2351 = vadd.f32 %v2350, 1.0
    %v2352 = vmul.f32 %v2351, 0.5
    %v2353 = vmul.f32 %v2347, %v2168
    %v2354 = vmul.f32 %v2343, %v2348
    %v2355 = vadd.f32 %v2353, %v2354
    %v2356 = vtanh.pop %v2355
    %v2357 = vmul.f32 %v2352, %v2356
    %2358 = vmatprep.subr.bf16.mxu0 %v1543
    %2359 = vmatpush1.bf16.msra.mxu0 %v1542
    %2360 = vmatprep.subr.bf16.mxu0 %v1547
    %2361 = vmatpush1.bf16.msra.mxu0 %v1546
    %2362 = vmatprep.subr.bf16.mxu0 %v1551
    %2363 = vmatpush1.bf16.msra.mxu0 %v1550
    %2364 = vmatprep.subr.bf16.mxu0 %v1555
    %2365 = vmatpush1.bf16.msra.mxu0 %v1554
    %2366 = vmatprep.subr.bf16.mxu0 %v1559
    %2367 = vmatpush1.bf16.msra.mxu0 %v1558
    %2368 = vmatprep.subr.bf16.mxu0 %v1563
    %2369 = vmatpush1.bf16.msra.mxu0 %v1562
    %2370 = vmatprep.subr.bf16.mxu0 %v1567
    %2371 = vmatpush1.bf16.msra.mxu0 %v1566
    %2372 = vmatprep.subr.bf16.mxu0 %v1571
    %2373 = vmatpush1.bf16.msra.mxu0 %v1570
    %2374 = vmatprep.subr.bf16.mxu0 0
    %2375 = vmatpush1.bf16.msra.mxu0 0
    %2376 = vmatprep.subr.bf16.mxu0 0
    %2377 = vmatpush1.bf16.msra.mxu0 0
    %2378 = vmatprep.subr.bf16.mxu0 0
    %2379 = vmatpush1.bf16.msra.mxu0 0
    %2380 = vmatprep.subr.bf16.mxu0 0
    %2381 = vmatpush1.bf16.msra.mxu0 0
    %2382 = vmatprep.subr.bf16.mxu0 0
    %2383 = vmatpush1.bf16.msra.mxu0 0
    %2384 = vmatprep.subr.bf16.mxu0 0
    %2385 = vmatpush1.bf16.msra.mxu0 0
    %2386 = vmatprep.subr.bf16.mxu0 0
    %2387 = vmatpush1.bf16.msra.mxu0 0
    %2388 = vmatprep.subr.bf16.mxu0 0
    %2389 = vmatpush1.bf16.msra.mxu0 0
    %2390 = vmatprep.mubr.bf16.mxu0 0
    %2391 = vmatmul.mubr.bf16.gmra.mrb[0].mxu0 %v955
    %v2392 = vpop.f32.mrb[0].mxu0
    %v2393 = vadd.f32 %v1397, %v2392
    %v2394 = vpop.f32.mrb[0].mxu0
    %v2395 = vadd.f32 %v1401, %v2394
    %v2396 = vpop.f32.mrb[0].mxu0
    %v2397 = vpop.f32.mrb[0].mxu0
    %2398 = vdwg.mxu0
    %2399 = vmatprep.subr.bf16.mxu0 %v1545
    %2400 = vmatpush1.bf16.msra.mxu0 %v1544
    %2401 = vmatprep.subr.bf16.mxu0 %v1549
    %2402 = vmatpush1.bf16.msra.mxu0 %v1548
    %2403 = vmatprep.subr.bf16.mxu0 %v1553
    %2404 = vmatpush1.bf16.msra.mxu0 %v1552
    %2405 = vmatprep.subr.bf16.mxu0 %v1557
    %2406 = vmatpush1.bf16.msra.mxu0 %v1556
    %2407 = vmatprep.subr.bf16.mxu0 %v1561
    %2408 = vmatpush1.bf16.msra.mxu0 %v1560
    %2409 = vmatprep.subr.bf16.mxu0 %v1565
    %2410 = vmatpush1.bf16.msra.mxu0 %v1564
    %2411 = vmatprep.subr.bf16.mxu0 %v1569
    %2412 = vmatpush1.bf16.msra.mxu0 %v1568
    %2413 = vmatprep.subr.bf16.mxu0 %v1573
    %2414 = vmatpush1.bf16.msra.mxu0 %v1572
    %2415 = vmatprep.subr.bf16.mxu0 0
    %2416 = vmatpush1.bf16.msra.mxu0 0
    %2417 = vmatprep.subr.bf16.mxu0 0
    %2418 = vmatpush1.bf16.msra.mxu0 0
    %2419 = vmatprep.subr.bf16.mxu0 0
    %2420 = vmatpush1.bf16.msra.mxu0 0
    %2421 = vmatprep.subr.bf16.mxu0 0
    %2422 = vmatpush1.bf16.msra.mxu0 0
    %2423 = vmatprep.subr.bf16.mxu0 0
    %2424 = vmatpush1.bf16.msra.mxu0 0
    %2425 = vmatprep.subr.bf16.mxu0 0
    %2426 = vmatpush1.bf16.msra.mxu0 0
    %2427 = vmatprep.subr.bf16.mxu0 0
    %2428 = vmatpush1.bf16.msra.mxu0 0
    %2429 = vmatprep.subr.bf16.mxu0 0
    %2430 = vmatpush1.bf16.msra.mxu0 0
    %2431 = vmatprep.mubr.bf16.mxu0 0
    %2432 = vmatmul.mubr.bf16.gmra.mrb[0].mxu0 %v955
    %v2433 = vpop.f32.mrb[0].mxu0
    %v2434 = vadd.f32 %v1405, %v2433
    %v2435 = vpop.f32.mrb[0].mxu0
    %v2436 = vadd.f32 %v1409, %v2435
    %v2437 = vpop.f32.mrb[0].mxu0
    %v2438 = vpop.f32.mrb[0].mxu0
    %2439 = vdwg.mxu0
    %v2440 = vpack.c.bf16 %v2357, %v2357
    %2441 = vmatprep.subr.bf16.mxu0 %v1817
    %2442 = vmatpush1.bf16.msra.mxu0 %v1816
    %2443 = vmatprep.subr.bf16.mxu0 %v1821
    %2444 = vmatpush1.bf16.msra.mxu0 %v1820
    %2445 = vmatprep.subr.bf16.mxu0 %v1825
    %2446 = vmatpush1.bf16.msra.mxu0 %v1824
    %2447 = vmatprep.subr.bf16.mxu0 %v1829
    %2448 = vmatpush1.bf16.msra.mxu0 %v1828
    %2449 = vmatprep.subr.bf16.mxu0 %v1833
    %2450 = vmatpush1.bf16.msra.mxu0 %v1832
    %2451 = vmatprep.subr.bf16.mxu0 %v1837
    %2452 = vmatpush1.bf16.msra.mxu0 %v1836
    %2453 = vmatprep.subr.bf16.mxu0 %v1841
    %2454 = vmatpush1.bf16.msra.mxu0 %v1840
    %2455 = vmatprep.subr.bf16.mxu0 %v1845
    %2456 = vmatpush1.bf16.msra.mxu0 %v1844
    %2457 = vmatprep.subr.bf16.mxu0 0
    %2458 = vmatpush1.bf16.msra.mxu0 0
    %2459 = vmatprep.subr.bf16.mxu0 0
    %2460 = vmatpush1.bf16.msra.mxu0 0
    %2461 = vmatprep.subr.bf16.mxu0 0
    %2462 = vmatpush1.bf16.msra.mxu0 0
    %2463 = vmatprep.subr.bf16.mxu0 0
    %2464 = vmatpush1.bf16.msra.mxu0 0
    %2465 = vmatprep.subr.bf16.mxu0 0
    %2466 = vmatpush1.bf16.msra.mxu0 0
    %2467 = vmatprep.subr.bf16.mxu0 0
    %2468 = vmatpush1.bf16.msra.mxu0 0
    %2469 = vmatprep.subr.bf16.mxu0 0
    %2470 = vmatpush1.bf16.msra.mxu0 0
    %2471 = vmatprep.subr.bf16.mxu0 0
    %2472 = vmatpush1.bf16.msra.mxu0 0
    %2473 = vmatprep.mubr.bf16.mxu0 0
    %2474 = vmatmul.mubr.bf16.gmra.mrb[0].mxu0 %v2440
    %v2475 = vpop.f32.mrb[0].mxu0
    %v2476 = vadd.f32 0.0, %v2475
    %v2477 = vpop.f32.mrb[0].mxu0
    %v2478 = vadd.f32 0.0, %v2477
    %v2479 = vpop.f32.mrb[0].mxu0
    %v2480 = vpop.f32.mrb[0].mxu0
    %2481 = vdwg.mxu0
    %2482 = vmatprep.subr.bf16.mxu0 %v1819
    %2483 = vmatpush1.bf16.msra.mxu0 %v1818
    %2484 = vmatprep.subr.bf16.mxu0 %v1823
    %2485 = vmatpush1.bf16.msra.mxu0 %v1822
    %2486 = vmatprep.subr.bf16.mxu0 %v1827
    %2487 = vmatpush1.bf16.msra.mxu0 %v1826
    %2488 = vmatprep.subr.bf16.mxu0 %v1831
    %2489 = vmatpush1.bf16.msra.mxu0 %v1830
    %2490 = vmatprep.subr.bf16.mxu0 %v1835
    %2491 = vmatpush1.bf16.msra.mxu0 %v1834
    %2492 = vmatprep.subr.bf16.mxu0 %v1839
    %2493 = vmatpush1.bf16.msra.mxu0 %v1838
    %2494 = vmatprep.subr.bf16.mxu0 %v1843
    %2495 = vmatpush1.bf16.msra.mxu0 %v1842
    %2496 = vmatprep.subr.bf16.mxu0 %v1847
    %2497 = vmatpush1.bf16.msra.mxu0 %v1846
    %2498 = vmatprep.subr.bf16.mxu0 0
    %2499 = vmatpush1.bf16.msra.mxu0 0
    %2500 = vmatprep.subr.bf16.mxu0 0
    %2501 = vmatpush1.bf16.msra.mxu0 0
    %2502 = vmatprep.subr.bf16.mxu0 0
    %2503 = vmatpush1.bf16.msra.mxu0 0
    %2504 = vmatprep.subr.bf16.mxu0 0
    %2505 = vmatpush1.bf16.msra.mxu0 0
    %2506 = vmatprep.subr.bf16.mxu0 0
    %2507 = vmatpush1.bf16.msra.mxu0 0
    %2508 = vmatprep.subr.bf16.mxu0 0
    %2509 = vmatpush1.bf16.msra.mxu0 0
    %2510 = vmatprep.subr.bf16.mxu0 0
    %2511 = vmatpush1.bf16.msra.mxu0 0
    %2512 = vmatprep.subr.bf16.mxu0 0
    %2513 = vmatpush1.bf16.msra.mxu0 0
    %2514 = vmatprep.mubr.bf16.mxu0 0
    %2515 = vmatmul.mubr.bf16.gmra.mrb[0].mxu0 %v2440
    %v2516 = vpop.f32.mrb[0].mxu0
    %v2517 = vadd.f32 0.0, %v2516
    %v2518 = vpop.f32.mrb[0].mxu0
    %v2519 = vadd.f32 0.0, %v2518
    %v2520 = vpop.f32.mrb[0].mxu0
    %v2521 = vpop.f32.mrb[0].mxu0
    %2522 = vdwg.mxu0
    %v2523 = vadd.f32 %v2393, %v2476
    %v2524 = vadd.f32 %v2395, %v2478
    %v2525 = vadd.f32 %v2434, %v2517
    %v2526 = vadd.f32 %v2436, %v2519
    %v2527 = vmul.f32 %v2523, 0.5
    %v2528 = vtanh.pop %v2527
    %v2529 = vadd.f32 %v2528, 1.0
    %v2530 = vmul.f32 %v2529, 0.5
    %v2531 = vmul.f32 %v2524, 0.5
    %v2532 = vtanh.pop %v2531
    %v2533 = vadd.f32 %v2532, 1.0
    %v2534 = vmul.f32 %v2533, 0.5
    %v2535 = vtanh.pop %v2525
    %v2536 = vmul.f32 %v2526, 0.5
    %v2537 = vtanh.pop %v2536
    %v2538 = vadd.f32 %v2537, 1.0
    %v2539 = vmul.f32 %v2538, 0.5
    %v2540 = vmul.f32 %v2534, %v2355
    %v2541 = vmul.f32 %v2530, %v2535
    %v2542 = vadd.f32 %v2540, %v2541
    %v2543 = vtanh.pop %v2542
    %v2544 = vmul.f32 %v2539, %v2543
    %2545 = vmatprep.subr.bf16.mxu0 %v1543
    %2546 = vmatpush1.bf16.msra.mxu0 %v1542
    %2547 = vmatprep.subr.bf16.mxu0 %v1547
    %2548 = vmatpush1.bf16.msra.mxu0 %v1546
    %2549 = vmatprep.subr.bf16.mxu0 %v1551
    %2550 = vmatpush1.bf16.msra.mxu0 %v1550
    %2551 = vmatprep.subr.bf16.mxu0 %v1555
    %2552 = vmatpush1.bf16.msra.mxu0 %v1554
    %2553 = vmatprep.subr.bf16.mxu0 %v1559
    %2554 = vmatpush1.bf16.msra.mxu0 %v1558
    %2555 = vmatprep.subr.bf16.mxu0 %v1563
    %2556 = vmatpush1.bf16.msra.mxu0 %v1562
    %2557 = vmatprep.subr.bf16.mxu0 %v1567
    %2558 = vmatpush1.bf16.msra.mxu0 %v1566
    %2559 = vmatprep.subr.bf16.mxu0 %v1571
    %2560 = vmatpush1.bf16.msra.mxu0 %v1570
    %2561 = vmatprep.subr.bf16.mxu0 0
    %2562 = vmatpush1.bf16.msra.mxu0 0
    %2563 = vmatprep.subr.bf16.mxu0 0
    %2564 = vmatpush1.bf16.msra.mxu0 0
    %2565 = vmatprep.subr.bf16.mxu0 0
    %2566 = vmatpush1.bf16.msra.mxu0 0
    %2567 = vmatprep.subr.bf16.mxu0 0
    %2568 = vmatpush1.bf16.msra.mxu0 0
    %2569 = vmatprep.subr.bf16.mxu0 0
    %2570 = vmatpush1.bf16.msra.mxu0 0
    %2571 = vmatprep.subr.bf16.mxu0 0
    %2572 = vmatpush1.bf16.msra.mxu0 0
    %2573 = vmatprep.subr.bf16.mxu0 0
    %2574 = vmatpush1.bf16.msra.mxu0 0
    %2575 = vmatprep.subr.bf16.mxu0 0
    %2576 = vmatpush1.bf16.msra.mxu0 0
    %2577 = vmatprep.mubr.bf16.mxu0 0
    %2578 = vmatmul.mubr.bf16.gmra.mrb[0].mxu0 %v1065
    %v2579 = vpop.f32.mrb[0].mxu0
    %v2580 = vadd.f32 %v1397, %v2579
    %v2581 = vpop.f32.mrb[0].mxu0
    %v2582 = vadd.f32 %v1401, %v2581
    %v2583 = vpop.f32.mrb[0].mxu0
    %v2584 = vpop.f32.mrb[0].mxu0
    %2585 = vdwg.mxu0
    %2586 = vmatprep.subr.bf16.mxu0 %v1545
    %2587 = vmatpush1.bf16.msra.mxu0 %v1544
    %2588 = vmatprep.subr.bf16.mxu0 %v1549
    %2589 = vmatpush1.bf16.msra.mxu0 %v1548
    %2590 = vmatprep.subr.bf16.mxu0 %v1553
    %2591 = vmatpush1.bf16.msra.mxu0 %v1552
    %2592 = vmatprep.subr.bf16.mxu0 %v1557
    %2593 = vmatpush1.bf16.msra.mxu0 %v1556
    %2594 = vmatprep.subr.bf16.mxu0 %v1561
    %2595 = vmatpush1.bf16.msra.mxu0 %v1560
    %2596 = vmatprep.subr.bf16.mxu0 %v1565
    %2597 = vmatpush1.bf16.msra.mxu0 %v1564
    %2598 = vmatprep.subr.bf16.mxu0 %v1569
    %2599 = vmatpush1.bf16.msra.mxu0 %v1568
    %2600 = vmatprep.subr.bf16.mxu0 %v1573
    %2601 = vmatpush1.bf16.msra.mxu0 %v1572
    %2602 = vmatprep.subr.bf16.mxu0 0
    %2603 = vmatpush1.bf16.msra.mxu0 0
    %2604 = vmatprep.subr.bf16.mxu0 0
    %2605 = vmatpush1.bf16.msra.mxu0 0
    %2606 = vmatprep.subr.bf16.mxu0 0
    %2607 = vmatpush1.bf16.msra.mxu0 0
    %2608 = vmatprep.subr.bf16.mxu0 0
    %2609 = vmatpush1.bf16.msra.mxu0 0
    %2610 = vmatprep.subr.bf16.mxu0 0
    %2611 = vmatpush1.bf16.msra.mxu0 0
    %2612 = vmatprep.subr.bf16.mxu0 0
    %2613 = vmatpush1.bf16.msra.mxu0 0
    %2614 = vmatprep.subr.bf16.mxu0 0
    %2615 = vmatpush1.bf16.msra.mxu0 0
    %2616 = vmatprep.subr.bf16.mxu0 0
    %2617 = vmatpush1.bf16.msra.mxu0 0
    %2618 = vmatprep.mubr.bf16.mxu0 0
    %2619 = vmatmul.mubr.bf16.gmra.mrb[0].mxu0 %v1065
    %v2620 = vpop.f32.mrb[0].mxu0
    %v2621 = vadd.f32 %v1405, %v2620
    %v2622 = vpop.f32.mrb[0].mxu0
    %v2623 = vadd.f32 %v1409, %v2622
    %v2624 = vpop.f32.mrb[0].mxu0
    %v2625 = vpop.f32.mrb[0].mxu0
    %2626 = vdwg.mxu0
    %v2627 = vpack.c.bf16 %v2544, %v2544
    %2628 = vmatprep.subr.bf16.mxu0 %v1817
    %2629 = vmatpush1.bf16.msra.mxu0 %v1816
    %2630 = vmatprep.subr.bf16.mxu0 %v1821
    %2631 = vmatpush1.bf16.msra.mxu0 %v1820
    %2632 = vmatprep.subr.bf16.mxu0 %v1825
    %2633 = vmatpush1.bf16.msra.mxu0 %v1824
    %2634 = vmatprep.subr.bf16.mxu0 %v1829
    %2635 = vmatpush1.bf16.msra.mxu0 %v1828
    %2636 = vmatprep.subr.bf16.mxu0 %v1833
    %2637 = vmatpush1.bf16.msra.mxu0 %v1832
    %2638 = vmatprep.subr.bf16.mxu0 %v1837
    %2639 = vmatpush1.bf16.msra.mxu0 %v1836
    %2640 = vmatprep.subr.bf16.mxu0 %v1841
    %2641 = vmatpush1.bf16.msra.mxu0 %v1840
    %2642 = vmatprep.subr.bf16.mxu0 %v1845
    %2643 = vmatpush1.bf16.msra.mxu0 %v1844
    %2644 = vmatprep.subr.bf16.mxu0 0
    %2645 = vmatpush1.bf16.msra.mxu0 0
    %2646 = vmatprep.subr.bf16.mxu0 0
    %2647 = vmatpush1.bf16.msra.mxu0 0
    %2648 = vmatprep.subr.bf16.mxu0 0
    %2649 = vmatpush1.bf16.msra.mxu0 0
    %2650 = vmatprep.subr.bf16.mxu0 0
    %2651 = vmatpush1.bf16.msra.mxu0 0
    %2652 = vmatprep.subr.bf16.mxu0 0
    %2653 = vmatpush1.bf16.msra.mxu0 0
    %2654 = vmatprep.subr.bf16.mxu0 0
    %2655 = vmatpush1.bf16.msra.mxu0 0
    %2656 = vmatprep.subr.bf16.mxu0 0
    %2657 = vmatpush1.bf16.msra.mxu0 0
    %2658 = vmatprep.subr.bf16.mxu0 0
    %2659 = vmatpush1.bf16.msra.mxu0 0
    %2660 = vmatprep.mubr.bf16.mxu0 0
    %2661 = vmatmul.mubr.bf16.gmra.mrb[0].mxu0 %v2627
    %v2662 = vpop.f32.mrb[0].mxu0
    %v2663 = vadd.f32 0.0, %v2662
    %v2664 = vpop.f32.mrb[0].mxu0
    %v2665 = vadd.f32 0.0, %v2664
    %v2666 = vpop.f32.mrb[0].mxu0
    %v2667 = vpop.f32.mrb[0].mxu0
    %2668 = vdwg.mxu0
    %2669 = vmatprep.subr.bf16.mxu0 %v1819
    %2670 = vmatpush1.bf16.msra.mxu0 %v1818
    %2671 = vmatprep.subr.bf16.mxu0 %v1823
    %2672 = vmatpush1.bf16.msra.mxu0 %v1822
    %2673 = vmatprep.subr.bf16.mxu0 %v1827
    %2674 = vmatpush1.bf16.msra.mxu0 %v1826
    %2675 = vmatprep.subr.bf16.mxu0 %v1831
    %2676 = vmatpush1.bf16.msra.mxu0 %v1830
    %2677 = vmatprep.subr.bf16.mxu0 %v1835
    %2678 = vmatpush1.bf16.msra.mxu0 %v1834
    %2679 = vmatprep.subr.bf16.mxu0 %v1839
    %2680 = vmatpush1.bf16.msra.mxu0 %v1838
    %2681 = vmatprep.subr.bf16.mxu0 %v1843
    %2682 = vmatpush1.bf16.msra.mxu0 %v1842
    %2683 = vmatprep.subr.bf16.mxu0 %v1847
    %2684 = vmatpush1.bf16.msra.mxu0 %v1846
    %2685 = vmatprep.subr.bf16.mxu0 0
    %2686 = vmatpush1.bf16.msra.mxu0 0
    %2687 = vmatprep.subr.bf16.mxu0 0
    %2688 = vmatpush1.bf16.msra.mxu0 0
    %2689 = vmatprep.subr.bf16.mxu0 0
    %2690 = vmatpush1.bf16.msra.mxu0 0
    %2691 = vmatprep.subr.bf16.mxu0 0
    %2692 = vmatpush1.bf16.msra.mxu0 0
    %2693 = vmatprep.subr.bf16.mxu0 0
    %2694 = vmatpush1.bf16.msra.mxu0 0
    %2695 = vmatprep.subr.bf16.mxu0 0
    %2696 = vmatpush1.bf16.msra.mxu0 0
    %2697 = vmatprep.subr.bf16.mxu0 0
    %2698 = vmatpush1.bf16.msra.mxu0 0
    %2699 = vmatprep.subr.bf16.mxu0 0
    %2700 = vmatpush1.bf16.msra.mxu0 0
    %2701 = vmatprep.mubr.bf16.mxu0 0
    %2702 = vmatmul.mubr.bf16.gmra.mrb[0].mxu0 %v2627
    %v2703 = vpop.f32.mrb[0].mxu0
    %v2704 = vadd.f32 0.0, %v2703
    %v2705 = vpop.f32.mrb[0].mxu0
    %v2706 = vadd.f32 0.0, %v2705
    %v2707 = vpop.f32.mrb[0].mxu0
    %v2708 = vpop.f32.mrb[0].mxu0
    %2709 = vdwg.mxu0
    %v2710 = vadd.f32 %v2580, %v2663
    %v2711 = vadd.f32 %v2582, %v2665
    %v2712 = vadd.f32 %v2621, %v2704
    %v2713 = vadd.f32 %v2623, %v2706
    %v2714 = vmul.f32 %v2710, 0.5
    %v2715 = vtanh.pop %v2714
    %v2716 = vadd.f32 %v2715, 1.0
    %v2717 = vmul.f32 %v2716, 0.5
    %v2718 = vmul.f32 %v2711, 0.5
    %v2719 = vtanh.pop %v2718
    %v2720 = vadd.f32 %v2719, 1.0
    %v2721 = vmul.f32 %v2720, 0.5
    %v2722 = vtanh.pop %v2712
    %v2723 = vmul.f32 %v2713, 0.5
    %v2724 = vtanh.pop %v2723
    %v2725 = vadd.f32 %v2724, 1.0
    %v2726 = vmul.f32 %v2725, 0.5
    %v2727 = vmul.f32 %v2721, %v2542
    %v2728 = vmul.f32 %v2717, %v2722
    %v2729 = vadd.f32 %v2727, %v2728
    %v2730 = vtanh.pop %v2729
    %v2731 = vmul.f32 %v2726, %v2730
    %2732 = vmatprep.subr.bf16.mxu0 %v1543
    %2733 = vmatpush1.bf16.msra.mxu0 %v1542
    %2734 = vmatprep.subr.bf16.mxu0 %v1547
    %2735 = vmatpush1.bf16.msra.mxu0 %v1546
    %2736 = vmatprep.subr.bf16.mxu0 %v1551
    %2737 = vmatpush1.bf16.msra.mxu0 %v1550
    %2738 = vmatprep.subr.bf16.mxu0 %v1555
    %2739 = vmatpush1.bf16.msra.mxu0 %v1554
    %2740 = vmatprep.subr.bf16.mxu0 %v1559
    %2741 = vmatpush1.bf16.msra.mxu0 %v1558
    %2742 = vmatprep.subr.bf16.mxu0 %v1563
    %2743 = vmatpush1.bf16.msra.mxu0 %v1562
    %2744 = vmatprep.subr.bf16.mxu0 %v1567
    %2745 = vmatpush1.bf16.msra.mxu0 %v1566
    %2746 = vmatprep.subr.bf16.mxu0 %v1571
    %2747 = vmatpush1.bf16.msra.mxu0 %v1570
    %2748 = vmatprep.subr.bf16.mxu0 0
    %2749 = vmatpush1.bf16.msra.mxu0 0
    %2750 = vmatprep.subr.bf16.mxu0 0
    %2751 = vmatpush1.bf16.msra.mxu0 0
    %2752 = vmatprep.subr.bf16.mxu0 0
    %2753 = vmatpush1.bf16.msra.mxu0 0
    %2754 = vmatprep.subr.bf16.mxu0 0
    %2755 = vmatpush1.bf16.msra.mxu0 0
    %2756 = vmatprep.subr.bf16.mxu0 0
    %2757 = vmatpush1.bf16.msra.mxu0 0
    %2758 = vmatprep.subr.bf16.mxu0 0
    %2759 = vmatpush1.bf16.msra.mxu0 0
    %2760 = vmatprep.subr.bf16.mxu0 0
    %2761 = vmatpush1.bf16.msra.mxu0 0
    %2762 = vmatprep.subr.bf16.mxu0 0
    %2763 = vmatpush1.bf16.msra.mxu0 0
    %2764 = vmatprep.mubr.bf16.mxu0 0
    %2765 = vmatmul.mubr.bf16.gmra.mrb[0].mxu0 %v1175
    %v2766 = vpop.f32.mrb[0].mxu0
    %v2767 = vadd.f32 %v1397, %v2766
    %v2768 = vpop.f32.mrb[0].mxu0
    %v2769 = vadd.f32 %v1401, %v2768
    %v2770 = vpop.f32.mrb[0].mxu0
    %v2771 = vpop.f32.mrb[0].mxu0
    %2772 = vdwg.mxu0
    %2773 = vmatprep.subr.bf16.mxu0 %v1545
    %2774 = vmatpush1.bf16.msra.mxu0 %v1544
    %2775 = vmatprep.subr.bf16.mxu0 %v1549
    %2776 = vmatpush1.bf16.msra.mxu0 %v1548
    %2777 = vmatprep.subr.bf16.mxu0 %v1553
    %2778 = vmatpush1.bf16.msra.mxu0 %v1552
    %2779 = vmatprep.subr.bf16.mxu0 %v1557
    %2780 = vmatpush1.bf16.msra.mxu0 %v1556
    %2781 = vmatprep.subr.bf16.mxu0 %v1561
    %2782 = vmatpush1.bf16.msra.mxu0 %v1560
    %2783 = vmatprep.subr.bf16.mxu0 %v1565
    %2784 = vmatpush1.bf16.msra.mxu0 %v1564
    %2785 = vmatprep.subr.bf16.mxu0 %v1569
    %2786 = vmatpush1.bf16.msra.mxu0 %v1568
    %2787 = vmatprep.subr.bf16.mxu0 %v1573
    %2788 = vmatpush1.bf16.msra.mxu0 %v1572
    %2789 = vmatprep.subr.bf16.mxu0 0
    %2790 = vmatpush1.bf16.msra.mxu0 0
    %2791 = vmatprep.subr.bf16.mxu0 0
    %2792 = vmatpush1.bf16.msra.mxu0 0
    %2793 = vmatprep.subr.bf16.mxu0 0
    %2794 = vmatpush1.bf16.msra.mxu0 0
    %2795 = vmatprep.subr.bf16.mxu0 0
    %2796 = vmatpush1.bf16.msra.mxu0 0
    %2797 = vmatprep.subr.bf16.mxu0 0
    %2798 = vmatpush1.bf16.msra.mxu0 0
    %2799 = vmatprep.subr.bf16.mxu0 0
    %2800 = vmatpush1.bf16.msra.mxu0 0
    %2801 = vmatprep.subr.bf16.mxu0 0
    %2802 = vmatpush1.bf16.msra.mxu0 0
    %2803 = vmatprep.subr.bf16.mxu0 0
    %2804 = vmatpush1.bf16.msra.mxu0 0
    %2805 = vmatprep.mubr.bf16.mxu0 0
    %2806 = vmatmul.mubr.bf16.gmra.mrb[0].mxu0 %v1175
    %v2807 = vpop.f32.mrb[0].mxu0
    %v2808 = vadd.f32 %v1405, %v2807
    %v2809 = vpop.f32.mrb[0].mxu0
    %v2810 = vadd.f32 %v1409, %v2809
    %v2811 = vpop.f32.mrb[0].mxu0
    %v2812 = vpop.f32.mrb[0].mxu0
    %2813 = vdwg.mxu0
    %v2814 = vpack.c.bf16 %v2731, %v2731
    %2815 = vmatprep.subr.bf16.mxu0 %v1817
    %2816 = vmatpush1.bf16.msra.mxu0 %v1816
    %2817 = vmatprep.subr.bf16.mxu0 %v1821
    %2818 = vmatpush1.bf16.msra.mxu0 %v1820
    %2819 = vmatprep.subr.bf16.mxu0 %v1825
    %2820 = vmatpush1.bf16.msra.mxu0 %v1824
    %2821 = vmatprep.subr.bf16.mxu0 %v1829
    %2822 = vmatpush1.bf16.msra.mxu0 %v1828
    %2823 = vmatprep.subr.bf16.mxu0 %v1833
    %2824 = vmatpush1.bf16.msra.mxu0 %v1832
    %2825 = vmatprep.subr.bf16.mxu0 %v1837
    %2826 = vmatpush1.bf16.msra.mxu0 %v1836
    %2827 = vmatprep.subr.bf16.mxu0 %v1841
    %2828 = vmatpush1.bf16.msra.mxu0 %v1840
    %2829 = vmatprep.subr.bf16.mxu0 %v1845
    %2830 = vmatpush1.bf16.msra.mxu0 %v1844
    %2831 = vmatprep.subr.bf16.mxu0 0
    %2832 = vmatpush1.bf16.msra.mxu0 0
    %2833 = vmatprep.subr.bf16.mxu0 0
    %2834 = vmatpush1.bf16.msra.mxu0 0
    %2835 = vmatprep.subr.bf16.mxu0 0
    %2836 = vmatpush1.bf16.msra.mxu0 0
    %2837 = vmatprep.subr.bf16.mxu0 0
    %2838 = vmatpush1.bf16.msra.mxu0 0
    %2839 = vmatprep.subr.bf16.mxu0 0
    %2840 = vmatpush1.bf16.msra.mxu0 0
    %2841 = vmatprep.subr.bf16.mxu0 0
    %2842 = vmatpush1.bf16.msra.mxu0 0
    %2843 = vmatprep.subr.bf16.mxu0 0
    %2844 = vmatpush1.bf16.msra.mxu0 0
    %2845 = vmatprep.subr.bf16.mxu0 0
    %2846 = vmatpush1.bf16.msra.mxu0 0
    %2847 = vmatprep.mubr.bf16.mxu0 0
    %2848 = vmatmul.mubr.bf16.gmra.mrb[0].mxu0 %v2814
    %v2849 = vpop.f32.mrb[0].mxu0
    %v2850 = vadd.f32 0.0, %v2849
    %v2851 = vpop.f32.mrb[0].mxu0
    %v2852 = vadd.f32 0.0, %v2851
    %v2853 = vpop.f32.mrb[0].mxu0
    %v2854 = vpop.f32.mrb[0].mxu0
    %2855 = vdwg.mxu0
    %2856 = vmatprep.subr.bf16.mxu0 %v1819
    %2857 = vmatpush1.bf16.msra.mxu0 %v1818
    %2858 = vmatprep.subr.bf16.mxu0 %v1823
    %2859 = vmatpush1.bf16.msra.mxu0 %v1822
    %2860 = vmatprep.subr.bf16.mxu0 %v1827
    %2861 = vmatpush1.bf16.msra.mxu0 %v1826
    %2862 = vmatprep.subr.bf16.mxu0 %v1831
    %2863 = vmatpush1.bf16.msra.mxu0 %v1830
    %2864 = vmatprep.subr.bf16.mxu0 %v1835
    %2865 = vmatpush1.bf16.msra.mxu0 %v1834
    %2866 = vmatprep.subr.bf16.mxu0 %v1839
    %2867 = vmatpush1.bf16.msra.mxu0 %v1838
    %2868 = vmatprep.subr.bf16.mxu0 %v1843
    %2869 = vmatpush1.bf16.msra.mxu0 %v1842
    %2870 = vmatprep.subr.bf16.mxu0 %v1847
    %2871 = vmatpush1.bf16.msra.mxu0 %v1846
    %2872 = vmatprep.subr.bf16.mxu0 0
    %2873 = vmatpush1.bf16.msra.mxu0 0
    %2874 = vmatprep.subr.bf16.mxu0 0
    %2875 = vmatpush1.bf16.msra.mxu0 0
    %2876 = vmatprep.subr.bf16.mxu0 0
    %2877 = vmatpush1.bf16.msra.mxu0 0
    %2878 = vmatprep.subr.bf16.mxu0 0
    %2879 = vmatpush1.bf16.msra.mxu0 0
    %2880 = vmatprep.subr.bf16.mxu0 0
    %2881 = vmatpush1.bf16.msra.mxu0 0
    %2882 = vmatprep.subr.bf16.mxu0 0
    %2883 = vmatpush1.bf16.msra.mxu0 0
    %2884 = vmatprep.subr.bf16.mxu0 0
    %2885 = vmatpush1.bf16.msra.mxu0 0
    %2886 = vmatprep.subr.bf16.mxu0 0
    %2887 = vmatpush1.bf16.msra.mxu0 0
    %2888 = vmatprep.mubr.bf16.mxu0 0
    %2889 = vmatmul.mubr.bf16.gmra.mrb[0].mxu0 %v2814
    %v2890 = vpop.f32.mrb[0].mxu0
    %v2891 = vadd.f32 0.0, %v2890
    %v2892 = vpop.f32.mrb[0].mxu0
    %v2893 = vadd.f32 0.0, %v2892
    %v2894 = vpop.f32.mrb[0].mxu0
    %v2895 = vpop.f32.mrb[0].mxu0
    %2896 = vdwg.mxu0
    %v2897 = vadd.f32 %v2767, %v2850
    %v2898 = vadd.f32 %v2769, %v2852
    %v2899 = vadd.f32 %v2808, %v2891
    %v2900 = vadd.f32 %v2810, %v2893
    %v2901 = vmul.f32 %v2897, 0.5
    %v2902 = vtanh.pop %v2901
    %v2903 = vadd.f32 %v2902, 1.0
    %v2904 = vmul.f32 %v2903, 0.5
    %v2905 = vmul.f32 %v2898, 0.5
    %v2906 = vtanh.pop %v2905
    %v2907 = vadd.f32 %v2906, 1.0
    %v2908 = vmul.f32 %v2907, 0.5
    %v2909 = vtanh.pop %v2899
    %v2910 = vmul.f32 %v2900, 0.5
    %v2911 = vtanh.pop %v2910
    %v2912 = vadd.f32 %v2911, 1.0
    %v2913 = vmul.f32 %v2912, 0.5
    %v2914 = vmul.f32 %v2908, %v2729
    %v2915 = vmul.f32 %v2904, %v2909
    %v2916 = vadd.f32 %v2914, %v2915
    %v2917 = vtanh.pop %v2916
    %v2918 = vmul.f32 %v2913, %v2917
    %2919 = vmatprep.subr.bf16.mxu0 %v1543
    %2920 = vmatpush1.bf16.msra.mxu0 %v1542
    %2921 = vmatprep.subr.bf16.mxu0 %v1547
    %2922 = vmatpush1.bf16.msra.mxu0 %v1546
    %2923 = vmatprep.subr.bf16.mxu0 %v1551
    %2924 = vmatpush1.bf16.msra.mxu0 %v1550
    %2925 = vmatprep.subr.bf16.mxu0 %v1555
    %2926 = vmatpush1.bf16.msra.mxu0 %v1554
    %2927 = vmatprep.subr.bf16.mxu0 %v1559
    %2928 = vmatpush1.bf16.msra.mxu0 %v1558
    %2929 = vmatprep.subr.bf16.mxu0 %v1563
    %2930 = vmatpush1.bf16.msra.mxu0 %v1562
    %2931 = vmatprep.subr.bf16.mxu0 %v1567
    %2932 = vmatpush1.bf16.msra.mxu0 %v1566
    %2933 = vmatprep.subr.bf16.mxu0 %v1571
    %2934 = vmatpush1.bf16.msra.mxu0 %v1570
    %2935 = vmatprep.subr.bf16.mxu0 0
    %2936 = vmatpush1.bf16.msra.mxu0 0
    %2937 = vmatprep.subr.bf16.mxu0 0
    %2938 = vmatpush1.bf16.msra.mxu0 0
    %2939 = vmatprep.subr.bf16.mxu0 0
    %2940 = vmatpush1.bf16.msra.mxu0 0
    %2941 = vmatprep.subr.bf16.mxu0 0
    %2942 = vmatpush1.bf16.msra.mxu0 0
    %2943 = vmatprep.subr.bf16.mxu0 0
    %2944 = vmatpush1.bf16.msra.mxu0 0
    %2945 = vmatprep.subr.bf16.mxu0 0
    %2946 = vmatpush1.bf16.msra.mxu0 0
    %2947 = vmatprep.subr.bf16.mxu0 0
    %2948 = vmatpush1.bf16.msra.mxu0 0
    %2949 = vmatprep.subr.bf16.mxu0 0
    %2950 = vmatpush1.bf16.msra.mxu0 0
    %2951 = vmatprep.mubr.bf16.mxu0 0
    %2952 = vmatmul.mubr.bf16.gmra.mrb[0].mxu0 %v1285
    %v2953 = vpop.f32.mrb[0].mxu0
    %v2954 = vadd.f32 %v1397, %v2953
    %v2955 = vpop.f32.mrb[0].mxu0
    %v2956 = vadd.f32 %v1401, %v2955
    %v2957 = vpop.f32.mrb[0].mxu0
    %v2958 = vpop.f32.mrb[0].mxu0
    %2959 = vdwg.mxu0
    %2960 = vmatprep.subr.bf16.mxu0 %v1545
    %2961 = vmatpush1.bf16.msra.mxu0 %v1544
    %2962 = vmatprep.subr.bf16.mxu0 %v1549
    %2963 = vmatpush1.bf16.msra.mxu0 %v1548
    %2964 = vmatprep.subr.bf16.mxu0 %v1553
    %2965 = vmatpush1.bf16.msra.mxu0 %v1552
    %2966 = vmatprep.subr.bf16.mxu0 %v1557
    %2967 = vmatpush1.bf16.msra.mxu0 %v1556
    %2968 = vmatprep.subr.bf16.mxu0 %v1561
    %2969 = vmatpush1.bf16.msra.mxu0 %v1560
    %2970 = vmatprep.subr.bf16.mxu0 %v1565
    %2971 = vmatpush1.bf16.msra.mxu0 %v1564
    %2972 = vmatprep.subr.bf16.mxu0 %v1569
    %2973 = vmatpush1.bf16.msra.mxu0 %v1568
    %2974 = vmatprep.subr.bf16.mxu0 %v1573
    %2975 = vmatpush1.bf16.msra.mxu0 %v1572
    %2976 = vmatprep.subr.bf16.mxu0 0
    %2977 = vmatpush1.bf16.msra.mxu0 0
    %2978 = vmatprep.subr.bf16.mxu0 0
    %2979 = vmatpush1.bf16.msra.mxu0 0
    %2980 = vmatprep.subr.bf16.mxu0 0
    %2981 = vmatpush1.bf16.msra.mxu0 0
    %2982 = vmatprep.subr.bf16.mxu0 0
    %2983 = vmatpush1.bf16.msra.mxu0 0
    %2984 = vmatprep.subr.bf16.mxu0 0
    %2985 = vmatpush1.bf16.msra.mxu0 0
    %2986 = vmatprep.subr.bf16.mxu0 0
    %2987 = vmatpush1.bf16.msra.mxu0 0
    %2988 = vmatprep.subr.bf16.mxu0 0
    %2989 = vmatpush1.bf16.msra.mxu0 0
    %2990 = vmatprep.subr.bf16.mxu0 0
    %2991 = vmatpush1.bf16.msra.mxu0 0
    %2992 = vmatprep.mubr.bf16.mxu0 0
    %2993 = vmatmul.mubr.bf16.gmra.mrb[0].mxu0 %v1285
    %v2994 = vpop.f32.mrb[0].mxu0
    %v2995 = vadd.f32 %v1405, %v2994
    %v2996 = vpop.f32.mrb[0].mxu0
    %v2997 = vadd.f32 %v1409, %v2996
    %v2998 = vpop.f32.mrb[0].mxu0
    %v2999 = vpop.f32.mrb[0].mxu0
    %3000 = vdwg.mxu0
    %v3001 = vpack.c.bf16 %v2918, %v2918
    %3002 = vmatprep.subr.bf16.mxu0 %v1817
    %3003 = vmatpush1.bf16.msra.mxu0 %v1816
    %3004 = vmatprep.subr.bf16.mxu0 %v1821
    %3005 = vmatpush1.bf16.msra.mxu0 %v1820
    %3006 = vmatprep.subr.bf16.mxu0 %v1825
    %3007 = vmatpush1.bf16.msra.mxu0 %v1824
    %3008 = vmatprep.subr.bf16.mxu0 %v1829
    %3009 = vmatpush1.bf16.msra.mxu0 %v1828
    %3010 = vmatprep.subr.bf16.mxu0 %v1833
    %3011 = vmatpush1.bf16.msra.mxu0 %v1832
    %3012 = vmatprep.subr.bf16.mxu0 %v1837
    %3013 = vmatpush1.bf16.msra.mxu0 %v1836
    %3014 = vmatprep.subr.bf16.mxu0 %v1841
    %3015 = vmatpush1.bf16.msra.mxu0 %v1840
    %3016 = vmatprep.subr.bf16.mxu0 %v1845
    %3017 = vmatpush1.bf16.msra.mxu0 %v1844
    %3018 = vmatprep.subr.bf16.mxu0 0
    %3019 = vmatpush1.bf16.msra.mxu0 0
    %3020 = vmatprep.subr.bf16.mxu0 0
    %3021 = vmatpush1.bf16.msra.mxu0 0
    %3022 = vmatprep.subr.bf16.mxu0 0
    %3023 = vmatpush1.bf16.msra.mxu0 0
    %3024 = vmatprep.subr.bf16.mxu0 0
    %3025 = vmatpush1.bf16.msra.mxu0 0
    %3026 = vmatprep.subr.bf16.mxu0 0
    %3027 = vmatpush1.bf16.msra.mxu0 0
    %3028 = vmatprep.subr.bf16.mxu0 0
    %3029 = vmatpush1.bf16.msra.mxu0 0
    %3030 = vmatprep.subr.bf16.mxu0 0
    %3031 = vmatpush1.bf16.msra.mxu0 0
    %3032 = vmatprep.subr.bf16.mxu0 0
    %3033 = vmatpush1.bf16.msra.mxu0 0
    %3034 = vmatprep.mubr.bf16.mxu0 0
    %3035 = vmatmul.mubr.bf16.gmra.mrb[0].mxu0 %v3001
    %v3036 = vpop.f32.mrb[0].mxu0
    %v3037 = vadd.f32 0.0, %v3036
    %v3038 = vpop.f32.mrb[0].mxu0
    %v3039 = vadd.f32 0.0, %v3038
    %v3040 = vpop.f32.mrb[0].mxu0
    %v3041 = vpop.f32.mrb[0].mxu0
    %3042 = vdwg.mxu0
    %3043 = vmatprep.subr.bf16.mxu0 %v1819
    %3044 = vmatpush1.bf16.msra.mxu0 %v1818
    %3045 = vmatprep.subr.bf16.mxu0 %v1823
    %3046 = vmatpush1.bf16.msra.mxu0 %v1822
    %3047 = vmatprep.subr.bf16.mxu0 %v1827
    %3048 = vmatpush1.bf16.msra.mxu0 %v1826
    %3049 = vmatprep.subr.bf16.mxu0 %v1831
    %3050 = vmatpush1.bf16.msra.mxu0 %v1830
    %3051 = vmatprep.subr.bf16.mxu0 %v1835
    %3052 = vmatpush1.bf16.msra.mxu0 %v1834
    %3053 = vmatprep.subr.bf16.mxu0 %v1839
    %3054 = vmatpush1.bf16.msra.mxu0 %v1838
    %3055 = vmatprep.subr.bf16.mxu0 %v1843
    %3056 = vmatpush1.bf16.msra.mxu0 %v1842
    %3057 = vmatprep.subr.bf16.mxu0 %v1847
    %3058 = vmatpush1.bf16.msra.mxu0 %v1846
    %3059 = vmatprep.subr.bf16.mxu0 0
    %3060 = vmatpush1.bf16.msra.mxu0 0
    %3061 = vmatprep.subr.bf16.mxu0 0
    %3062 = vmatpush1.bf16.msra.mxu0 0
    %3063 = vmatprep.subr.bf16.mxu0 0
    %3064 = vmatpush1.bf16.msra.mxu0 0
    %3065 = vmatprep.subr.bf16.mxu0 0
    %3066 = vmatpush1.bf16.msra.mxu0 0
    %3067 = vmatprep.subr.bf16.mxu0 0
    %3068 = vmatpush1.bf16.msra.mxu0 0
    %3069 = vmatprep.subr.bf16.mxu0 0
    %3070 = vmatpush1.bf16.msra.mxu0 0
    %3071 = vmatprep.subr.bf16.mxu0 0
    %3072 = vmatpush1.bf16.msra.mxu0 0
    %3073 = vmatprep.subr.bf16.mxu0 0
    %3074 = vmatpush1.bf16.msra.mxu0 0
    %3075 = vmatprep.mubr.bf16.mxu0 0
    %3076 = vmatmul.mubr.bf16.gmra.mrb[0].mxu0 %v3001
    %v3077 = vpop.f32.mrb[0].mxu0
    %v3078 = vadd.f32 0.0, %v3077
    %v3079 = vpop.f32.mrb[0].mxu0
    %v3080 = vadd.f32 0.0, %v3079
    %v3081 = vpop.f32.mrb[0].mxu0
    %v3082 = vpop.f32.mrb[0].mxu0
    %3083 = vdwg.mxu0
    %v3084 = vadd.f32 %v2954, %v3037
    %v3085 = vadd.f32 %v2956, %v3039
    %v3086 = vadd.f32 %v2995, %v3078
    %v3087 = vadd.f32 %v2997, %v3080
    %v3088 = vmul.f32 %v3084, 0.5
    %v3089 = vtanh.pop %v3088
    %v3090 = vadd.f32 %v3089, 1.0
    %v3091 = vmul.f32 %v3090, 0.5
    %v3092 = vmul.f32 %v3085, 0.5
    %v3093 = vtanh.pop %v3092
    %v3094 = vadd.f32 %v3093, 1.0
    %v3095 = vmul.f32 %v3094, 0.5
    %v3096 = vtanh.pop %v3086
    %v3097 = vmul.f32 %v3087, 0.5
    %v3098 = vtanh.pop %v3097
    %v3099 = vadd.f32 %v3098, 1.0
    %v3100 = vmul.f32 %v3099, 0.5
    %v3101 = vmul.f32 %v3095, %v2916
    %v3102 = vmul.f32 %v3091, %v3096
    %v3103 = vadd.f32 %v3101, %v3102
    %v3104 = vtanh.pop %v3103
    %v3105 = vmul.f32 %v3100, %v3104
    %v3106 = vpack.c.bf16 %v1389, %v1389
    %3107 = vmatprep.subr.bf16.mxu0 %v1543
    %3108 = vmatpush1.bf16.msra.mxu0 %v1542
    %3109 = vmatprep.subr.bf16.mxu0 %v1547
    %3110 = vmatpush1.bf16.msra.mxu0 %v1546
    %3111 = vmatprep.subr.bf16.mxu0 %v1551
    %3112 = vmatpush1.bf16.msra.mxu0 %v1550
    %3113 = vmatprep.subr.bf16.mxu0 %v1555
    %3114 = vmatpush1.bf16.msra.mxu0 %v1554
    %3115 = vmatprep.subr.bf16.mxu0 %v1559
    %3116 = vmatpush1.bf16.msra.mxu0 %v1558
    %3117 = vmatprep.subr.bf16.mxu0 %v1563
    %3118 = vmatpush1.bf16.msra.mxu0 %v1562
    %3119 = vmatprep.subr.bf16.mxu0 %v1567
    %3120 = vmatpush1.bf16.msra.mxu0 %v1566
    %3121 = vmatprep.subr.bf16.mxu0 %v1571
    %3122 = vmatpush1.bf16.msra.mxu0 %v1570
    %3123 = vmatprep.subr.bf16.mxu0 0
    %3124 = vmatpush1.bf16.msra.mxu0 0
    %3125 = vmatprep.subr.bf16.mxu0 0
    %3126 = vmatpush1.bf16.msra.mxu0 0
    %3127 = vmatprep.subr.bf16.mxu0 0
    %3128 = vmatpush1.bf16.msra.mxu0 0
    %3129 = vmatprep.subr.bf16.mxu0 0
    %3130 = vmatpush1.bf16.msra.mxu0 0
    %3131 = vmatprep.subr.bf16.mxu0 0
    %3132 = vmatpush1.bf16.msra.mxu0 0
    %3133 = vmatprep.subr.bf16.mxu0 0
    %3134 = vmatpush1.bf16.msra.mxu0 0
    %3135 = vmatprep.subr.bf16.mxu0 0
    %3136 = vmatpush1.bf16.msra.mxu0 0
    %3137 = vmatprep.subr.bf16.mxu0 0
    %3138 = vmatpush1.bf16.msra.mxu0 0
    %3139 = vmatprep.mubr.bf16.mxu0 0
    %3140 = vmatmul.mubr.bf16.gmra.mrb[0].mxu0 %v3106
    %v3141 = vpop.f32.mrb[0].mxu0
    %v3142 = vadd.f32 %v1397, %v3141
    %v3143 = vpop.f32.mrb[0].mxu0
    %v3144 = vadd.f32 %v1401, %v3143
    %v3145 = vpop.f32.mrb[0].mxu0
    %v3146 = vpop.f32.mrb[0].mxu0
    %3147 = vdwg.mxu0
    %3148 = vmatprep.subr.bf16.mxu0 %v1545
    %3149 = vmatpush1.bf16.msra.mxu0 %v1544
    %3150 = vmatprep.subr.bf16.mxu0 %v1549
    %3151 = vmatpush1.bf16.msra.mxu0 %v1548
    %3152 = vmatprep.subr.bf16.mxu0 %v1553
    %3153 = vmatpush1.bf16.msra.mxu0 %v1552
    %3154 = vmatprep.subr.bf16.mxu0 %v1557
    %3155 = vmatpush1.bf16.msra.mxu0 %v1556
    %3156 = vmatprep.subr.bf16.mxu0 %v1561
    %3157 = vmatpush1.bf16.msra.mxu0 %v1560
    %3158 = vmatprep.subr.bf16.mxu0 %v1565
    %3159 = vmatpush1.bf16.msra.mxu0 %v1564
    %3160 = vmatprep.subr.bf16.mxu0 %v1569
    %3161 = vmatpush1.bf16.msra.mxu0 %v1568
    %3162 = vmatprep.subr.bf16.mxu0 %v1573
    %3163 = vmatpush1.bf16.msra.mxu0 %v1572
    %3164 = vmatprep.subr.bf16.mxu0 0
    %3165 = vmatpush1.bf16.msra.mxu0 0
    %3166 = vmatprep.subr.bf16.mxu0 0
    %3167 = vmatpush1.bf16.msra.mxu0 0
    %3168 = vmatprep.subr.bf16.mxu0 0
    %3169 = vmatpush1.bf16.msra.mxu0 0
    %3170 = vmatprep.subr.bf16.mxu0 0
    %3171 = vmatpush1.bf16.msra.mxu0 0
    %3172 = vmatprep.subr.bf16.mxu0 0
    %3173 = vmatpush1.bf16.msra.mxu0 0
    %3174 = vmatprep.subr.bf16.mxu0 0
    %3175 = vmatpush1.bf16.msra.mxu0 0
    %3176 = vmatprep.subr.bf16.mxu0 0
    %3177 = vmatpush1.bf16.msra.mxu0 0
    %3178 = vmatprep.subr.bf16.mxu0 0
    %3179 = vmatpush1.bf16.msra.mxu0 0
    %3180 = vmatprep.mubr.bf16.mxu0 0
    %3181 = vmatmul.mubr.bf16.gmra.mrb[0].mxu0 %v3106
    %v3182 = vpop.f32.mrb[0].mxu0
    %v3183 = vadd.f32 %v1405, %v3182
    %v3184 = vpop.f32.mrb[0].mxu0
    %v3185 = vadd.f32 %v1409, %v3184
    %v3186 = vpop.f32.mrb[0].mxu0
    %v3187 = vpop.f32.mrb[0].mxu0
    %3188 = vdwg.mxu0
    %v3189 = vpack.c.bf16 %v3105, %v3105
    %3190 = vmatprep.subr.bf16.mxu0 %v1817
    %3191 = vmatpush1.bf16.msra.mxu0 %v1816
    %3192 = vmatprep.subr.bf16.mxu0 %v1821
    %3193 = vmatpush1.bf16.msra.mxu0 %v1820
    %3194 = vmatprep.subr.bf16.mxu0 %v1825
    %3195 = vmatpush1.bf16.msra.mxu0 %v1824
    %3196 = vmatprep.subr.bf16.mxu0 %v1829
    %3197 = vmatpush1.bf16.msra.mxu0 %v1828
    %3198 = vmatprep.subr.bf16.mxu0 %v1833
    %3199 = vmatpush1.bf16.msra.mxu0 %v1832
    %3200 = vmatprep.subr.bf16.mxu0 %v1837
    %3201 = vmatpush1.bf16.msra.mxu0 %v1836
    %3202 = vmatprep.subr.bf16.mxu0 %v1841
    %3203 = vmatpush1.bf16.msra.mxu0 %v1840
    %3204 = vmatprep.subr.bf16.mxu0 %v1845
    %3205 = vmatpush1.bf16.msra.mxu0 %v1844
    %3206 = vmatprep.subr.bf16.mxu0 0
    %3207 = vmatpush1.bf16.msra.mxu0 0
    %3208 = vmatprep.subr.bf16.mxu0 0
    %3209 = vmatpush1.bf16.msra.mxu0 0
    %3210 = vmatprep.subr.bf16.mxu0 0
    %3211 = vmatpush1.bf16.msra.mxu0 0
    %3212 = vmatprep.subr.bf16.mxu0 0
    %3213 = vmatpush1.bf16.msra.mxu0 0
    %3214 = vmatprep.subr.bf16.mxu0 0
    %3215 = vmatpush1.bf16.msra.mxu0 0
    %3216 = vmatprep.subr.bf16.mxu0 0
    %3217 = vmatpush1.bf16.msra.mxu0 0
    %3218 = vmatprep.subr.bf16.mxu0 0
    %3219 = vmatpush1.bf16.msra.mxu0 0
    %3220 = vmatprep.subr.bf16.mxu0 0
    %3221 = vmatpush1.bf16.msra.mxu0 0
    %3222 = vmatprep.mubr.bf16.mxu0 0
    %3223 = vmatmul.mubr.bf16.gmra.mrb[0].mxu0 %v3189
    %v3224 = vpop.f32.mrb[0].mxu0
    %v3225 = vadd.f32 0.0, %v3224
    %v3226 = vpop.f32.mrb[0].mxu0
    %v3227 = vadd.f32 0.0, %v3226
    %v3228 = vpop.f32.mrb[0].mxu0
    %v3229 = vpop.f32.mrb[0].mxu0
    %3230 = vdwg.mxu0
    %3231 = vmatprep.subr.bf16.mxu0 %v1819
    %3232 = vmatpush1.bf16.msra.mxu0 %v1818
    %3233 = vmatprep.subr.bf16.mxu0 %v1823
    %3234 = vmatpush1.bf16.msra.mxu0 %v1822
    %3235 = vmatprep.subr.bf16.mxu0 %v1827
    %3236 = vmatpush1.bf16.msra.mxu0 %v1826
    %3237 = vmatprep.subr.bf16.mxu0 %v1831
    %3238 = vmatpush1.bf16.msra.mxu0 %v1830
    %3239 = vmatprep.subr.bf16.mxu0 %v1835
    %3240 = vmatpush1.bf16.msra.mxu0 %v1834
    %3241 = vmatprep.subr.bf16.mxu0 %v1839
    %3242 = vmatpush1.bf16.msra.mxu0 %v1838
    %3243 = vmatprep.subr.bf16.mxu0 %v1843
    %3244 = vmatpush1.bf16.msra.mxu0 %v1842
    %3245 = vmatprep.subr.bf16.mxu0 %v1847
    %3246 = vmatpush1.bf16.msra.mxu0 %v1846
    %3247 = vmatprep.subr.bf16.mxu0 0
    %3248 = vmatpush1.bf16.msra.mxu0 0
    %3249 = vmatprep.subr.bf16.mxu0 0
    %3250 = vmatpush1.bf16.msra.mxu0 0
    %3251 = vmatprep.subr.bf16.mxu0 0
    %3252 = vmatpush1.bf16.msra.mxu0 0
    %3253 = vmatprep.subr.bf16.mxu0 0
    %3254 = vmatpush1.bf16.msra.mxu0 0
    %3255 = vmatprep.subr.bf16.mxu0 0
    %3256 = vmatpush1.bf16.msra.mxu0 0
    %3257 = vmatprep.subr.bf16.mxu0 0
    %3258 = vmatpush1.bf16.msra.mxu0 0
    %3259 = vmatprep.subr.bf16.mxu0 0
    %3260 = vmatpush1.bf16.msra.mxu0 0
    %3261 = vmatprep.subr.bf16.mxu0 0
    %3262 = vmatpush1.bf16.msra.mxu0 0
    %3263 = vmatprep.mubr.bf16.mxu0 0
    %3264 = vmatmul.mubr.bf16.gmra.mrb[0].mxu0 %v3189
    %v3265 = vpop.f32.mrb[0].mxu0
    %v3266 = vadd.f32 0.0, %v3265
    %v3267 = vpop.f32.mrb[0].mxu0
    %v3268 = vadd.f32 0.0, %v3267
    %v3269 = vpop.f32.mrb[0].mxu0
    %v3270 = vpop.f32.mrb[0].mxu0
    %3271 = vdwg.mxu0
    %v3272 = vadd.f32 %v3142, %v3225
    %v3273 = vadd.f32 %v3144, %v3227
    %v3274 = vadd.f32 %v3183, %v3266
    %v3275 = vadd.f32 %v3185, %v3268
    %v3276 = vmul.f32 %v3272, 0.5
    %v3277 = vtanh.pop %v3276
    %v3278 = vadd.f32 %v3277, 1.0
    %v3279 = vmul.f32 %v3278, 0.5
    %v3280 = vmul.f32 %v3273, 0.5
    %v3281 = vtanh.pop %v3280
    %v3282 = vadd.f32 %v3281, 1.0
    %v3283 = vmul.f32 %v3282, 0.5
    %v3284 = vtanh.pop %v3274
    %v3285 = vmul.f32 %v3275, 0.5
    %v3286 = vtanh.pop %v3285
    %v3287 = vadd.f32 %v3286, 1.0
    %v3288 = vmul.f32 %v3287, 0.5
    %v3289 = vmul.f32 %v3283, %v3103
    %v3290 = vmul.f32 %v3279, %v3284
    %v3291 = vadd.f32 %v3289, %v3290
    %v3292 = vtanh.pop %v3291
    %v3293 = vmul.f32 %v3288, %v3292
    %s3294 = scalar_lea.vmem %s8, 8
    %3295 = vst [vmem:[%s3294] sm:$0xff] %v3293
    %s3296 = scalar_lea.vmem %s9, 8
    %3297 = vst [vmem:[%s3296] sm:$0xff] %v3291
    %3298 = vst [vmem:[%s7] sm:$0xff] %v1983
    %s3299 = scalar_lea.vmem %s7, 8
    %3300 = vst [vmem:[%s3299] sm:$0xff] %v2170
    %s3301 = scalar_lea.vmem %s7, 16
    %3302 = vst [vmem:[%s3301] sm:$0xff] %v2357
    %s3303 = scalar_lea.vmem %s7, 24
    %3304 = vst [vmem:[%s3303] sm:$0xff] %v2544
    %s3305 = scalar_lea.vmem %s7, 32
    %3306 = vst [vmem:[%s3305] sm:$0xff] %v2731
    %s3307 = scalar_lea.vmem %s7, 40
    %3308 = vst [vmem:[%s3307] sm:$0xff] %v2918
    %s3309 = scalar_lea.vmem %s7, 48
    %3310 = vst [vmem:[%s3309] sm:$0xff] %v3105
    %s3311 = scalar_lea.vmem %s7, 56
    %3312 = vst [vmem:[%s3311] sm:$0xff] %v3293
    // Predicated region
    $region42: #{rnn_model_forward.1} parent=1 // pred_check
      _
    $region43: #{rnn_model_forward.1} parent=1 // pred_check_branch
      %3314 = sbr.rel (0) target = $region45
    $region44: #{rnn_model_forward.1} parent=1 // pred_region
      _
    $region45: #{rnn_model_forward.1} parent=1 // pred_fallthru
      _
    // Predicated region
    $region46: #{rnn_model_forward.1} parent=1 // pred_check
      _
    $region47: #{rnn_model_forward.1} parent=1 // pred_check_branch
      %3316 = sbr.rel (0) target = $region49
    $region48: #{rnn_model_forward.1} parent=1 // pred_region
      _
    $region49: #{rnn_model_forward.1} parent=1 // pred_fallthru
      _
    // Predicated region
    $region50: #{rnn_model_forward.1} parent=1 // pred_check
      _
    $region51: #{rnn_model_forward.1} parent=1 // pred_check_branch
      %3318 = sbr.rel (0) target = $region53
    $region52: #{rnn_model_forward.1} parent=1 // pred_region
      _
    $region53: #{rnn_model_forward.1} parent=1 // pred_fallthru
      _
    // Predicated region
    $region54: #{rnn_model_forward.1} parent=1 // pred_check
      _
    $region55: #{rnn_model_forward.1} parent=1 // pred_check_branch
      %3320 = sbr.rel (0) target = $region57
    $region56: #{rnn_model_forward.1} parent=1 // pred_region
      _
    $region57: #{rnn_model_forward.1} parent=1 // pred_fallthru
      _
    // Predicated region
    $region58: #{rnn_model_forward.1} parent=1 // pred_check
      _
    $region59: #{rnn_model_forward.1} parent=1 // pred_check_branch
      %3322 = sbr.rel (0) target = $region61
    $region60: #{rnn_model_forward.1} parent=1 // pred_region
      _
    $region61: #{rnn_model_forward.1} parent=1 // pred_fallthru
      _
    // Predicated region
    $region62: #{rnn_model_forward.1} parent=1 // pred_check
      _
    $region63: #{rnn_model_forward.1} parent=1 // pred_check_branch
      %3324 = sbr.rel (0) target = $region65
    $region64: #{rnn_model_forward.1} parent=1 // pred_region
      _
    $region65: #{rnn_model_forward.1} parent=1 // pred_fallthru
      _
    %3325 = vsyncpa [#allocation4], 1
    %3326 = vsyncpa [#allocation6], 1

</llo_original>
